<compile_context>
chip_gen: v5e
topology: v5e:2x2
jax: 0.10.0
libtpu: 0.0.40
codegen_flags: <defaults>
</compile_context>

<pallas_src>
import functools

import jax
import jax.numpy as jnp
from jax.experimental import pallas as pl
from jax.experimental.pallas import tpu as pltpu


# ----------------------------------------------------------------------------
# Fused kernel builder
# ----------------------------------------------------------------------------
def _make_fused_kernel(T, B, H, num_layers, num_dir):
    """Builds the fused LSTM(+FC) kernel for static (T, B, H, layers, dirs).

    Ref order (inputs, outputs, scratch):
      x                                  (T*B, E)   layer-0 input, time-major
      per layer l, per direction d:
        w_ih parts (1 part if l==0 else num_dir)   (Din_part, 4H)
        w_hh                             (H, 4H)
        bias (= b_ih + b_hh)             (1, 4H)
      fc weight parts (num_dir)          (H, Dout)
      fc bias                            (1, Dout)
      out                                (T*B, Dout)
      scratch: gates (T*B, 4H), 2*num_dir hidden-sequence buffers (T*B, H)
    """

    def recurrence(gates_ref, whh_ref, hseq_ref, reverse):
        # gates_ref already holds x@W_ih + b for all T steps; only the
        # h@W_hh matmul + gate nonlinearities run per step.
        whh = whh_ref[...]                       # (H, 4H), hoisted load
        h = jnp.zeros((B, H), jnp.float32)
        c = jnp.zeros((B, H), jnp.float32)
        steps = range(T - 1, -1, -1) if reverse else range(T)
        for t in steps:                          # static full unroll (T small)
            row = t * B
            g = gates_ref[row:row + B, :] + jnp.dot(
                h, whh, preferred_element_type=jnp.float32)       # (B, 4H)
            i_g = jax.nn.sigmoid(g[:, 0 * H:1 * H])
            f_g = jax.nn.sigmoid(g[:, 1 * H:2 * H])
            g_g = jnp.tanh(g[:, 2 * H:3 * H])
            o_g = jax.nn.sigmoid(g[:, 3 * H:4 * H])
            c = f_g * c + i_g * g_g
            h = o_g * jnp.tanh(c)
            hseq_ref[row:row + B, :] = h

    def kernel(*refs):
        it = iter(refs)
        x_ref = next(it)
        layers = []
        for l in range(num_layers):
            nparts = 1 if l == 0 else num_dir
            dirs = []
            for _d in range(num_dir):
                wih_parts = tuple(next(it) for _ in range(nparts))
                whh_ref = next(it)
                b_ref = next(it)
                dirs.append((wih_parts, whh_ref, b_ref))
            layers.append(dirs)
        wfc_parts = tuple(next(it) for _ in range(num_dir))
        bfc_ref = next(it)
        out_ref = next(it)
        gates_ref = next(it)                     # (T*B, 4H) scratch, reused
        hseq = [next(it) for _ in range(2 * num_dir)]
        prev, cur = hseq[:num_dir], hseq[num_dir:]

        for l in range(num_layers):
            for d in range(num_dir):
                wih_parts, whh_ref, b_ref = layers[l][d]
                if l == 0:
                    x_parts = (x_ref[...],)
                else:
                    x_parts = tuple(p[...] for p in prev)
                # Hoisted input projection: one (T*B, Din) x (Din, 4H) matmul
                # per direction instead of T tiny per-step matmuls.
                gp = jnp.dot(x_parts[0], wih_parts[0][...],
                             preferred_element_type=jnp.float32)
                for xp, wp in zip(x_parts[1:], wih_parts[1:]):
                    gp = gp + jnp.dot(xp, wp[...],
                                      preferred_element_type=jnp.float32)
                gates_ref[...] = gp + b_ref[...]
                recurrence(gates_ref, whh_ref, cur[d], reverse=(d == 1))
            prev, cur = cur, prev                # ping-pong layer activations

        # Final Linear over the whole (T*B, num_dir*H) sequence as one matmul
        # (per-direction split -> no concatenation needed).
        y = jnp.dot(prev[0][...], wfc_parts[0][...],
                    preferred_element_type=jnp.float32)
        for k in range(1, num_dir):
            y = y + jnp.dot(prev[k][...], wfc_parts[k][...],
                            preferred_element_type=jnp.float32)
        out_ref[...] = (y + bfc_ref[...]).astype(out_ref.dtype)

    return kernel


def fused_lstm_fc(x_flat, lstm_flat_weights, fc_parts, fc_bias, *,
                  T, B, H, Dout, num_layers, num_dir):
    """x_flat: (T*B, E) time-major input. Returns (T*B, Dout)."""
    kernel = _make_fused_kernel(T, B, H, num_layers, num_dir)
    args = (x_flat, *lstm_flat_weights, *fc_parts, fc_bias)
    vmem = pltpu.MemorySpace.VMEM
    return pl.pallas_call(
        kernel,
        out_shape=jax.ShapeDtypeStruct((T * B, Dout), jnp.float32),
        in_specs=[pl.BlockSpec(memory_space=vmem)] * len(args),
        out_specs=pl.BlockSpec(memory_space=vmem),
        scratch_shapes=(
            [pltpu.VMEM((T * B, 4 * H), jnp.float32)]          # gate buffer
            + [pltpu.VMEM((T * B, H), jnp.float32)] * (2 * num_dir)
        ),
    )(*args)


# ----------------------------------------------------------------------------
# Parameters (PyTorch-matching init, pre-transposed/split for the kernel)
# ----------------------------------------------------------------------------
def init_params(key, *, num_embeddings, embedding_dim, padding_idx,
                num_layers, hidden_size, bidirectional, out_features):
    keys = jax.random.split(key, 3)
    params = {}

    # nn.Embedding: N(0, 1), padding_idx row zeroed.
    emb = jax.random.normal(keys[0], (num_embeddings, embedding_dim),
                            dtype=jnp.float32)
    emb = emb.at[padding_idx].set(0.0)
    params["emb"] = emb

    num_dir = 2 if bidirectional else 1
    H = hidden_size
    bound = 1.0 / jnp.sqrt(jnp.float32(H))
    lstm = {}
    lkeys = jax.random.split(keys[1], num_layers * num_dir * 4)
    k = 0
    for layer in range(num_layers):
        d_in = embedding_dim if layer == 0 else num_dir * H
        for d in range(num_dir):
            w_ih = jax.random.uniform(lkeys[k + 0], (4 * H, d_in),
                                      jnp.float32, -bound, bound)
            w_hh = jax.random.uniform(lkeys[k + 1], (4 * H, H),
                                      jnp.float32, -bound, bound)
            b_ih = jax.random.uniform(lkeys[k + 2], (4 * H,),
                                      jnp.float32, -bound, bound)
            b_hh = jax.random.uniform(lkeys[k + 3], (4 * H,),
                                      jnp.float32, -bound, bound)
            # Pre-transpose to (Din, 4H)/(H, 4H); split layer>0 input weights
            # per source direction so the kernel never concatenates.
            w_ih_t = w_ih.T
            if layer == 0:
                wih_parts = (w_ih_t,)
            else:
                wih_parts = tuple(w_ih_t[i * H:(i + 1) * H, :]
                                  for i in range(num_dir))
            lstm[(layer, d)] = dict(
                wih_parts=wih_parts,
                whh=w_hh.T,                                  # (H, 4H)
                bias=(b_ih + b_hh).reshape(1, 4 * H),
            )
            k += 4
    params["lstm"] = lstm

    # nn.Linear: uniform(-1/sqrt(fan_in), 1/sqrt(fan_in)); pre-transposed and
    # split per direction.
    fc_in = num_dir * H
    fkeys = jax.random.split(keys[2], 2)
    fb = 1.0 / jnp.sqrt(jnp.float32(fc_in))
    fc_w = jax.random.uniform(fkeys[0], (out_features, fc_in),
                              jnp.float32, -fb, fb)
    fc_b = jax.random.uniform(fkeys[1], (out_features,),
                              jnp.float32, -fb, fb)
    fc_w_t = fc_w.T                                          # (fc_in, Dout)
    params["fc_parts"] = tuple(fc_w_t[i * H:(i + 1) * H, :]
                               for i in range(num_dir))
    params["fc_b"] = fc_b.reshape(1, out_features)
    return params


# ----------------------------------------------------------------------------
# Forward
# ----------------------------------------------------------------------------
@functools.partial(jax.jit, static_argnames=("num_layers", "bidirectional"))
def lstm_net_forward(tokens, params, *, num_layers, bidirectional):
    # Embedding lookup (glue; padding_idx row is already zero).
    emb = jnp.take(params["emb"], tokens, axis=0)            # (B, T, E)
    B, T, E = emb.shape
    x = jnp.transpose(emb, (1, 0, 2)).reshape(T * B, E)      # time-major flat

    num_dir = 2 if bidirectional else 1
    H = params["lstm"][(0, 0)]["whh"].shape[0]
    Dout = params["fc_b"].shape[-1]

    flat_w = []
    for layer in range(num_layers):
        for d in range(num_dir):
            w = params["lstm"][(layer, d)]
            flat_w.extend(w["wih_parts"])
            flat_w.append(w["whh"])
            flat_w.append(w["bias"])

    y = fused_lstm_fc(x, flat_w, params["fc_parts"], params["fc_b"],
                      T=T, B=B, H=H, Dout=Dout,
                      num_layers=num_layers, num_dir=num_dir)   # (T*B, Dout)
    y = y.reshape(T, B, Dout)
    return jnp.transpose(y, (1, 2, 0))                       # (B, Dout, T)


# ----------------------------------------------------------------------------
if __name__ == "__main__":
    # Hyperparameters (shapes implied by LSTMNet.__init__).
    NUM_EMBEDDINGS = 32
    EMBEDDING_DIM = 16
    PADDING_IDX = 0
    NUM_LAYERS = 2
    HIDDEN_SIZE = 32
    BIDIRECTIONAL = True
    OUT_FEATURES = 8

    BATCH = 2
    SEQ = 8

    key = jax.random.PRNGKey(0)
    pkey, tkey = jax.random.split(key)

    params = init_params(
        pkey,
        num_embeddings=NUM_EMBEDDINGS,
        embedding_dim=EMBEDDING_DIM,
        padding_idx=PADDING_IDX,
        num_layers=NUM_LAYERS,
        hidden_size=HIDDEN_SIZE,
        bidirectional=BIDIRECTIONAL,
        out_features=OUT_FEATURES,
    )

    tokens = jax.random.randint(tkey, (BATCH, SEQ), 0, NUM_EMBEDDINGS,
                                dtype=jnp.int32)

    out = lstm_net_forward(tokens, params,
                           num_layers=NUM_LAYERS,
                           bidirectional=BIDIRECTIONAL)
    out = jax.block_until_ready(out)

    assert out.shape == (BATCH, OUT_FEATURES, SEQ), out.shape
    assert bool(jnp.all(jnp.isfinite(out)))
    print("KERNEL_OK")
</pallas_src>

<mosaic_0001>
module attributes {stable_mosaic.version = 11 : i64} {
  func.func @kernel(%arg0: memref<16x16xf32, #tpu.memory_space<vmem>>, %arg1: memref<16x128xf32, #tpu.memory_space<vmem>>, %arg2: memref<32x128xf32, #tpu.memory_space<vmem>>, %arg3: memref<1x128xf32, #tpu.memory_space<vmem>>, %arg4: memref<16x128xf32, #tpu.memory_space<vmem>>, %arg5: memref<32x128xf32, #tpu.memory_space<vmem>>, %arg6: memref<1x128xf32, #tpu.memory_space<vmem>>, %arg7: memref<32x128xf32, #tpu.memory_space<vmem>>, %arg8: memref<32x128xf32, #tpu.memory_space<vmem>>, %arg9: memref<32x128xf32, #tpu.memory_space<vmem>>, %arg10: memref<1x128xf32, #tpu.memory_space<vmem>>, %arg11: memref<32x128xf32, #tpu.memory_space<vmem>>, %arg12: memref<32x128xf32, #tpu.memory_space<vmem>>, %arg13: memref<32x128xf32, #tpu.memory_space<vmem>>, %arg14: memref<1x128xf32, #tpu.memory_space<vmem>>, %arg15: memref<32x8xf32, #tpu.memory_space<vmem>>, %arg16: memref<32x8xf32, #tpu.memory_space<vmem>>, %arg17: memref<1x8xf32, #tpu.memory_space<vmem>>, %arg18: memref<16x8xf32, #tpu.memory_space<vmem>>, %arg19: memref<16x128xf32, #tpu.memory_space<vmem>>, %arg20: memref<16x32xf32, #tpu.memory_space<vmem>>, %arg21: memref<16x32xf32, #tpu.memory_space<vmem>>, %arg22: memref<16x32xf32, #tpu.memory_space<vmem>>, %arg23: memref<16x32xf32, #tpu.memory_space<vmem>>) attributes {dimension_semantics = [], scalar_prefetch = 0 : i64, scratch_operands = 5 : i64, tpu.core_type = #tpu.core_type<tc>} {
    %c0 = arith.constant 0 : index
    %c0_0 = arith.constant 0 : index
    %0 = vector.load %arg0[%c0, %c0_0] : memref<16x16xf32, #tpu.memory_space<vmem>>, vector<16x16xf32>
    %c0_1 = arith.constant 0 : index
    %c0_2 = arith.constant 0 : index
    %1 = vector.load %arg1[%c0_1, %c0_2] : memref<16x128xf32, #tpu.memory_space<vmem>>, vector<16x128xf32>
    %cst = arith.constant dense<0.000000e+00> : vector<16x128xf32>
    %2 = tpu.matmul %0, %1, %cst {dimension_numbers = #tpu.dot_dimension_numbers<[1], [0], [0], [1], [0, 0, 1, 1], [], []>} : vector<16x16xf32>, vector<16x128xf32>, vector<16x128xf32> -> vector<16x128xf32>
    %c0_3 = arith.constant 0 : index
    %c0_4 = arith.constant 0 : index
    %3 = vector.load %arg3[%c0_3, %c0_4] : memref<1x128xf32, #tpu.memory_space<vmem>>, vector<1x128xf32>
    %4 = vector.broadcast %3 : vector<1x128xf32> to vector<16x128xf32>
    %5 = arith.addf %2, %4 : vector<16x128xf32>
    %c0_5 = arith.constant 0 : index
    %c0_6 = arith.constant 0 : index
    %6 = vector.load %arg19[%c0_5, %c0_6] : memref<16x128xf32, #tpu.memory_space<vmem>>, vector<16x128xf32>
    tpu.vector_store %arg19[%c0_5, %c0_6], %5 {strides = array<i32>} : memref<16x128xf32, #tpu.memory_space<vmem>>, vector<16x128xf32>,
    %c0_7 = arith.constant 0 : index
    %c0_8 = arith.constant 0 : index
    %7 = vector.load %arg2[%c0_7, %c0_8] : memref<32x128xf32, #tpu.memory_space<vmem>>, vector<32x128xf32>
    %cst_9 = arith.constant 0.000000e+00 : f32
    %8 = vector.broadcast %cst_9 : f32 to vector<2x32xf32>
    %cst_10 = arith.constant 0.000000e+00 : f32
    %9 = vector.broadcast %cst_10 : f32 to vector<2x32xf32>
    %c0_11 = arith.constant 0 : index
    %c0_12 = arith.constant 0 : index
    %10 = vector.load %arg19[%c0_11, %c0_12] : memref<16x128xf32, #tpu.memory_space<vmem>>, vector<2x128xf32>
    %cst_13 = arith.constant dense<0.000000e+00> : vector<2x128xf32>
    %11 = tpu.matmul %8, %7, %cst_13 {dimension_numbers = #tpu.dot_dimension_numbers<[1], [0], [0], [1], [0, 0, 1, 1], [], []>} : vector<2x32xf32>, vector<32x128xf32>, vector<2x128xf32> -> vector<2x128xf32>
    %12 = arith.addf %10, %11 : vector<2x128xf32>
    %13 = vector.extract_strided_slice %12 {offsets = [0, 0], sizes = [2, 32], strides = [1, 1]} : vector<2x128xf32> to vector<2x32xf32>
    %14 = arith.negf %13 : vector<2x32xf32>
    %15 = math.exp %14 : vector<2x32xf32>
    %cst_14 = arith.constant 1.000000e+00 : f32
    %16 = vector.broadcast %cst_14 : f32 to vector<2x32xf32>
    %17 = arith.addf %16, %15 : vector<2x32xf32>
    %18 = arith.divf %16, %17 : vector<2x32xf32>
    %19 = vector.extract_strided_slice %12 {offsets = [0, 32], sizes = [2, 32], strides = [1, 1]} : vector<2x128xf32> to vector<2x32xf32>
    %20 = arith.negf %19 : vector<2x32xf32>
    %21 = math.exp %20 : vector<2x32xf32>
    %cst_15 = arith.constant 1.000000e+00 : f32
    %22 = vector.broadcast %cst_15 : f32 to vector<2x32xf32>
    %23 = arith.addf %22, %21 : vector<2x32xf32>
    %24 = arith.divf %22, %23 : vector<2x32xf32>
    %25 = vector.extract_strided_slice %12 {offsets = [0, 64], sizes = [2, 32], strides = [1, 1]} : vector<2x128xf32> to vector<2x32xf32>
    %26 = math.tanh %25 : vector<2x32xf32>
    %27 = vector.extract_strided_slice %12 {offsets = [0, 96], sizes = [2, 32], strides = [1, 1]} : vector<2x128xf32> to vector<2x32xf32>
    %28 = arith.negf %27 : vector<2x32xf32>
    %29 = math.exp %28 : vector<2x32xf32>
    %cst_16 = arith.constant 1.000000e+00 : f32
    %30 = vector.broadcast %cst_16 : f32 to vector<2x32xf32>
    %31 = arith.addf %30, %29 : vector<2x32xf32>
    %32 = arith.divf %30, %31 : vector<2x32xf32>
    %33 = arith.mulf %24, %9 : vector<2x32xf32>
    %34 = arith.mulf %18, %26 : vector<2x32xf32>
    %35 = arith.addf %33, %34 : vector<2x32xf32>
    %36 = math.tanh %35 : vector<2x32xf32>
    %37 = arith.mulf %32, %36 : vector<2x32xf32>
    %c0_17 = arith.constant 0 : index
    %c0_18 = arith.constant 0 : index
    %38 = vector.load %arg22[%c0_17, %c0_18] : memref<16x32xf32, #tpu.memory_space<vmem>>, vector<2x32xf32>
    tpu.vector_store %arg22[%c0_17, %c0_18], %37 {strides = array<i32>} : memref<16x32xf32, #tpu.memory_space<vmem>>, vector<2x32xf32>,
    %c2 = arith.constant 2 : index
    %c0_19 = arith.constant 0 : index
    %39 = vector.load %arg19[%c2, %c0_19] : memref<16x128xf32, #tpu.memory_space<vmem>>, vector<2x128xf32>
    %cst_20 = arith.constant dense<0.000000e+00> : vector<2x128xf32>
    %40 = tpu.matmul %37, %7, %cst_20 {dimension_numbers = #tpu.dot_dimension_numbers<[1], [0], [0], [1], [0, 0, 1, 1], [], []>} : vector<2x32xf32>, vector<32x128xf32>, vector<2x128xf32> -> vector<2x128xf32>
    %41 = arith.addf %39, %40 : vector<2x128xf32>
    %42 = vector.extract_strided_slice %41 {offsets = [0, 0], sizes = [2, 32], strides = [1, 1]} : vector<2x128xf32> to vector<2x32xf32>
    %43 = arith.negf %42 : vector<2x32xf32>
    %44 = math.exp %43 : vector<2x32xf32>
    %cst_21 = arith.constant 1.000000e+00 : f32
    %45 = vector.broadcast %cst_21 : f32 to vector<2x32xf32>
    %46 = arith.addf %45, %44 : vector<2x32xf32>
    %47 = arith.divf %45, %46 : vector<2x32xf32>
    %48 = vector.extract_strided_slice %41 {offsets = [0, 32], sizes = [2, 32], strides = [1, 1]} : vector<2x128xf32> to vector<2x32xf32>
    %49 = arith.negf %48 : vector<2x32xf32>
    %50 = math.exp %49 : vector<2x32xf32>
    %cst_22 = arith.constant 1.000000e+00 : f32
    %51 = vector.broadcast %cst_22 : f32 to vector<2x32xf32>
    %52 = arith.addf %51, %50 : vector<2x32xf32>
    %53 = arith.divf %51, %52 : vector<2x32xf32>
    %54 = vector.extract_strided_slice %41 {offsets = [0, 64], sizes = [2, 32], strides = [1, 1]} : vector<2x128xf32> to vector<2x32xf32>
    %55 = math.tanh %54 : vector<2x32xf32>
    %56 = vector.extract_strided_slice %41 {offsets = [0, 96], sizes = [2, 32], strides = [1, 1]} : vector<2x128xf32> to vector<2x32xf32>
    %57 = arith.negf %56 : vector<2x32xf32>
    %58 = math.exp %57 : vector<2x32xf32>
    %cst_23 = arith.constant 1.000000e+00 : f32
    %59 = vector.broadcast %cst_23 : f32 to vector<2x32xf32>
    %60 = arith.addf %59, %58 : vector<2x32xf32>
    %61 = arith.divf %59, %60 : vector<2x32xf32>
    %62 = arith.mulf %53, %35 : vector<2x32xf32>
    %63 = arith.mulf %47, %55 : vector<2x32xf32>
    %64 = arith.addf %62, %63 : vector<2x32xf32>
    %65 = math.tanh %64 : vector<2x32xf32>
    %66 = arith.mulf %61, %65 : vector<2x32xf32>
    %c2_24 = arith.constant 2 : index
    %c0_25 = arith.constant 0 : index
    %67 = vector.load %arg22[%c2_24, %c0_25] : memref<16x32xf32, #tpu.memory_space<vmem>>, vector<2x32xf32>
    tpu.vector_store %arg22[%c2_24, %c0_25], %66 {strides = array<i32>} : memref<16x32xf32, #tpu.memory_space<vmem>>, vector<2x32xf32>,
    %c4 = arith.constant 4 : index
    %c0_26 = arith.constant 0 : index
    %68 = vector.load %arg19[%c4, %c0_26] : memref<16x128xf32, #tpu.memory_space<vmem>>, vector<2x128xf32>
    %cst_27 = arith.constant dense<0.000000e+00> : vector<2x128xf32>
    %69 = tpu.matmul %66, %7, %cst_27 {dimension_numbers = #tpu.dot_dimension_numbers<[1], [0], [0], [1], [0, 0, 1, 1], [], []>} : vector<2x32xf32>, vector<32x128xf32>, vector<2x128xf32> -> vector<2x128xf32>
    %70 = arith.addf %68, %69 : vector<2x128xf32>
    %71 = vector.extract_strided_slice %70 {offsets = [0, 0], sizes = [2, 32], strides = [1, 1]} : vector<2x128xf32> to vector<2x32xf32>
    %72 = arith.negf %71 : vector<2x32xf32>
    %73 = math.exp %72 : vector<2x32xf32>
    %cst_28 = arith.constant 1.000000e+00 : f32
    %74 = vector.broadcast %cst_28 : f32 to vector<2x32xf32>
    %75 = arith.addf %74, %73 : vector<2x32xf32>
    %76 = arith.divf %74, %75 : vector<2x32xf32>
    %77 = vector.extract_strided_slice %70 {offsets = [0, 32], sizes = [2, 32], strides = [1, 1]} : vector<2x128xf32> to vector<2x32xf32>
    %78 = arith.negf %77 : vector<2x32xf32>
    %79 = math.exp %78 : vector<2x32xf32>
    %cst_29 = arith.constant 1.000000e+00 : f32
    %80 = vector.broadcast %cst_29 : f32 to vector<2x32xf32>
    %81 = arith.addf %80, %79 : vector<2x32xf32>
    %82 = arith.divf %80, %81 : vector<2x32xf32>
    %83 = vector.extract_strided_slice %70 {offsets = [0, 64], sizes = [2, 32], strides = [1, 1]} : vector<2x128xf32> to vector<2x32xf32>
    %84 = math.tanh %83 : vector<2x32xf32>
    %85 = vector.extract_strided_slice %70 {offsets = [0, 96], sizes = [2, 32], strides = [1, 1]} : vector<2x128xf32> to vector<2x32xf32>
    %86 = arith.negf %85 : vector<2x32xf32>
    %87 = math.exp %86 : vector<2x32xf32>
    %cst_30 = arith.constant 1.000000e+00 : f32
    %88 = vector.broadcast %cst_30 : f32 to vector<2x32xf32>
    %89 = arith.addf %88, %87 : vector<2x32xf32>
    %90 = arith.divf %88, %89 : vector<2x32xf32>
    %91 = arith.mulf %82, %64 : vector<2x32xf32>
    %92 = arith.mulf %76, %84 : vector<2x32xf32>
    %93 = arith.addf %91, %92 : vector<2x32xf32>
    %94 = math.tanh %93 : vector<2x32xf32>
    %95 = arith.mulf %90, %94 : vector<2x32xf32>
    %c4_31 = arith.constant 4 : index
    %c0_32 = arith.constant 0 : index
    %96 = vector.load %arg22[%c4_31, %c0_32] : memref<16x32xf32, #tpu.memory_space<vmem>>, vector<2x32xf32>
    tpu.vector_store %arg22[%c4_31, %c0_32], %95 {strides = array<i32>} : memref<16x32xf32, #tpu.memory_space<vmem>>, vector<2x32xf32>,
    %c6 = arith.constant 6 : index
    %c0_33 = arith.constant 0 : index
    %97 = vector.load %arg19[%c6, %c0_33] : memref<16x128xf32, #tpu.memory_space<vmem>>, vector<2x128xf32>
    %cst_34 = arith.constant dense<0.000000e+00> : vector<2x128xf32>
    %98 = tpu.matmul %95, %7, %cst_34 {dimension_numbers = #tpu.dot_dimension_numbers<[1], [0], [0], [1], [0, 0, 1, 1], [], []>} : vector<2x32xf32>, vector<32x128xf32>, vector<2x128xf32> -> vector<2x128xf32>
    %99 = arith.addf %97, %98 : vector<2x128xf32>
    %100 = vector.extract_strided_slice %99 {offsets = [0, 0], sizes = [2, 32], strides = [1, 1]} : vector<2x128xf32> to vector<2x32xf32>
    %101 = arith.negf %100 : vector<2x32xf32>
    %102 = math.exp %101 : vector<2x32xf32>
    %cst_35 = arith.constant 1.000000e+00 : f32
    %103 = vector.broadcast %cst_35 : f32 to vector<2x32xf32>
    %104 = arith.addf %103, %102 : vector<2x32xf32>
    %105 = arith.divf %103, %104 : vector<2x32xf32>
    %106 = vector.extract_strided_slice %99 {offsets = [0, 32], sizes = [2, 32], strides = [1, 1]} : vector<2x128xf32> to vector<2x32xf32>
    %107 = arith.negf %106 : vector<2x32xf32>
    %108 = math.exp %107 : vector<2x32xf32>
    %cst_36 = arith.constant 1.000000e+00 : f32
    %109 = vector.broadcast %cst_36 : f32 to vector<2x32xf32>
    %110 = arith.addf %109, %108 : vector<2x32xf32>
    %111 = arith.divf %109, %110 : vector<2x32xf32>
    %112 = vector.extract_strided_slice %99 {offsets = [0, 64], sizes = [2, 32], strides = [1, 1]} : vector<2x128xf32> to vector<2x32xf32>
    %113 = math.tanh %112 : vector<2x32xf32>
    %114 = vector.extract_strided_slice %99 {offsets = [0, 96], sizes = [2, 32], strides = [1, 1]} : vector<2x128xf32> to vector<2x32xf32>
    %115 = arith.negf %114 : vector<2x32xf32>
    %116 = math.exp %115 : vector<2x32xf32>
    %cst_37 = arith.constant 1.000000e+00 : f32
    %117 = vector.broadcast %cst_37 : f32 to vector<2x32xf32>
    %118 = arith.addf %117, %116 : vector<2x32xf32>
    %119 = arith.divf %117, %118 : vector<2x32xf32>
    %120 = arith.mulf %111, %93 : vector<2x32xf32>
    %121 = arith.mulf %105, %113 : vector<2x32xf32>
    %122 = arith.addf %120, %121 : vector<2x32xf32>
    %123 = math.tanh %122 : vector<2x32xf32>
    %124 = arith.mulf %119, %123 : vector<2x32xf32>
    %c6_38 = arith.constant 6 : index
    %c0_39 = arith.constant 0 : index
    %125 = vector.load %arg22[%c6_38, %c0_39] : memref<16x32xf32, #tpu.memory_space<vmem>>, vector<2x32xf32>
    tpu.vector_store %arg22[%c6_38, %c0_39], %124 {strides = array<i32>} : memref<16x32xf32, #tpu.memory_space<vmem>>, vector<2x32xf32>,
    %c8 = arith.constant 8 : index
    %c0_40 = arith.constant 0 : index
    %126 = vector.load %arg19[%c8, %c0_40] : memref<16x128xf32, #tpu.memory_space<vmem>>, vector<2x128xf32>
    %cst_41 = arith.constant dense<0.000000e+00> : vector<2x128xf32>
    %127 = tpu.matmul %124, %7, %cst_41 {dimension_numbers = #tpu.dot_dimension_numbers<[1], [0], [0], [1], [0, 0, 1, 1], [], []>} : vector<2x32xf32>, vector<32x128xf32>, vector<2x128xf32> -> vector<2x128xf32>
    %128 = arith.addf %126, %127 : vector<2x128xf32>
    %129 = vector.extract_strided_slice %128 {offsets = [0, 0], sizes = [2, 32], strides = [1, 1]} : vector<2x128xf32> to vector<2x32xf32>
    %130 = arith.negf %129 : vector<2x32xf32>
    %131 = math.exp %130 : vector<2x32xf32>
    %cst_42 = arith.constant 1.000000e+00 : f32
    %132 = vector.broadcast %cst_42 : f32 to vector<2x32xf32>
    %133 = arith.addf %132, %131 : vector<2x32xf32>
    %134 = arith.divf %132, %133 : vector<2x32xf32>
    %135 = vector.extract_strided_slice %128 {offsets = [0, 32], sizes = [2, 32], strides = [1, 1]} : vector<2x128xf32> to vector<2x32xf32>
    %136 = arith.negf %135 : vector<2x32xf32>
    %137 = math.exp %136 : vector<2x32xf32>
    %cst_43 = arith.constant 1.000000e+00 : f32
    %138 = vector.broadcast %cst_43 : f32 to vector<2x32xf32>
    %139 = arith.addf %138, %137 : vector<2x32xf32>
    %140 = arith.divf %138, %139 : vector<2x32xf32>
    %141 = vector.extract_strided_slice %128 {offsets = [0, 64], sizes = [2, 32], strides = [1, 1]} : vector<2x128xf32> to vector<2x32xf32>
    %142 = math.tanh %141 : vector<2x32xf32>
    %143 = vector.extract_strided_slice %128 {offsets = [0, 96], sizes = [2, 32], strides = [1, 1]} : vector<2x128xf32> to vector<2x32xf32>
    %144 = arith.negf %143 : vector<2x32xf32>
    %145 = math.exp %144 : vector<2x32xf32>
    %cst_44 = arith.constant 1.000000e+00 : f32
    %146 = vector.broadcast %cst_44 : f32 to vector<2x32xf32>
    %147 = arith.addf %146, %145 : vector<2x32xf32>
    %148 = arith.divf %146, %147 : vector<2x32xf32>
    %149 = arith.mulf %140, %122 : vector<2x32xf32>
    %150 = arith.mulf %134, %142 : vector<2x32xf32>
    %151 = arith.addf %149, %150 : vector<2x32xf32>
    %152 = math.tanh %151 : vector<2x32xf32>
    %153 = arith.mulf %148, %152 : vector<2x32xf32>
    %c8_45 = arith.constant 8 : index
    %c0_46 = arith.constant 0 : index
    %154 = vector.load %arg22[%c8_45, %c0_46] : memref<16x32xf32, #tpu.memory_space<vmem>>, vector<2x32xf32>
    tpu.vector_store %arg22[%c8_45, %c0_46], %153 {strides = array<i32>} : memref<16x32xf32, #tpu.memory_space<vmem>>, vector<2x32xf32>,
    %c10 = arith.constant 10 : index
    %c0_47 = arith.constant 0 : index
    %155 = vector.load %arg19[%c10, %c0_47] : memref<16x128xf32, #tpu.memory_space<vmem>>, vector<2x128xf32>
    %cst_48 = arith.constant dense<0.000000e+00> : vector<2x128xf32>
    %156 = tpu.matmul %153, %7, %cst_48 {dimension_numbers = #tpu.dot_dimension_numbers<[1], [0], [0], [1], [0, 0, 1, 1], [], []>} : vector<2x32xf32>, vector<32x128xf32>, vector<2x128xf32> -> vector<2x128xf32>
    %157 = arith.addf %155, %156 : vector<2x128xf32>
    %158 = vector.extract_strided_slice %157 {offsets = [0, 0], sizes = [2, 32], strides = [1, 1]} : vector<2x128xf32> to vector<2x32xf32>
    %159 = arith.negf %158 : vector<2x32xf32>
    %160 = math.exp %159 : vector<2x32xf32>
    %cst_49 = arith.constant 1.000000e+00 : f32
    %161 = vector.broadcast %cst_49 : f32 to vector<2x32xf32>
    %162 = arith.addf %161, %160 : vector<2x32xf32>
    %163 = arith.divf %161, %162 : vector<2x32xf32>
    %164 = vector.extract_strided_slice %157 {offsets = [0, 32], sizes = [2, 32], strides = [1, 1]} : vector<2x128xf32> to vector<2x32xf32>
    %165 = arith.negf %164 : vector<2x32xf32>
    %166 = math.exp %165 : vector<2x32xf32>
    %cst_50 = arith.constant 1.000000e+00 : f32
    %167 = vector.broadcast %cst_50 : f32 to vector<2x32xf32>
    %168 = arith.addf %167, %166 : vector<2x32xf32>
    %169 = arith.divf %167, %168 : vector<2x32xf32>
    %170 = vector.extract_strided_slice %157 {offsets = [0, 64], sizes = [2, 32], strides = [1, 1]} : vector<2x128xf32> to vector<2x32xf32>
    %171 = math.tanh %170 : vector<2x32xf32>
    %172 = vector.extract_strided_slice %157 {offsets = [0, 96], sizes = [2, 32], strides = [1, 1]} : vector<2x128xf32> to vector<2x32xf32>
    %173 = arith.negf %172 : vector<2x32xf32>
    %174 = math.exp %173 : vector<2x32xf32>
    %cst_51 = arith.constant 1.000000e+00 : f32
    %175 = vector.broadcast %cst_51 : f32 to vector<2x32xf32>
    %176 = arith.addf %175, %174 : vector<2x32xf32>
    %177 = arith.divf %175, %176 : vector<2x32xf32>
    %178 = arith.mulf %169, %151 : vector<2x32xf32>
    %179 = arith.mulf %163, %171 : vector<2x32xf32>
    %180 = arith.addf %178, %179 : vector<2x32xf32>
    %181 = math.tanh %180 : vector<2x32xf32>
    %182 = arith.mulf %177, %181 : vector<2x32xf32>
    %c10_52 = arith.constant 10 : index
    %c0_53 = arith.constant 0 : index
    %183 = vector.load %arg22[%c10_52, %c0_53] : memref<16x32xf32, #tpu.memory_space<vmem>>, vector<2x32xf32>
    tpu.vector_store %arg22[%c10_52, %c0_53], %182 {strides = array<i32>} : memref<16x32xf32, #tpu.memory_space<vmem>>, vector<2x32xf32>,
    %c12 = arith.constant 12 : index
    %c0_54 = arith.constant 0 : index
    %184 = vector.load %arg19[%c12, %c0_54] : memref<16x128xf32, #tpu.memory_space<vmem>>, vector<2x128xf32>
    %cst_55 = arith.constant dense<0.000000e+00> : vector<2x128xf32>
    %185 = tpu.matmul %182, %7, %cst_55 {dimension_numbers = #tpu.dot_dimension_numbers<[1], [0], [0], [1], [0, 0, 1, 1], [], []>} : vector<2x32xf32>, vector<32x128xf32>, vector<2x128xf32> -> vector<2x128xf32>
    %186 = arith.addf %184, %185 : vector<2x128xf32>
    %187 = vector.extract_strided_slice %186 {offsets = [0, 0], sizes = [2, 32], strides = [1, 1]} : vector<2x128xf32> to vector<2x32xf32>
    %188 = arith.negf %187 : vector<2x32xf32>
    %189 = math.exp %188 : vector<2x32xf32>
    %cst_56 = arith.constant 1.000000e+00 : f32
    %190 = vector.broadcast %cst_56 : f32 to vector<2x32xf32>
    %191 = arith.addf %190, %189 : vector<2x32xf32>
    %192 = arith.divf %190, %191 : vector<2x32xf32>
    %193 = vector.extract_strided_slice %186 {offsets = [0, 32], sizes = [2, 32], strides = [1, 1]} : vector<2x128xf32> to vector<2x32xf32>
    %194 = arith.negf %193 : vector<2x32xf32>
    %195 = math.exp %194 : vector<2x32xf32>
    %cst_57 = arith.constant 1.000000e+00 : f32
    %196 = vector.broadcast %cst_57 : f32 to vector<2x32xf32>
    %197 = arith.addf %196, %195 : vector<2x32xf32>
    %198 = arith.divf %196, %197 : vector<2x32xf32>
    %199 = vector.extract_strided_slice %186 {offsets = [0, 64], sizes = [2, 32], strides = [1, 1]} : vector<2x128xf32> to vector<2x32xf32>
    %200 = math.tanh %199 : vector<2x32xf32>
    %201 = vector.extract_strided_slice %186 {offsets = [0, 96], sizes = [2, 32], strides = [1, 1]} : vector<2x128xf32> to vector<2x32xf32>
    %202 = arith.negf %201 : vector<2x32xf32>
    %203 = math.exp %202 : vector<2x32xf32>
    %cst_58 = arith.constant 1.000000e+00 : f32
    %204 = vector.broadcast %cst_58 : f32 to vector<2x32xf32>
    %205 = arith.addf %204, %203 : vector<2x32xf32>
    %206 = arith.divf %204, %205 : vector<2x32xf32>
    %207 = arith.mulf %198, %180 : vector<2x32xf32>
    %208 = arith.mulf %192, %200 : vector<2x32xf32>
    %209 = arith.addf %207, %208 : vector<2x32xf32>
    %210 = math.tanh %209 : vector<2x32xf32>
    %211 = arith.mulf %206, %210 : vector<2x32xf32>
    %c12_59 = arith.constant 12 : index
    %c0_60 = arith.constant 0 : index
    %212 = vector.load %arg22[%c12_59, %c0_60] : memref<16x32xf32, #tpu.memory_space<vmem>>, vector<2x32xf32>
    tpu.vector_store %arg22[%c12_59, %c0_60], %211 {strides = array<i32>} : memref<16x32xf32, #tpu.memory_space<vmem>>, vector<2x32xf32>,
    %c14 = arith.constant 14 : index
    %c0_61 = arith.constant 0 : index
    %213 = vector.load %arg19[%c14, %c0_61] : memref<16x128xf32, #tpu.memory_space<vmem>>, vector<2x128xf32>
    %cst_62 = arith.constant dense<0.000000e+00> : vector<2x128xf32>
    %214 = tpu.matmul %211, %7, %cst_62 {dimension_numbers = #tpu.dot_dimension_numbers<[1], [0], [0], [1], [0, 0, 1, 1], [], []>} : vector<2x32xf32>, vector<32x128xf32>, vector<2x128xf32> -> vector<2x128xf32>
    %215 = arith.addf %213, %214 : vector<2x128xf32>
    %216 = vector.extract_strided_slice %215 {offsets = [0, 0], sizes = [2, 32], strides = [1, 1]} : vector<2x128xf32> to vector<2x32xf32>
    %217 = arith.negf %216 : vector<2x32xf32>
    %218 = math.exp %217 : vector<2x32xf32>
    %cst_63 = arith.constant 1.000000e+00 : f32
    %219 = vector.broadcast %cst_63 : f32 to vector<2x32xf32>
    %220 = arith.addf %219, %218 : vector<2x32xf32>
    %221 = arith.divf %219, %220 : vector<2x32xf32>
    %222 = vector.extract_strided_slice %215 {offsets = [0, 32], sizes = [2, 32], strides = [1, 1]} : vector<2x128xf32> to vector<2x32xf32>
    %223 = arith.negf %222 : vector<2x32xf32>
    %224 = math.exp %223 : vector<2x32xf32>
    %cst_64 = arith.constant 1.000000e+00 : f32
    %225 = vector.broadcast %cst_64 : f32 to vector<2x32xf32>
    %226 = arith.addf %225, %224 : vector<2x32xf32>
    %227 = arith.divf %225, %226 : vector<2x32xf32>
    %228 = vector.extract_strided_slice %215 {offsets = [0, 64], sizes = [2, 32], strides = [1, 1]} : vector<2x128xf32> to vector<2x32xf32>
    %229 = math.tanh %228 : vector<2x32xf32>
    %230 = vector.extract_strided_slice %215 {offsets = [0, 96], sizes = [2, 32], strides = [1, 1]} : vector<2x128xf32> to vector<2x32xf32>
    %231 = arith.negf %230 : vector<2x32xf32>
    %232 = math.exp %231 : vector<2x32xf32>
    %cst_65 = arith.constant 1.000000e+00 : f32
    %233 = vector.broadcast %cst_65 : f32 to vector<2x32xf32>
    %234 = arith.addf %233, %232 : vector<2x32xf32>
    %235 = arith.divf %233, %234 : vector<2x32xf32>
    %236 = arith.mulf %227, %209 : vector<2x32xf32>
    %237 = arith.mulf %221, %229 : vector<2x32xf32>
    %238 = arith.addf %236, %237 : vector<2x32xf32>
    %239 = math.tanh %238 : vector<2x32xf32>
    %240 = arith.mulf %235, %239 : vector<2x32xf32>
    %c14_66 = arith.constant 14 : index
    %c0_67 = arith.constant 0 : index
    %241 = vector.load %arg22[%c14_66, %c0_67] : memref<16x32xf32, #tpu.memory_space<vmem>>, vector<2x32xf32>
    tpu.vector_store %arg22[%c14_66, %c0_67], %240 {strides = array<i32>} : memref<16x32xf32, #tpu.memory_space<vmem>>, vector<2x32xf32>,
    %c0_68 = arith.constant 0 : index
    %c0_69 = arith.constant 0 : index
    %242 = vector.load %arg0[%c0_68, %c0_69] : memref<16x16xf32, #tpu.memory_space<vmem>>, vector<16x16xf32>
    %c0_70 = arith.constant 0 : index
    %c0_71 = arith.constant 0 : index
    %243 = vector.load %arg4[%c0_70, %c0_71] : memref<16x128xf32, #tpu.memory_space<vmem>>, vector<16x128xf32>
    %cst_72 = arith.constant dense<0.000000e+00> : vector<16x128xf32>
    %244 = tpu.matmul %242, %243, %cst_72 {dimension_numbers = #tpu.dot_dimension_numbers<[1], [0], [0], [1], [0, 0, 1, 1], [], []>} : vector<16x16xf32>, vector<16x128xf32>, vector<16x128xf32> -> vector<16x128xf32>
    %c0_73 = arith.constant 0 : index
    %c0_74 = arith.constant 0 : index
    %245 = vector.load %arg6[%c0_73, %c0_74] : memref<1x128xf32, #tpu.memory_space<vmem>>, vector<1x128xf32>
    %246 = vector.broadcast %245 : vector<1x128xf32> to vector<16x128xf32>
    %247 = arith.addf %244, %246 : vector<16x128xf32>
    %c0_75 = arith.constant 0 : index
    %c0_76 = arith.constant 0 : index
    %248 = vector.load %arg19[%c0_75, %c0_76] : memref<16x128xf32, #tpu.memory_space<vmem>>, vector<16x128xf32>
    tpu.vector_store %arg19[%c0_75, %c0_76], %247 {strides = array<i32>} : memref<16x128xf32, #tpu.memory_space<vmem>>, vector<16x128xf32>,
    %c0_77 = arith.constant 0 : index
    %c0_78 = arith.constant 0 : index
    %249 = vector.load %arg5[%c0_77, %c0_78] : memref<32x128xf32, #tpu.memory_space<vmem>>, vector<32x128xf32>
    %cst_79 = arith.constant 0.000000e+00 : f32
    %250 = vector.broadcast %cst_79 : f32 to vector<2x32xf32>
    %cst_80 = arith.constant 0.000000e+00 : f32
    %251 = vector.broadcast %cst_80 : f32 to vector<2x32xf32>
    %c14_81 = arith.constant 14 : index
    %c0_82 = arith.constant 0 : index
    %252 = vector.load %arg19[%c14_81, %c0_82] : memref<16x128xf32, #tpu.memory_space<vmem>>, vector<2x128xf32>
    %cst_83 = arith.constant dense<0.000000e+00> : vector<2x128xf32>
    %253 = tpu.matmul %250, %249, %cst_83 {dimension_numbers = #tpu.dot_dimension_numbers<[1], [0], [0], [1], [0, 0, 1, 1], [], []>} : vector<2x32xf32>, vector<32x128xf32>, vector<2x128xf32> -> vector<2x128xf32>
    %254 = arith.addf %252, %253 : vector<2x128xf32>
    %255 = vector.extract_strided_slice %254 {offsets = [0, 0], sizes = [2, 32], strides = [1, 1]} : vector<2x128xf32> to vector<2x32xf32>
    %256 = arith.negf %255 : vector<2x32xf32>
    %257 = math.exp %256 : vector<2x32xf32>
    %cst_84 = arith.constant 1.000000e+00 : f32
    %258 = vector.broadcast %cst_84 : f32 to vector<2x32xf32>
    %259 = arith.addf %258, %257 : vector<2x32xf32>
    %260 = arith.divf %258, %259 : vector<2x32xf32>
    %261 = vector.extract_strided_slice %254 {offsets = [0, 32], sizes = [2, 32], strides = [1, 1]} : vector<2x128xf32> to vector<2x32xf32>
    %262 = arith.negf %261 : vector<2x32xf32>
    %263 = math.exp %262 : vector<2x32xf32>
    %cst_85 = arith.constant 1.000000e+00 : f32
    %264 = vector.broadcast %cst_85 : f32 to vector<2x32xf32>
    %265 = arith.addf %264, %263 : vector<2x32xf32>
    %266 = arith.divf %264, %265 : vector<2x32xf32>
    %267 = vector.extract_strided_slice %254 {offsets = [0, 64], sizes = [2, 32], strides = [1, 1]} : vector<2x128xf32> to vector<2x32xf32>
    %268 = math.tanh %267 : vector<2x32xf32>
    %269 = vector.extract_strided_slice %254 {offsets = [0, 96], sizes = [2, 32], strides = [1, 1]} : vector<2x128xf32> to vector<2x32xf32>
    %270 = arith.negf %269 : vector<2x32xf32>
    %271 = math.exp %270 : vector<2x32xf32>
    %cst_86 = arith.constant 1.000000e+00 : f32
    %272 = vector.broadcast %cst_86 : f32 to vector<2x32xf32>
    %273 = arith.addf %272, %271 : vector<2x32xf32>
    %274 = arith.divf %272, %273 : vector<2x32xf32>
    %275 = arith.mulf %266, %251 : vector<2x32xf32>
    %276 = arith.mulf %260, %268 : vector<2x32xf32>
    %277 = arith.addf %275, %276 : vector<2x32xf32>
    %278 = math.tanh %277 : vector<2x32xf32>
    %279 = arith.mulf %274, %278 : vector<2x32xf32>
    %c14_87 = arith.constant 14 : index
    %c0_88 = arith.constant 0 : index
    %280 = vector.load %arg23[%c14_87, %c0_88] : memref<16x32xf32, #tpu.memory_space<vmem>>, vector<2x32xf32>
    tpu.vector_store %arg23[%c14_87, %c0_88], %279 {strides = array<i32>} : memref<16x32xf32, #tpu.memory_space<vmem>>, vector<2x32xf32>,
    %c12_89 = arith.constant 12 : index
    %c0_90 = arith.constant 0 : index
    %281 = vector.load %arg19[%c12_89, %c0_90] : memref<16x128xf32, #tpu.memory_space<vmem>>, vector<2x128xf32>
    %cst_91 = arith.constant dense<0.000000e+00> : vector<2x128xf32>
    %282 = tpu.matmul %279, %249, %cst_91 {dimension_numbers = #tpu.dot_dimension_numbers<[1], [0], [0], [1], [0, 0, 1, 1], [], []>} : vector<2x32xf32>, vector<32x128xf32>, vector<2x128xf32> -> vector<2x128xf32>
    %283 = arith.addf %281, %282 : vector<2x128xf32>
    %284 = vector.extract_strided_slice %283 {offsets = [0, 0], sizes = [2, 32], strides = [1, 1]} : vector<2x128xf32> to vector<2x32xf32>
    %285 = arith.negf %284 : vector<2x32xf32>
    %286 = math.exp %285 : vector<2x32xf32>
    %cst_92 = arith.constant 1.000000e+00 : f32
    %287 = vector.broadcast %cst_92 : f32 to vector<2x32xf32>
    %288 = arith.addf %287, %286 : vector<2x32xf32>
    %289 = arith.divf %287, %288 : vector<2x32xf32>
    %290 = vector.extract_strided_slice %283 {offsets = [0, 32], sizes = [2, 32], strides = [1, 1]} : vector<2x128xf32> to vector<2x32xf32>
    %291 = arith.negf %290 : vector<2x32xf32>
    %292 = math.exp %291 : vector<2x32xf32>
    %cst_93 = arith.constant 1.000000e+00 : f32
    %293 = vector.broadcast %cst_93 : f32 to vector<2x32xf32>
    %294 = arith.addf %293, %292 : vector<2x32xf32>
    %295 = arith.divf %293, %294 : vector<2x32xf32>
    %296 = vector.extract_strided_slice %283 {offsets = [0, 64], sizes = [2, 32], strides = [1, 1]} : vector<2x128xf32> to vector<2x32xf32>
    %297 = math.tanh %296 : vector<2x32xf32>
    %298 = vector.extract_strided_slice %283 {offsets = [0, 96], sizes = [2, 32], strides = [1, 1]} : vector<2x128xf32> to vector<2x32xf32>
    %299 = arith.negf %298 : vector<2x32xf32>
    %300 = math.exp %299 : vector<2x32xf32>
    %cst_94 = arith.constant 1.000000e+00 : f32
    %301 = vector.broadcast %cst_94 : f32 to vector<2x32xf32>
    %302 = arith.addf %301, %300 : vector<2x32xf32>
    %303 = arith.divf %301, %302 : vector<2x32xf32>
    %304 = arith.mulf %295, %277 : vector<2x32xf32>
    %305 = arith.mulf %289, %297 : vector<2x32xf32>
    %306 = arith.addf %304, %305 : vector<2x32xf32>
    %307 = math.tanh %306 : vector<2x32xf32>
    %308 = arith.mulf %303, %307 : vector<2x32xf32>
    %c12_95 = arith.constant 12 : index
    %c0_96 = arith.constant 0 : index
    %309 = vector.load %arg23[%c12_95, %c0_96] : memref<16x32xf32, #tpu.memory_space<vmem>>, vector<2x32xf32>
    tpu.vector_store %arg23[%c12_95, %c0_96], %308 {strides = array<i32>} : memref<16x32xf32, #tpu.memory_space<vmem>>, vector<2x32xf32>,
    %c10_97 = arith.constant 10 : index
    %c0_98 = arith.constant 0 : index
    %310 = vector.load %arg19[%c10_97, %c0_98] : memref<16x128xf32, #tpu.memory_space<vmem>>, vector<2x128xf32>
    %cst_99 = arith.constant dense<0.000000e+00> : vector<2x128xf32>
    %311 = tpu.matmul %308, %249, %cst_99 {dimension_numbers = #tpu.dot_dimension_numbers<[1], [0], [0], [1], [0, 0, 1, 1], [], []>} : vector<2x32xf32>, vector<32x128xf32>, vector<2x128xf32> -> vector<2x128xf32>
    %312 = arith.addf %310, %311 : vector<2x128xf32>
    %313 = vector.extract_strided_slice %312 {offsets = [0, 0], sizes = [2, 32], strides = [1, 1]} : vector<2x128xf32> to vector<2x32xf32>
    %314 = arith.negf %313 : vector<2x32xf32>
    %315 = math.exp %314 : vector<2x32xf32>
    %cst_100 = arith.constant 1.000000e+00 : f32
    %316 = vector.broadcast %cst_100 : f32 to vector<2x32xf32>
    %317 = arith.addf %316, %315 : vector<2x32xf32>
    %318 = arith.divf %316, %317 : vector<2x32xf32>
    %319 = vector.extract_strided_slice %312 {offsets = [0, 32], sizes = [2, 32], strides = [1, 1]} : vector<2x128xf32> to vector<2x32xf32>
    %320 = arith.negf %319 : vector<2x32xf32>
    %321 = math.exp %320 : vector<2x32xf32>
    %cst_101 = arith.constant 1.000000e+00 : f32
    %322 = vector.broadcast %cst_101 : f32 to vector<2x32xf32>
    %323 = arith.addf %322, %321 : vector<2x32xf32>
    %324 = arith.divf %322, %323 : vector<2x32xf32>
    %325 = vector.extract_strided_slice %312 {offsets = [0, 64], sizes = [2, 32], strides = [1, 1]} : vector<2x128xf32> to vector<2x32xf32>
    %326 = math.tanh %325 : vector<2x32xf32>
    %327 = vector.extract_strided_slice %312 {offsets = [0, 96], sizes = [2, 32], strides = [1, 1]} : vector<2x128xf32> to vector<2x32xf32>
    %328 = arith.negf %327 : vector<2x32xf32>
    %329 = math.exp %328 : vector<2x32xf32>
    %cst_102 = arith.constant 1.000000e+00 : f32
    %330 = vector.broadcast %cst_102 : f32 to vector<2x32xf32>
    %331 = arith.addf %330, %329 : vector<2x32xf32>
    %332 = arith.divf %330, %331 : vector<2x32xf32>
    %333 = arith.mulf %324, %306 : vector<2x32xf32>
    %334 = arith.mulf %318, %326 : vector<2x32xf32>
    %335 = arith.addf %333, %334 : vector<2x32xf32>
    %336 = math.tanh %335 : vector<2x32xf32>
    %337 = arith.mulf %332, %336 : vector<2x32xf32>
    %c10_103 = arith.constant 10 : index
    %c0_104 = arith.constant 0 : index
    %338 = vector.load %arg23[%c10_103, %c0_104] : memref<16x32xf32, #tpu.memory_space<vmem>>, vector<2x32xf32>
    tpu.vector_store %arg23[%c10_103, %c0_104], %337 {strides = array<i32>} : memref<16x32xf32, #tpu.memory_space<vmem>>, vector<2x32xf32>,
    %c8_105 = arith.constant 8 : index
    %c0_106 = arith.constant 0 : index
    %339 = vector.load %arg19[%c8_105, %c0_106] : memref<16x128xf32, #tpu.memory_space<vmem>>, vector<2x128xf32>
    %cst_107 = arith.constant dense<0.000000e+00> : vector<2x128xf32>
    %340 = tpu.matmul %337, %249, %cst_107 {dimension_numbers = #tpu.dot_dimension_numbers<[1], [0], [0], [1], [0, 0, 1, 1], [], []>} : vector<2x32xf32>, vector<32x128xf32>, vector<2x128xf32> -> vector<2x128xf32>
    %341 = arith.addf %339, %340 : vector<2x128xf32>
    %342 = vector.extract_strided_slice %341 {offsets = [0, 0], sizes = [2, 32], strides = [1, 1]} : vector<2x128xf32> to vector<2x32xf32>
    %343 = arith.negf %342 : vector<2x32xf32>
    %344 = math.exp %343 : vector<2x32xf32>
    %cst_108 = arith.constant 1.000000e+00 : f32
    %345 = vector.broadcast %cst_108 : f32 to vector<2x32xf32>
    %346 = arith.addf %345, %344 : vector<2x32xf32>
    %347 = arith.divf %345, %346 : vector<2x32xf32>
    %348 = vector.extract_strided_slice %341 {offsets = [0, 32], sizes = [2, 32], strides = [1, 1]} : vector<2x128xf32> to vector<2x32xf32>
    %349 = arith.negf %348 : vector<2x32xf32>
    %350 = math.exp %349 : vector<2x32xf32>
    %cst_109 = arith.constant 1.000000e+00 : f32
    %351 = vector.broadcast %cst_109 : f32 to vector<2x32xf32>
    %352 = arith.addf %351, %350 : vector<2x32xf32>
    %353 = arith.divf %351, %352 : vector<2x32xf32>
    %354 = vector.extract_strided_slice %341 {offsets = [0, 64], sizes = [2, 32], strides = [1, 1]} : vector<2x128xf32> to vector<2x32xf32>
    %355 = math.tanh %354 : vector<2x32xf32>
    %356 = vector.extract_strided_slice %341 {offsets = [0, 96], sizes = [2, 32], strides = [1, 1]} : vector<2x128xf32> to vector<2x32xf32>
    %357 = arith.negf %356 : vector<2x32xf32>
    %358 = math.exp %357 : vector<2x32xf32>
    %cst_110 = arith.constant 1.000000e+00 : f32
    %359 = vector.broadcast %cst_110 : f32 to vector<2x32xf32>
    %360 = arith.addf %359, %358 : vector<2x32xf32>
    %361 = arith.divf %359, %360 : vector<2x32xf32>
    %362 = arith.mulf %353, %335 : vector<2x32xf32>
    %363 = arith.mulf %347, %355 : vector<2x32xf32>
    %364 = arith.addf %362, %363 : vector<2x32xf32>
    %365 = math.tanh %364 : vector<2x32xf32>
    %366 = arith.mulf %361, %365 : vector<2x32xf32>
    %c8_111 = arith.constant 8 : index
    %c0_112 = arith.constant 0 : index
    %367 = vector.load %arg23[%c8_111, %c0_112] : memref<16x32xf32, #tpu.memory_space<vmem>>, vector<2x32xf32>
    tpu.vector_store %arg23[%c8_111, %c0_112], %366 {strides = array<i32>} : memref<16x32xf32, #tpu.memory_space<vmem>>, vector<2x32xf32>,
    %c6_113 = arith.constant 6 : index
    %c0_114 = arith.constant 0 : index
    %368 = vector.load %arg19[%c6_113, %c0_114] : memref<16x128xf32, #tpu.memory_space<vmem>>, vector<2x128xf32>
    %cst_115 = arith.constant dense<0.000000e+00> : vector<2x128xf32>
    %369 = tpu.matmul %366, %249, %cst_115 {dimension_numbers = #tpu.dot_dimension_numbers<[1], [0], [0], [1], [0, 0, 1, 1], [], []>} : vector<2x32xf32>, vector<32x128xf32>, vector<2x128xf32> -> vector<2x128xf32>
    %370 = arith.addf %368, %369 : vector<2x128xf32>
    %371 = vector.extract_strided_slice %370 {offsets = [0, 0], sizes = [2, 32], strides = [1, 1]} : vector<2x128xf32> to vector<2x32xf32>
    %372 = arith.negf %371 : vector<2x32xf32>
    %373 = math.exp %372 : vector<2x32xf32>
    %cst_116 = arith.constant 1.000000e+00 : f32
    %374 = vector.broadcast %cst_116 : f32 to vector<2x32xf32>
    %375 = arith.addf %374, %373 : vector<2x32xf32>
    %376 = arith.divf %374, %375 : vector<2x32xf32>
    %377 = vector.extract_strided_slice %370 {offsets = [0, 32], sizes = [2, 32], strides = [1, 1]} : vector<2x128xf32> to vector<2x32xf32>
    %378 = arith.negf %377 : vector<2x32xf32>
    %379 = math.exp %378 : vector<2x32xf32>
    %cst_117 = arith.constant 1.000000e+00 : f32
    %380 = vector.broadcast %cst_117 : f32 to vector<2x32xf32>
    %381 = arith.addf %380, %379 : vector<2x32xf32>
    %382 = arith.divf %380, %381 : vector<2x32xf32>
    %383 = vector.extract_strided_slice %370 {offsets = [0, 64], sizes = [2, 32], strides = [1, 1]} : vector<2x128xf32> to vector<2x32xf32>
    %384 = math.tanh %383 : vector<2x32xf32>
    %385 = vector.extract_strided_slice %370 {offsets = [0, 96], sizes = [2, 32], strides = [1, 1]} : vector<2x128xf32> to vector<2x32xf32>
    %386 = arith.negf %385 : vector<2x32xf32>
    %387 = math.exp %386 : vector<2x32xf32>
    %cst_118 = arith.constant 1.000000e+00 : f32
    %388 = vector.broadcast %cst_118 : f32 to vector<2x32xf32>
    %389 = arith.addf %388, %387 : vector<2x32xf32>
    %390 = arith.divf %388, %389 : vector<2x32xf32>
    %391 = arith.mulf %382, %364 : vector<2x32xf32>
    %392 = arith.mulf %376, %384 : vector<2x32xf32>
    %393 = arith.addf %391, %392 : vector<2x32xf32>
    %394 = math.tanh %393 : vector<2x32xf32>
    %395 = arith.mulf %390, %394 : vector<2x32xf32>
    %c6_119 = arith.constant 6 : index
    %c0_120 = arith.constant 0 : index
    %396 = vector.load %arg23[%c6_119, %c0_120] : memref<16x32xf32, #tpu.memory_space<vmem>>, vector<2x32xf32>
    tpu.vector_store %arg23[%c6_119, %c0_120], %395 {strides = array<i32>} : memref<16x32xf32, #tpu.memory_space<vmem>>, vector<2x32xf32>,
    %c4_121 = arith.constant 4 : index
    %c0_122 = arith.constant 0 : index
    %397 = vector.load %arg19[%c4_121, %c0_122] : memref<16x128xf32, #tpu.memory_space<vmem>>, vector<2x128xf32>
    %cst_123 = arith.constant dense<0.000000e+00> : vector<2x128xf32>
    %398 = tpu.matmul %395, %249, %cst_123 {dimension_numbers = #tpu.dot_dimension_numbers<[1], [0], [0], [1], [0, 0, 1, 1], [], []>} : vector<2x32xf32>, vector<32x128xf32>, vector<2x128xf32> -> vector<2x128xf32>
    %399 = arith.addf %397, %398 : vector<2x128xf32>
    %400 = vector.extract_strided_slice %399 {offsets = [0, 0], sizes = [2, 32], strides = [1, 1]} : vector<2x128xf32> to vector<2x32xf32>
    %401 = arith.negf %400 : vector<2x32xf32>
    %402 = math.exp %401 : vector<2x32xf32>
    %cst_124 = arith.constant 1.000000e+00 : f32
    %403 = vector.broadcast %cst_124 : f32 to vector<2x32xf32>
    %404 = arith.addf %403, %402 : vector<2x32xf32>
    %405 = arith.divf %403, %404 : vector<2x32xf32>
    %406 = vector.extract_strided_slice %399 {offsets = [0, 32], sizes = [2, 32], strides = [1, 1]} : vector<2x128xf32> to vector<2x32xf32>
    %407 = arith.negf %406 : vector<2x32xf32>
    %408 = math.exp %407 : vector<2x32xf32>
    %cst_125 = arith.constant 1.000000e+00 : f32
    %409 = vector.broadcast %cst_125 : f32 to vector<2x32xf32>
    %410 = arith.addf %409, %408 : vector<2x32xf32>
    %411 = arith.divf %409, %410 : vector<2x32xf32>
    %412 = vector.extract_strided_slice %399 {offsets = [0, 64], sizes = [2, 32], strides = [1, 1]} : vector<2x128xf32> to vector<2x32xf32>
    %413 = math.tanh %412 : vector<2x32xf32>
    %414 = vector.extract_strided_slice %399 {offsets = [0, 96], sizes = [2, 32], strides = [1, 1]} : vector<2x128xf32> to vector<2x32xf32>
    %415 = arith.negf %414 : vector<2x32xf32>
    %416 = math.exp %415 : vector<2x32xf32>
    %cst_126 = arith.constant 1.000000e+00 : f32
    %417 = vector.broadcast %cst_126 : f32 to vector<2x32xf32>
    %418 = arith.addf %417, %416 : vector<2x32xf32>
    %419 = arith.divf %417, %418 : vector<2x32xf32>
    %420 = arith.mulf %411, %393 : vector<2x32xf32>
    %421 = arith.mulf %405, %413 : vector<2x32xf32>
    %422 = arith.addf %420, %421 : vector<2x32xf32>
    %423 = math.tanh %422 : vector<2x32xf32>
    %424 = arith.mulf %419, %423 : vector<2x32xf32>
    %c4_127 = arith.constant 4 : index
    %c0_128 = arith.constant 0 : index
    %425 = vector.load %arg23[%c4_127, %c0_128] : memref<16x32xf32, #tpu.memory_space<vmem>>, vector<2x32xf32>
    tpu.vector_store %arg23[%c4_127, %c0_128], %424 {strides = array<i32>} : memref<16x32xf32, #tpu.memory_space<vmem>>, vector<2x32xf32>,
    %c2_129 = arith.constant 2 : index
    %c0_130 = arith.constant 0 : index
    %426 = vector.load %arg19[%c2_129, %c0_130] : memref<16x128xf32, #tpu.memory_space<vmem>>, vector<2x128xf32>
    %cst_131 = arith.constant dense<0.000000e+00> : vector<2x128xf32>
    %427 = tpu.matmul %424, %249, %cst_131 {dimension_numbers = #tpu.dot_dimension_numbers<[1], [0], [0], [1], [0, 0, 1, 1], [], []>} : vector<2x32xf32>, vector<32x128xf32>, vector<2x128xf32> -> vector<2x128xf32>
    %428 = arith.addf %426, %427 : vector<2x128xf32>
    %429 = vector.extract_strided_slice %428 {offsets = [0, 0], sizes = [2, 32], strides = [1, 1]} : vector<2x128xf32> to vector<2x32xf32>
    %430 = arith.negf %429 : vector<2x32xf32>
    %431 = math.exp %430 : vector<2x32xf32>
    %cst_132 = arith.constant 1.000000e+00 : f32
    %432 = vector.broadcast %cst_132 : f32 to vector<2x32xf32>
    %433 = arith.addf %432, %431 : vector<2x32xf32>
    %434 = arith.divf %432, %433 : vector<2x32xf32>
    %435 = vector.extract_strided_slice %428 {offsets = [0, 32], sizes = [2, 32], strides = [1, 1]} : vector<2x128xf32> to vector<2x32xf32>
    %436 = arith.negf %435 : vector<2x32xf32>
    %437 = math.exp %436 : vector<2x32xf32>
    %cst_133 = arith.constant 1.000000e+00 : f32
    %438 = vector.broadcast %cst_133 : f32 to vector<2x32xf32>
    %439 = arith.addf %438, %437 : vector<2x32xf32>
    %440 = arith.divf %438, %439 : vector<2x32xf32>
    %441 = vector.extract_strided_slice %428 {offsets = [0, 64], sizes = [2, 32], strides = [1, 1]} : vector<2x128xf32> to vector<2x32xf32>
    %442 = math.tanh %441 : vector<2x32xf32>
    %443 = vector.extract_strided_slice %428 {offsets = [0, 96], sizes = [2, 32], strides = [1, 1]} : vector<2x128xf32> to vector<2x32xf32>
    %444 = arith.negf %443 : vector<2x32xf32>
    %445 = math.exp %444 : vector<2x32xf32>
    %cst_134 = arith.constant 1.000000e+00 : f32
    %446 = vector.broadcast %cst_134 : f32 to vector<2x32xf32>
    %447 = arith.addf %446, %445 : vector<2x32xf32>
    %448 = arith.divf %446, %447 : vector<2x32xf32>
    %449 = arith.mulf %440, %422 : vector<2x32xf32>
    %450 = arith.mulf %434, %442 : vector<2x32xf32>
    %451 = arith.addf %449, %450 : vector<2x32xf32>
    %452 = math.tanh %451 : vector<2x32xf32>
    %453 = arith.mulf %448, %452 : vector<2x32xf32>
    %c2_135 = arith.constant 2 : index
    %c0_136 = arith.constant 0 : index
    %454 = vector.load %arg23[%c2_135, %c0_136] : memref<16x32xf32, #tpu.memory_space<vmem>>, vector<2x32xf32>
    tpu.vector_store %arg23[%c2_135, %c0_136], %453 {strides = array<i32>} : memref<16x32xf32, #tpu.memory_space<vmem>>, vector<2x32xf32>,
    %c0_137 = arith.constant 0 : index
    %c0_138 = arith.constant 0 : index
    %455 = vector.load %arg19[%c0_137, %c0_138] : memref<16x128xf32, #tpu.memory_space<vmem>>, vector<2x128xf32>
    %cst_139 = arith.constant dense<0.000000e+00> : vector<2x128xf32>
    %456 = tpu.matmul %453, %249, %cst_139 {dimension_numbers = #tpu.dot_dimension_numbers<[1], [0], [0], [1], [0, 0, 1, 1], [], []>} : vector<2x32xf32>, vector<32x128xf32>, vector<2x128xf32> -> vector<2x128xf32>
    %457 = arith.addf %455, %456 : vector<2x128xf32>
    %458 = vector.extract_strided_slice %457 {offsets = [0, 0], sizes = [2, 32], strides = [1, 1]} : vector<2x128xf32> to vector<2x32xf32>
    %459 = arith.negf %458 : vector<2x32xf32>
    %460 = math.exp %459 : vector<2x32xf32>
    %cst_140 = arith.constant 1.000000e+00 : f32
    %461 = vector.broadcast %cst_140 : f32 to vector<2x32xf32>
    %462 = arith.addf %461, %460 : vector<2x32xf32>
    %463 = arith.divf %461, %462 : vector<2x32xf32>
    %464 = vector.extract_strided_slice %457 {offsets = [0, 32], sizes = [2, 32], strides = [1, 1]} : vector<2x128xf32> to vector<2x32xf32>
    %465 = arith.negf %464 : vector<2x32xf32>
    %466 = math.exp %465 : vector<2x32xf32>
    %cst_141 = arith.constant 1.000000e+00 : f32
    %467 = vector.broadcast %cst_141 : f32 to vector<2x32xf32>
    %468 = arith.addf %467, %466 : vector<2x32xf32>
    %469 = arith.divf %467, %468 : vector<2x32xf32>
    %470 = vector.extract_strided_slice %457 {offsets = [0, 64], sizes = [2, 32], strides = [1, 1]} : vector<2x128xf32> to vector<2x32xf32>
    %471 = math.tanh %470 : vector<2x32xf32>
    %472 = vector.extract_strided_slice %457 {offsets = [0, 96], sizes = [2, 32], strides = [1, 1]} : vector<2x128xf32> to vector<2x32xf32>
    %473 = arith.negf %472 : vector<2x32xf32>
    %474 = math.exp %473 : vector<2x32xf32>
    %cst_142 = arith.constant 1.000000e+00 : f32
    %475 = vector.broadcast %cst_142 : f32 to vector<2x32xf32>
    %476 = arith.addf %475, %474 : vector<2x32xf32>
    %477 = arith.divf %475, %476 : vector<2x32xf32>
    %478 = arith.mulf %469, %451 : vector<2x32xf32>
    %479 = arith.mulf %463, %471 : vector<2x32xf32>
    %480 = arith.addf %478, %479 : vector<2x32xf32>
    %481 = math.tanh %480 : vector<2x32xf32>
    %482 = arith.mulf %477, %481 : vector<2x32xf32>
    %c0_143 = arith.constant 0 : index
    %c0_144 = arith.constant 0 : index
    %483 = vector.load %arg23[%c0_143, %c0_144] : memref<16x32xf32, #tpu.memory_space<vmem>>, vector<2x32xf32>
    tpu.vector_store %arg23[%c0_143, %c0_144], %482 {strides = array<i32>} : memref<16x32xf32, #tpu.memory_space<vmem>>, vector<2x32xf32>,
    %c0_145 = arith.constant 0 : index
    %c0_146 = arith.constant 0 : index
    %484 = vector.load %arg22[%c0_145, %c0_146] : memref<16x32xf32, #tpu.memory_space<vmem>>, vector<16x32xf32>
    %c0_147 = arith.constant 0 : index
    %c0_148 = arith.constant 0 : index
    %485 = vector.load %arg23[%c0_147, %c0_148] : memref<16x32xf32, #tpu.memory_space<vmem>>, vector<16x32xf32>
    %c0_149 = arith.constant 0 : index
    %c0_150 = arith.constant 0 : index
    %486 = vector.load %arg7[%c0_149, %c0_150] : memref<32x128xf32, #tpu.memory_space<vmem>>, vector<32x128xf32>
    %cst_151 = arith.constant dense<0.000000e+00> : vector<16x128xf32>
    %487 = tpu.matmul %484, %486, %cst_151 {dimension_numbers = #tpu.dot_dimension_numbers<[1], [0], [0], [1], [0, 0, 1, 1], [], []>} : vector<16x32xf32>, vector<32x128xf32>, vector<16x128xf32> -> vector<16x128xf32>
    %c0_152 = arith.constant 0 : index
    %c0_153 = arith.constant 0 : index
    %488 = vector.load %arg8[%c0_152, %c0_153] : memref<32x128xf32, #tpu.memory_space<vmem>>, vector<32x128xf32>
    %cst_154 = arith.constant dense<0.000000e+00> : vector<16x128xf32>
    %489 = tpu.matmul %485, %488, %cst_154 {dimension_numbers = #tpu.dot_dimension_numbers<[1], [0], [0], [1], [0, 0, 1, 1], [], []>} : vector<16x32xf32>, vector<32x128xf32>, vector<16x128xf32> -> vector<16x128xf32>
    %490 = arith.addf %487, %489 : vector<16x128xf32>
    %c0_155 = arith.constant 0 : index
    %c0_156 = arith.constant 0 : index
    %491 = vector.load %arg10[%c0_155, %c0_156] : memref<1x128xf32, #tpu.memory_space<vmem>>, vector<1x128xf32>
    %492 = vector.broadcast %491 : vector<1x128xf32> to vector<16x128xf32>
    %493 = arith.addf %490, %492 : vector<16x128xf32>
    %c0_157 = arith.constant 0 : index
    %c0_158 = arith.constant 0 : index
    %494 = vector.load %arg19[%c0_157, %c0_158] : memref<16x128xf32, #tpu.memory_space<vmem>>, vector<16x128xf32>
    tpu.vector_store %arg19[%c0_157, %c0_158], %493 {strides = array<i32>} : memref<16x128xf32, #tpu.memory_space<vmem>>, vector<16x128xf32>,
    %c0_159 = arith.constant 0 : index
    %c0_160 = arith.constant 0 : index
    %495 = vector.load %arg9[%c0_159, %c0_160] : memref<32x128xf32, #tpu.memory_space<vmem>>, vector<32x128xf32>
    %cst_161 = arith.constant 0.000000e+00 : f32
    %496 = vector.broadcast %cst_161 : f32 to vector<2x32xf32>
    %cst_162 = arith.constant 0.000000e+00 : f32
    %497 = vector.broadcast %cst_162 : f32 to vector<2x32xf32>
    %c0_163 = arith.constant 0 : index
    %c0_164 = arith.constant 0 : index
    %498 = vector.load %arg19[%c0_163, %c0_164] : memref<16x128xf32, #tpu.memory_space<vmem>>, vector<2x128xf32>
    %cst_165 = arith.constant dense<0.000000e+00> : vector<2x128xf32>
    %499 = tpu.matmul %496, %495, %cst_165 {dimension_numbers = #tpu.dot_dimension_numbers<[1], [0], [0], [1], [0, 0, 1, 1], [], []>} : vector<2x32xf32>, vector<32x128xf32>, vector<2x128xf32> -> vector<2x128xf32>
    %500 = arith.addf %498, %499 : vector<2x128xf32>
    %501 = vector.extract_strided_slice %500 {offsets = [0, 0], sizes = [2, 32], strides = [1, 1]} : vector<2x128xf32> to vector<2x32xf32>
    %502 = arith.negf %501 : vector<2x32xf32>
    %503 = math.exp %502 : vector<2x32xf32>
    %cst_166 = arith.constant 1.000000e+00 : f32
    %504 = vector.broadcast %cst_166 : f32 to vector<2x32xf32>
    %505 = arith.addf %504, %503 : vector<2x32xf32>
    %506 = arith.divf %504, %505 : vector<2x32xf32>
    %507 = vector.extract_strided_slice %500 {offsets = [0, 32], sizes = [2, 32], strides = [1, 1]} : vector<2x128xf32> to vector<2x32xf32>
    %508 = arith.negf %507 : vector<2x32xf32>
    %509 = math.exp %508 : vector<2x32xf32>
    %cst_167 = arith.constant 1.000000e+00 : f32
    %510 = vector.broadcast %cst_167 : f32 to vector<2x32xf32>
    %511 = arith.addf %510, %509 : vector<2x32xf32>
    %512 = arith.divf %510, %511 : vector<2x32xf32>
    %513 = vector.extract_strided_slice %500 {offsets = [0, 64], sizes = [2, 32], strides = [1, 1]} : vector<2x128xf32> to vector<2x32xf32>
    %514 = math.tanh %513 : vector<2x32xf32>
    %515 = vector.extract_strided_slice %500 {offsets = [0, 96], sizes = [2, 32], strides = [1, 1]} : vector<2x128xf32> to vector<2x32xf32>
    %516 = arith.negf %515 : vector<2x32xf32>
    %517 = math.exp %516 : vector<2x32xf32>
    %cst_168 = arith.constant 1.000000e+00 : f32
    %518 = vector.broadcast %cst_168 : f32 to vector<2x32xf32>
    %519 = arith.addf %518, %517 : vector<2x32xf32>
    %520 = arith.divf %518, %519 : vector<2x32xf32>
    %521 = arith.mulf %512, %497 : vector<2x32xf32>
    %522 = arith.mulf %506, %514 : vector<2x32xf32>
    %523 = arith.addf %521, %522 : vector<2x32xf32>
    %524 = math.tanh %523 : vector<2x32xf32>
    %525 = arith.mulf %520, %524 : vector<2x32xf32>
    %c0_169 = arith.constant 0 : index
    %c0_170 = arith.constant 0 : index
    %526 = vector.load %arg20[%c0_169, %c0_170] : memref<16x32xf32, #tpu.memory_space<vmem>>, vector<2x32xf32>
    tpu.vector_store %arg20[%c0_169, %c0_170], %525 {strides = array<i32>} : memref<16x32xf32, #tpu.memory_space<vmem>>, vector<2x32xf32>,
    %c2_171 = arith.constant 2 : index
    %c0_172 = arith.constant 0 : index
    %527 = vector.load %arg19[%c2_171, %c0_172] : memref<16x128xf32, #tpu.memory_space<vmem>>, vector<2x128xf32>
    %cst_173 = arith.constant dense<0.000000e+00> : vector<2x128xf32>
    %528 = tpu.matmul %525, %495, %cst_173 {dimension_numbers = #tpu.dot_dimension_numbers<[1], [0], [0], [1], [0, 0, 1, 1], [], []>} : vector<2x32xf32>, vector<32x128xf32>, vector<2x128xf32> -> vector<2x128xf32>
    %529 = arith.addf %527, %528 : vector<2x128xf32>
    %530 = vector.extract_strided_slice %529 {offsets = [0, 0], sizes = [2, 32], strides = [1, 1]} : vector<2x128xf32> to vector<2x32xf32>
    %531 = arith.negf %530 : vector<2x32xf32>
    %532 = math.exp %531 : vector<2x32xf32>
    %cst_174 = arith.constant 1.000000e+00 : f32
    %533 = vector.broadcast %cst_174 : f32 to vector<2x32xf32>
    %534 = arith.addf %533, %532 : vector<2x32xf32>
    %535 = arith.divf %533, %534 : vector<2x32xf32>
    %536 = vector.extract_strided_slice %529 {offsets = [0, 32], sizes = [2, 32], strides = [1, 1]} : vector<2x128xf32> to vector<2x32xf32>
    %537 = arith.negf %536 : vector<2x32xf32>
    %538 = math.exp %537 : vector<2x32xf32>
    %cst_175 = arith.constant 1.000000e+00 : f32
    %539 = vector.broadcast %cst_175 : f32 to vector<2x32xf32>
    %540 = arith.addf %539, %538 : vector<2x32xf32>
    %541 = arith.divf %539, %540 : vector<2x32xf32>
    %542 = vector.extract_strided_slice %529 {offsets = [0, 64], sizes = [2, 32], strides = [1, 1]} : vector<2x128xf32> to vector<2x32xf32>
    %543 = math.tanh %542 : vector<2x32xf32>
    %544 = vector.extract_strided_slice %529 {offsets = [0, 96], sizes = [2, 32], strides = [1, 1]} : vector<2x128xf32> to vector<2x32xf32>
    %545 = arith.negf %544 : vector<2x32xf32>
    %546 = math.exp %545 : vector<2x32xf32>
    %cst_176 = arith.constant 1.000000e+00 : f32
    %547 = vector.broadcast %cst_176 : f32 to vector<2x32xf32>
    %548 = arith.addf %547, %546 : vector<2x32xf32>
    %549 = arith.divf %547, %548 : vector<2x32xf32>
    %550 = arith.mulf %541, %523 : vector<2x32xf32>
    %551 = arith.mulf %535, %543 : vector<2x32xf32>
    %552 = arith.addf %550, %551 : vector<2x32xf32>
    %553 = math.tanh %552 : vector<2x32xf32>
    %554 = arith.mulf %549, %553 : vector<2x32xf32>
    %c2_177 = arith.constant 2 : index
    %c0_178 = arith.constant 0 : index
    %555 = vector.load %arg20[%c2_177, %c0_178] : memref<16x32xf32, #tpu.memory_space<vmem>>, vector<2x32xf32>
    tpu.vector_store %arg20[%c2_177, %c0_178], %554 {strides = array<i32>} : memref<16x32xf32, #tpu.memory_space<vmem>>, vector<2x32xf32>,
    %c4_179 = arith.constant 4 : index
    %c0_180 = arith.constant 0 : index
    %556 = vector.load %arg19[%c4_179, %c0_180] : memref<16x128xf32, #tpu.memory_space<vmem>>, vector<2x128xf32>
    %cst_181 = arith.constant dense<0.000000e+00> : vector<2x128xf32>
    %557 = tpu.matmul %554, %495, %cst_181 {dimension_numbers = #tpu.dot_dimension_numbers<[1], [0], [0], [1], [0, 0, 1, 1], [], []>} : vector<2x32xf32>, vector<32x128xf32>, vector<2x128xf32> -> vector<2x128xf32>
    %558 = arith.addf %556, %557 : vector<2x128xf32>
    %559 = vector.extract_strided_slice %558 {offsets = [0, 0], sizes = [2, 32], strides = [1, 1]} : vector<2x128xf32> to vector<2x32xf32>
    %560 = arith.negf %559 : vector<2x32xf32>
    %561 = math.exp %560 : vector<2x32xf32>
    %cst_182 = arith.constant 1.000000e+00 : f32
    %562 = vector.broadcast %cst_182 : f32 to vector<2x32xf32>
    %563 = arith.addf %562, %561 : vector<2x32xf32>
    %564 = arith.divf %562, %563 : vector<2x32xf32>
    %565 = vector.extract_strided_slice %558 {offsets = [0, 32], sizes = [2, 32], strides = [1, 1]} : vector<2x128xf32> to vector<2x32xf32>
    %566 = arith.negf %565 : vector<2x32xf32>
    %567 = math.exp %566 : vector<2x32xf32>
    %cst_183 = arith.constant 1.000000e+00 : f32
    %568 = vector.broadcast %cst_183 : f32 to vector<2x32xf32>
    %569 = arith.addf %568, %567 : vector<2x32xf32>
    %570 = arith.divf %568, %569 : vector<2x32xf32>
    %571 = vector.extract_strided_slice %558 {offsets = [0, 64], sizes = [2, 32], strides = [1, 1]} : vector<2x128xf32> to vector<2x32xf32>
    %572 = math.tanh %571 : vector<2x32xf32>
    %573 = vector.extract_strided_slice %558 {offsets = [0, 96], sizes = [2, 32], strides = [1, 1]} : vector<2x128xf32> to vector<2x32xf32>
    %574 = arith.negf %573 : vector<2x32xf32>
    %575 = math.exp %574 : vector<2x32xf32>
    %cst_184 = arith.constant 1.000000e+00 : f32
    %576 = vector.broadcast %cst_184 : f32 to vector<2x32xf32>
    %577 = arith.addf %576, %575 : vector<2x32xf32>
    %578 = arith.divf %576, %577 : vector<2x32xf32>
    %579 = arith.mulf %570, %552 : vector<2x32xf32>
    %580 = arith.mulf %564, %572 : vector<2x32xf32>
    %581 = arith.addf %579, %580 : vector<2x32xf32>
    %582 = math.tanh %581 : vector<2x32xf32>
    %583 = arith.mulf %578, %582 : vector<2x32xf32>
    %c4_185 = arith.constant 4 : index
    %c0_186 = arith.constant 0 : index
    %584 = vector.load %arg20[%c4_185, %c0_186] : memref<16x32xf32, #tpu.memory_space<vmem>>, vector<2x32xf32>
    tpu.vector_store %arg20[%c4_185, %c0_186], %583 {strides = array<i32>} : memref<16x32xf32, #tpu.memory_space<vmem>>, vector<2x32xf32>,
    %c6_187 = arith.constant 6 : index
    %c0_188 = arith.constant 0 : index
    %585 = vector.load %arg19[%c6_187, %c0_188] : memref<16x128xf32, #tpu.memory_space<vmem>>, vector<2x128xf32>
    %cst_189 = arith.constant dense<0.000000e+00> : vector<2x128xf32>
    %586 = tpu.matmul %583, %495, %cst_189 {dimension_numbers = #tpu.dot_dimension_numbers<[1], [0], [0], [1], [0, 0, 1, 1], [], []>} : vector<2x32xf32>, vector<32x128xf32>, vector<2x128xf32> -> vector<2x128xf32>
    %587 = arith.addf %585, %586 : vector<2x128xf32>
    %588 = vector.extract_strided_slice %587 {offsets = [0, 0], sizes = [2, 32], strides = [1, 1]} : vector<2x128xf32> to vector<2x32xf32>
    %589 = arith.negf %588 : vector<2x32xf32>
    %590 = math.exp %589 : vector<2x32xf32>
    %cst_190 = arith.constant 1.000000e+00 : f32
    %591 = vector.broadcast %cst_190 : f32 to vector<2x32xf32>
    %592 = arith.addf %591, %590 : vector<2x32xf32>
    %593 = arith.divf %591, %592 : vector<2x32xf32>
    %594 = vector.extract_strided_slice %587 {offsets = [0, 32], sizes = [2, 32], strides = [1, 1]} : vector<2x128xf32> to vector<2x32xf32>
    %595 = arith.negf %594 : vector<2x32xf32>
    %596 = math.exp %595 : vector<2x32xf32>
    %cst_191 = arith.constant 1.000000e+00 : f32
    %597 = vector.broadcast %cst_191 : f32 to vector<2x32xf32>
    %598 = arith.addf %597, %596 : vector<2x32xf32>
    %599 = arith.divf %597, %598 : vector<2x32xf32>
    %600 = vector.extract_strided_slice %587 {offsets = [0, 64], sizes = [2, 32], strides = [1, 1]} : vector<2x128xf32> to vector<2x32xf32>
    %601 = math.tanh %600 : vector<2x32xf32>
    %602 = vector.extract_strided_slice %587 {offsets = [0, 96], sizes = [2, 32], strides = [1, 1]} : vector<2x128xf32> to vector<2x32xf32>
    %603 = arith.negf %602 : vector<2x32xf32>
    %604 = math.exp %603 : vector<2x32xf32>
    %cst_192 = arith.constant 1.000000e+00 : f32
    %605 = vector.broadcast %cst_192 : f32 to vector<2x32xf32>
    %606 = arith.addf %605, %604 : vector<2x32xf32>
    %607 = arith.divf %605, %606 : vector<2x32xf32>
    %608 = arith.mulf %599, %581 : vector<2x32xf32>
    %609 = arith.mulf %593, %601 : vector<2x32xf32>
    %610 = arith.addf %608, %609 : vector<2x32xf32>
    %611 = math.tanh %610 : vector<2x32xf32>
    %612 = arith.mulf %607, %611 : vector<2x32xf32>
    %c6_193 = arith.constant 6 : index
    %c0_194 = arith.constant 0 : index
    %613 = vector.load %arg20[%c6_193, %c0_194] : memref<16x32xf32, #tpu.memory_space<vmem>>, vector<2x32xf32>
    tpu.vector_store %arg20[%c6_193, %c0_194], %612 {strides = array<i32>} : memref<16x32xf32, #tpu.memory_space<vmem>>, vector<2x32xf32>,
    %c8_195 = arith.constant 8 : index
    %c0_196 = arith.constant 0 : index
    %614 = vector.load %arg19[%c8_195, %c0_196] : memref<16x128xf32, #tpu.memory_space<vmem>>, vector<2x128xf32>
    %cst_197 = arith.constant dense<0.000000e+00> : vector<2x128xf32>
    %615 = tpu.matmul %612, %495, %cst_197 {dimension_numbers = #tpu.dot_dimension_numbers<[1], [0], [0], [1], [0, 0, 1, 1], [], []>} : vector<2x32xf32>, vector<32x128xf32>, vector<2x128xf32> -> vector<2x128xf32>
    %616 = arith.addf %614, %615 : vector<2x128xf32>
    %617 = vector.extract_strided_slice %616 {offsets = [0, 0], sizes = [2, 32], strides = [1, 1]} : vector<2x128xf32> to vector<2x32xf32>
    %618 = arith.negf %617 : vector<2x32xf32>
    %619 = math.exp %618 : vector<2x32xf32>
    %cst_198 = arith.constant 1.000000e+00 : f32
    %620 = vector.broadcast %cst_198 : f32 to vector<2x32xf32>
    %621 = arith.addf %620, %619 : vector<2x32xf32>
    %622 = arith.divf %620, %621 : vector<2x32xf32>
    %623 = vector.extract_strided_slice %616 {offsets = [0, 32], sizes = [2, 32], strides = [1, 1]} : vector<2x128xf32> to vector<2x32xf32>
    %624 = arith.negf %623 : vector<2x32xf32>
    %625 = math.exp %624 : vector<2x32xf32>
    %cst_199 = arith.constant 1.000000e+00 : f32
    %626 = vector.broadcast %cst_199 : f32 to vector<2x32xf32>
    %627 = arith.addf %626, %625 : vector<2x32xf32>
    %628 = arith.divf %626, %627 : vector<2x32xf32>
    %629 = vector.extract_strided_slice %616 {offsets = [0, 64], sizes = [2, 32], strides = [1, 1]} : vector<2x128xf32> to vector<2x32xf32>
    %630 = math.tanh %629 : vector<2x32xf32>
    %631 = vector.extract_strided_slice %616 {offsets = [0, 96], sizes = [2, 32], strides = [1, 1]} : vector<2x128xf32> to vector<2x32xf32>
    %632 = arith.negf %631 : vector<2x32xf32>
    %633 = math.exp %632 : vector<2x32xf32>
    %cst_200 = arith.constant 1.000000e+00 : f32
    %634 = vector.broadcast %cst_200 : f32 to vector<2x32xf32>
    %635 = arith.addf %634, %633 : vector<2x32xf32>
    %636 = arith.divf %634, %635 : vector<2x32xf32>
    %637 = arith.mulf %628, %610 : vector<2x32xf32>
    %638 = arith.mulf %622, %630 : vector<2x32xf32>
    %639 = arith.addf %637, %638 : vector<2x32xf32>
    %640 = math.tanh %639 : vector<2x32xf32>
    %641 = arith.mulf %636, %640 : vector<2x32xf32>
    %c8_201 = arith.constant 8 : index
    %c0_202 = arith.constant 0 : index
    %642 = vector.load %arg20[%c8_201, %c0_202] : memref<16x32xf32, #tpu.memory_space<vmem>>, vector<2x32xf32>
    tpu.vector_store %arg20[%c8_201, %c0_202], %641 {strides = array<i32>} : memref<16x32xf32, #tpu.memory_space<vmem>>, vector<2x32xf32>,
    %c10_203 = arith.constant 10 : index
    %c0_204 = arith.constant 0 : index
    %643 = vector.load %arg19[%c10_203, %c0_204] : memref<16x128xf32, #tpu.memory_space<vmem>>, vector<2x128xf32>
    %cst_205 = arith.constant dense<0.000000e+00> : vector<2x128xf32>
    %644 = tpu.matmul %641, %495, %cst_205 {dimension_numbers = #tpu.dot_dimension_numbers<[1], [0], [0], [1], [0, 0, 1, 1], [], []>} : vector<2x32xf32>, vector<32x128xf32>, vector<2x128xf32> -> vector<2x128xf32>
    %645 = arith.addf %643, %644 : vector<2x128xf32>
    %646 = vector.extract_strided_slice %645 {offsets = [0, 0], sizes = [2, 32], strides = [1, 1]} : vector<2x128xf32> to vector<2x32xf32>
    %647 = arith.negf %646 : vector<2x32xf32>
    %648 = math.exp %647 : vector<2x32xf32>
    %cst_206 = arith.constant 1.000000e+00 : f32
    %649 = vector.broadcast %cst_206 : f32 to vector<2x32xf32>
    %650 = arith.addf %649, %648 : vector<2x32xf32>
    %651 = arith.divf %649, %650 : vector<2x32xf32>
    %652 = vector.extract_strided_slice %645 {offsets = [0, 32], sizes = [2, 32], strides = [1, 1]} : vector<2x128xf32> to vector<2x32xf32>
    %653 = arith.negf %652 : vector<2x32xf32>
    %654 = math.exp %653 : vector<2x32xf32>
    %cst_207 = arith.constant 1.000000e+00 : f32
    %655 = vector.broadcast %cst_207 : f32 to vector<2x32xf32>
    %656 = arith.addf %655, %654 : vector<2x32xf32>
    %657 = arith.divf %655, %656 : vector<2x32xf32>
    %658 = vector.extract_strided_slice %645 {offsets = [0, 64], sizes = [2, 32], strides = [1, 1]} : vector<2x128xf32> to vector<2x32xf32>
    %659 = math.tanh %658 : vector<2x32xf32>
    %660 = vector.extract_strided_slice %645 {offsets = [0, 96], sizes = [2, 32], strides = [1, 1]} : vector<2x128xf32> to vector<2x32xf32>
    %661 = arith.negf %660 : vector<2x32xf32>
    %662 = math.exp %661 : vector<2x32xf32>
    %cst_208 = arith.constant 1.000000e+00 : f32
    %663 = vector.broadcast %cst_208 : f32 to vector<2x32xf32>
    %664 = arith.addf %663, %662 : vector<2x32xf32>
    %665 = arith.divf %663, %664 : vector<2x32xf32>
    %666 = arith.mulf %657, %639 : vector<2x32xf32>
    %667 = arith.mulf %651, %659 : vector<2x32xf32>
    %668 = arith.addf %666, %667 : vector<2x32xf32>
    %669 = math.tanh %668 : vector<2x32xf32>
    %670 = arith.mulf %665, %669 : vector<2x32xf32>
    %c10_209 = arith.constant 10 : index
    %c0_210 = arith.constant 0 : index
    %671 = vector.load %arg20[%c10_209, %c0_210] : memref<16x32xf32, #tpu.memory_space<vmem>>, vector<2x32xf32>
    tpu.vector_store %arg20[%c10_209, %c0_210], %670 {strides = array<i32>} : memref<16x32xf32, #tpu.memory_space<vmem>>, vector<2x32xf32>,
    %c12_211 = arith.constant 12 : index
    %c0_212 = arith.constant 0 : index
    %672 = vector.load %arg19[%c12_211, %c0_212] : memref<16x128xf32, #tpu.memory_space<vmem>>, vector<2x128xf32>
    %cst_213 = arith.constant dense<0.000000e+00> : vector<2x128xf32>
    %673 = tpu.matmul %670, %495, %cst_213 {dimension_numbers = #tpu.dot_dimension_numbers<[1], [0], [0], [1], [0, 0, 1, 1], [], []>} : vector<2x32xf32>, vector<32x128xf32>, vector<2x128xf32> -> vector<2x128xf32>
    %674 = arith.addf %672, %673 : vector<2x128xf32>
    %675 = vector.extract_strided_slice %674 {offsets = [0, 0], sizes = [2, 32], strides = [1, 1]} : vector<2x128xf32> to vector<2x32xf32>
    %676 = arith.negf %675 : vector<2x32xf32>
    %677 = math.exp %676 : vector<2x32xf32>
    %cst_214 = arith.constant 1.000000e+00 : f32
    %678 = vector.broadcast %cst_214 : f32 to vector<2x32xf32>
    %679 = arith.addf %678, %677 : vector<2x32xf32>
    %680 = arith.divf %678, %679 : vector<2x32xf32>
    %681 = vector.extract_strided_slice %674 {offsets = [0, 32], sizes = [2, 32], strides = [1, 1]} : vector<2x128xf32> to vector<2x32xf32>
    %682 = arith.negf %681 : vector<2x32xf32>
    %683 = math.exp %682 : vector<2x32xf32>
    %cst_215 = arith.constant 1.000000e+00 : f32
    %684 = vector.broadcast %cst_215 : f32 to vector<2x32xf32>
    %685 = arith.addf %684, %683 : vector<2x32xf32>
    %686 = arith.divf %684, %685 : vector<2x32xf32>
    %687 = vector.extract_strided_slice %674 {offsets = [0, 64], sizes = [2, 32], strides = [1, 1]} : vector<2x128xf32> to vector<2x32xf32>
    %688 = math.tanh %687 : vector<2x32xf32>
    %689 = vector.extract_strided_slice %674 {offsets = [0, 96], sizes = [2, 32], strides = [1, 1]} : vector<2x128xf32> to vector<2x32xf32>
    %690 = arith.negf %689 : vector<2x32xf32>
    %691 = math.exp %690 : vector<2x32xf32>
    %cst_216 = arith.constant 1.000000e+00 : f32
    %692 = vector.broadcast %cst_216 : f32 to vector<2x32xf32>
    %693 = arith.addf %692, %691 : vector<2x32xf32>
    %694 = arith.divf %692, %693 : vector<2x32xf32>
    %695 = arith.mulf %686, %668 : vector<2x32xf32>
    %696 = arith.mulf %680, %688 : vector<2x32xf32>
    %697 = arith.addf %695, %696 : vector<2x32xf32>
    %698 = math.tanh %697 : vector<2x32xf32>
    %699 = arith.mulf %694, %698 : vector<2x32xf32>
    %c12_217 = arith.constant 12 : index
    %c0_218 = arith.constant 0 : index
    %700 = vector.load %arg20[%c12_217, %c0_218] : memref<16x32xf32, #tpu.memory_space<vmem>>, vector<2x32xf32>
    tpu.vector_store %arg20[%c12_217, %c0_218], %699 {strides = array<i32>} : memref<16x32xf32, #tpu.memory_space<vmem>>, vector<2x32xf32>,
    %c14_219 = arith.constant 14 : index
    %c0_220 = arith.constant 0 : index
    %701 = vector.load %arg19[%c14_219, %c0_220] : memref<16x128xf32, #tpu.memory_space<vmem>>, vector<2x128xf32>
    %cst_221 = arith.constant dense<0.000000e+00> : vector<2x128xf32>
    %702 = tpu.matmul %699, %495, %cst_221 {dimension_numbers = #tpu.dot_dimension_numbers<[1], [0], [0], [1], [0, 0, 1, 1], [], []>} : vector<2x32xf32>, vector<32x128xf32>, vector<2x128xf32> -> vector<2x128xf32>
    %703 = arith.addf %701, %702 : vector<2x128xf32>
    %704 = vector.extract_strided_slice %703 {offsets = [0, 0], sizes = [2, 32], strides = [1, 1]} : vector<2x128xf32> to vector<2x32xf32>
    %705 = arith.negf %704 : vector<2x32xf32>
    %706 = math.exp %705 : vector<2x32xf32>
    %cst_222 = arith.constant 1.000000e+00 : f32
    %707 = vector.broadcast %cst_222 : f32 to vector<2x32xf32>
    %708 = arith.addf %707, %706 : vector<2x32xf32>
    %709 = arith.divf %707, %708 : vector<2x32xf32>
    %710 = vector.extract_strided_slice %703 {offsets = [0, 32], sizes = [2, 32], strides = [1, 1]} : vector<2x128xf32> to vector<2x32xf32>
    %711 = arith.negf %710 : vector<2x32xf32>
    %712 = math.exp %711 : vector<2x32xf32>
    %cst_223 = arith.constant 1.000000e+00 : f32
    %713 = vector.broadcast %cst_223 : f32 to vector<2x32xf32>
    %714 = arith.addf %713, %712 : vector<2x32xf32>
    %715 = arith.divf %713, %714 : vector<2x32xf32>
    %716 = vector.extract_strided_slice %703 {offsets = [0, 64], sizes = [2, 32], strides = [1, 1]} : vector<2x128xf32> to vector<2x32xf32>
    %717 = math.tanh %716 : vector<2x32xf32>
    %718 = vector.extract_strided_slice %703 {offsets = [0, 96], sizes = [2, 32], strides = [1, 1]} : vector<2x128xf32> to vector<2x32xf32>
    %719 = arith.negf %718 : vector<2x32xf32>
    %720 = math.exp %719 : vector<2x32xf32>
    %cst_224 = arith.constant 1.000000e+00 : f32
    %721 = vector.broadcast %cst_224 : f32 to vector<2x32xf32>
    %722 = arith.addf %721, %720 : vector<2x32xf32>
    %723 = arith.divf %721, %722 : vector<2x32xf32>
    %724 = arith.mulf %715, %697 : vector<2x32xf32>
    %725 = arith.mulf %709, %717 : vector<2x32xf32>
    %726 = arith.addf %724, %725 : vector<2x32xf32>
    %727 = math.tanh %726 : vector<2x32xf32>
    %728 = arith.mulf %723, %727 : vector<2x32xf32>
    %c14_225 = arith.constant 14 : index
    %c0_226 = arith.constant 0 : index
    %729 = vector.load %arg20[%c14_225, %c0_226] : memref<16x32xf32, #tpu.memory_space<vmem>>, vector<2x32xf32>
    tpu.vector_store %arg20[%c14_225, %c0_226], %728 {strides = array<i32>} : memref<16x32xf32, #tpu.memory_space<vmem>>, vector<2x32xf32>,
    %c0_227 = arith.constant 0 : index
    %c0_228 = arith.constant 0 : index
    %730 = vector.load %arg22[%c0_227, %c0_228] : memref<16x32xf32, #tpu.memory_space<vmem>>, vector<16x32xf32>
    %c0_229 = arith.constant 0 : index
    %c0_230 = arith.constant 0 : index
    %731 = vector.load %arg23[%c0_229, %c0_230] : memref<16x32xf32, #tpu.memory_space<vmem>>, vector<16x32xf32>
    %c0_231 = arith.constant 0 : index
    %c0_232 = arith.constant 0 : index
    %732 = vector.load %arg11[%c0_231, %c0_232] : memref<32x128xf32, #tpu.memory_space<vmem>>, vector<32x128xf32>
    %cst_233 = arith.constant dense<0.000000e+00> : vector<16x128xf32>
    %733 = tpu.matmul %730, %732, %cst_233 {dimension_numbers = #tpu.dot_dimension_numbers<[1], [0], [0], [1], [0, 0, 1, 1], [], []>} : vector<16x32xf32>, vector<32x128xf32>, vector<16x128xf32> -> vector<16x128xf32>
    %c0_234 = arith.constant 0 : index
    %c0_235 = arith.constant 0 : index
    %734 = vector.load %arg12[%c0_234, %c0_235] : memref<32x128xf32, #tpu.memory_space<vmem>>, vector<32x128xf32>
    %cst_236 = arith.constant dense<0.000000e+00> : vector<16x128xf32>
    %735 = tpu.matmul %731, %734, %cst_236 {dimension_numbers = #tpu.dot_dimension_numbers<[1], [0], [0], [1], [0, 0, 1, 1], [], []>} : vector<16x32xf32>, vector<32x128xf32>, vector<16x128xf32> -> vector<16x128xf32>
    %736 = arith.addf %733, %735 : vector<16x128xf32>
    %c0_237 = arith.constant 0 : index
    %c0_238 = arith.constant 0 : index
    %737 = vector.load %arg14[%c0_237, %c0_238] : memref<1x128xf32, #tpu.memory_space<vmem>>, vector<1x128xf32>
    %738 = vector.broadcast %737 : vector<1x128xf32> to vector<16x128xf32>
    %739 = arith.addf %736, %738 : vector<16x128xf32>
    %c0_239 = arith.constant 0 : index
    %c0_240 = arith.constant 0 : index
    %740 = vector.load %arg19[%c0_239, %c0_240] : memref<16x128xf32, #tpu.memory_space<vmem>>, vector<16x128xf32>
    tpu.vector_store %arg19[%c0_239, %c0_240], %739 {strides = array<i32>} : memref<16x128xf32, #tpu.memory_space<vmem>>, vector<16x128xf32>,
    %c0_241 = arith.constant 0 : index
    %c0_242 = arith.constant 0 : index
    %741 = vector.load %arg13[%c0_241, %c0_242] : memref<32x128xf32, #tpu.memory_space<vmem>>, vector<32x128xf32>
    %cst_243 = arith.constant 0.000000e+00 : f32
    %742 = vector.broadcast %cst_243 : f32 to vector<2x32xf32>
    %cst_244 = arith.constant 0.000000e+00 : f32
    %743 = vector.broadcast %cst_244 : f32 to vector<2x32xf32>
    %c14_245 = arith.constant 14 : index
    %c0_246 = arith.constant 0 : index
    %744 = vector.load %arg19[%c14_245, %c0_246] : memref<16x128xf32, #tpu.memory_space<vmem>>, vector<2x128xf32>
    %cst_247 = arith.constant dense<0.000000e+00> : vector<2x128xf32>
    %745 = tpu.matmul %742, %741, %cst_247 {dimension_numbers = #tpu.dot_dimension_numbers<[1], [0], [0], [1], [0, 0, 1, 1], [], []>} : vector<2x32xf32>, vector<32x128xf32>, vector<2x128xf32> -> vector<2x128xf32>
    %746 = arith.addf %744, %745 : vector<2x128xf32>
    %747 = vector.extract_strided_slice %746 {offsets = [0, 0], sizes = [2, 32], strides = [1, 1]} : vector<2x128xf32> to vector<2x32xf32>
    %748 = arith.negf %747 : vector<2x32xf32>
    %749 = math.exp %748 : vector<2x32xf32>
    %cst_248 = arith.constant 1.000000e+00 : f32
    %750 = vector.broadcast %cst_248 : f32 to vector<2x32xf32>
    %751 = arith.addf %750, %749 : vector<2x32xf32>
    %752 = arith.divf %750, %751 : vector<2x32xf32>
    %753 = vector.extract_strided_slice %746 {offsets = [0, 32], sizes = [2, 32], strides = [1, 1]} : vector<2x128xf32> to vector<2x32xf32>
    %754 = arith.negf %753 : vector<2x32xf32>
    %755 = math.exp %754 : vector<2x32xf32>
    %cst_249 = arith.constant 1.000000e+00 : f32
    %756 = vector.broadcast %cst_249 : f32 to vector<2x32xf32>
    %757 = arith.addf %756, %755 : vector<2x32xf32>
    %758 = arith.divf %756, %757 : vector<2x32xf32>
    %759 = vector.extract_strided_slice %746 {offsets = [0, 64], sizes = [2, 32], strides = [1, 1]} : vector<2x128xf32> to vector<2x32xf32>
    %760 = math.tanh %759 : vector<2x32xf32>
    %761 = vector.extract_strided_slice %746 {offsets = [0, 96], sizes = [2, 32], strides = [1, 1]} : vector<2x128xf32> to vector<2x32xf32>
    %762 = arith.negf %761 : vector<2x32xf32>
    %763 = math.exp %762 : vector<2x32xf32>
    %cst_250 = arith.constant 1.000000e+00 : f32
    %764 = vector.broadcast %cst_250 : f32 to vector<2x32xf32>
    %765 = arith.addf %764, %763 : vector<2x32xf32>
    %766 = arith.divf %764, %765 : vector<2x32xf32>
    %767 = arith.mulf %758, %743 : vector<2x32xf32>
    %768 = arith.mulf %752, %760 : vector<2x32xf32>
    %769 = arith.addf %767, %768 : vector<2x32xf32>
    %770 = math.tanh %769 : vector<2x32xf32>
    %771 = arith.mulf %766, %770 : vector<2x32xf32>
    %c14_251 = arith.constant 14 : index
    %c0_252 = arith.constant 0 : index
    %772 = vector.load %arg21[%c14_251, %c0_252] : memref<16x32xf32, #tpu.memory_space<vmem>>, vector<2x32xf32>
    tpu.vector_store %arg21[%c14_251, %c0_252], %771 {strides = array<i32>} : memref<16x32xf32, #tpu.memory_space<vmem>>, vector<2x32xf32>,
    %c12_253 = arith.constant 12 : index
    %c0_254 = arith.constant 0 : index
    %773 = vector.load %arg19[%c12_253, %c0_254] : memref<16x128xf32, #tpu.memory_space<vmem>>, vector<2x128xf32>
    %cst_255 = arith.constant dense<0.000000e+00> : vector<2x128xf32>
    %774 = tpu.matmul %771, %741, %cst_255 {dimension_numbers = #tpu.dot_dimension_numbers<[1], [0], [0], [1], [0, 0, 1, 1], [], []>} : vector<2x32xf32>, vector<32x128xf32>, vector<2x128xf32> -> vector<2x128xf32>
    %775 = arith.addf %773, %774 : vector<2x128xf32>
    %776 = vector.extract_strided_slice %775 {offsets = [0, 0], sizes = [2, 32], strides = [1, 1]} : vector<2x128xf32> to vector<2x32xf32>
    %777 = arith.negf %776 : vector<2x32xf32>
    %778 = math.exp %777 : vector<2x32xf32>
    %cst_256 = arith.constant 1.000000e+00 : f32
    %779 = vector.broadcast %cst_256 : f32 to vector<2x32xf32>
    %780 = arith.addf %779, %778 : vector<2x32xf32>
    %781 = arith.divf %779, %780 : vector<2x32xf32>
    %782 = vector.extract_strided_slice %775 {offsets = [0, 32], sizes = [2, 32], strides = [1, 1]} : vector<2x128xf32> to vector<2x32xf32>
    %783 = arith.negf %782 : vector<2x32xf32>
    %784 = math.exp %783 : vector<2x32xf32>
    %cst_257 = arith.constant 1.000000e+00 : f32
    %785 = vector.broadcast %cst_257 : f32 to vector<2x32xf32>
    %786 = arith.addf %785, %784 : vector<2x32xf32>
    %787 = arith.divf %785, %786 : vector<2x32xf32>
    %788 = vector.extract_strided_slice %775 {offsets = [0, 64], sizes = [2, 32], strides = [1, 1]} : vector<2x128xf32> to vector<2x32xf32>
    %789 = math.tanh %788 : vector<2x32xf32>
    %790 = vector.extract_strided_slice %775 {offsets = [0, 96], sizes = [2, 32], strides = [1, 1]} : vector<2x128xf32> to vector<2x32xf32>
    %791 = arith.negf %790 : vector<2x32xf32>
    %792 = math.exp %791 : vector<2x32xf32>
    %cst_258 = arith.constant 1.000000e+00 : f32
    %793 = vector.broadcast %cst_258 : f32 to vector<2x32xf32>
    %794 = arith.addf %793, %792 : vector<2x32xf32>
    %795 = arith.divf %793, %794 : vector<2x32xf32>
    %796 = arith.mulf %787, %769 : vector<2x32xf32>
    %797 = arith.mulf %781, %789 : vector<2x32xf32>
    %798 = arith.addf %796, %797 : vector<2x32xf32>
    %799 = math.tanh %798 : vector<2x32xf32>
    %800 = arith.mulf %795, %799 : vector<2x32xf32>
    %c12_259 = arith.constant 12 : index
    %c0_260 = arith.constant 0 : index
    %801 = vector.load %arg21[%c12_259, %c0_260] : memref<16x32xf32, #tpu.memory_space<vmem>>, vector<2x32xf32>
    tpu.vector_store %arg21[%c12_259, %c0_260], %800 {strides = array<i32>} : memref<16x32xf32, #tpu.memory_space<vmem>>, vector<2x32xf32>,
    %c10_261 = arith.constant 10 : index
    %c0_262 = arith.constant 0 : index
    %802 = vector.load %arg19[%c10_261, %c0_262] : memref<16x128xf32, #tpu.memory_space<vmem>>, vector<2x128xf32>
    %cst_263 = arith.constant dense<0.000000e+00> : vector<2x128xf32>
    %803 = tpu.matmul %800, %741, %cst_263 {dimension_numbers = #tpu.dot_dimension_numbers<[1], [0], [0], [1], [0, 0, 1, 1], [], []>} : vector<2x32xf32>, vector<32x128xf32>, vector<2x128xf32> -> vector<2x128xf32>
    %804 = arith.addf %802, %803 : vector<2x128xf32>
    %805 = vector.extract_strided_slice %804 {offsets = [0, 0], sizes = [2, 32], strides = [1, 1]} : vector<2x128xf32> to vector<2x32xf32>
    %806 = arith.negf %805 : vector<2x32xf32>
    %807 = math.exp %806 : vector<2x32xf32>
    %cst_264 = arith.constant 1.000000e+00 : f32
    %808 = vector.broadcast %cst_264 : f32 to vector<2x32xf32>
    %809 = arith.addf %808, %807 : vector<2x32xf32>
    %810 = arith.divf %808, %809 : vector<2x32xf32>
    %811 = vector.extract_strided_slice %804 {offsets = [0, 32], sizes = [2, 32], strides = [1, 1]} : vector<2x128xf32> to vector<2x32xf32>
    %812 = arith.negf %811 : vector<2x32xf32>
    %813 = math.exp %812 : vector<2x32xf32>
    %cst_265 = arith.constant 1.000000e+00 : f32
    %814 = vector.broadcast %cst_265 : f32 to vector<2x32xf32>
    %815 = arith.addf %814, %813 : vector<2x32xf32>
    %816 = arith.divf %814, %815 : vector<2x32xf32>
    %817 = vector.extract_strided_slice %804 {offsets = [0, 64], sizes = [2, 32], strides = [1, 1]} : vector<2x128xf32> to vector<2x32xf32>
    %818 = math.tanh %817 : vector<2x32xf32>
    %819 = vector.extract_strided_slice %804 {offsets = [0, 96], sizes = [2, 32], strides = [1, 1]} : vector<2x128xf32> to vector<2x32xf32>
    %820 = arith.negf %819 : vector<2x32xf32>
    %821 = math.exp %820 : vector<2x32xf32>
    %cst_266 = arith.constant 1.000000e+00 : f32
    %822 = vector.broadcast %cst_266 : f32 to vector<2x32xf32>
    %823 = arith.addf %822, %821 : vector<2x32xf32>
    %824 = arith.divf %822, %823 : vector<2x32xf32>
    %825 = arith.mulf %816, %798 : vector<2x32xf32>
    %826 = arith.mulf %810, %818 : vector<2x32xf32>
    %827 = arith.addf %825, %826 : vector<2x32xf32>
    %828 = math.tanh %827 : vector<2x32xf32>
    %829 = arith.mulf %824, %828 : vector<2x32xf32>
    %c10_267 = arith.constant 10 : index
    %c0_268 = arith.constant 0 : index
    %830 = vector.load %arg21[%c10_267, %c0_268] : memref<16x32xf32, #tpu.memory_space<vmem>>, vector<2x32xf32>
    tpu.vector_store %arg21[%c10_267, %c0_268], %829 {strides = array<i32>} : memref<16x32xf32, #tpu.memory_space<vmem>>, vector<2x32xf32>,
    %c8_269 = arith.constant 8 : index
    %c0_270 = arith.constant 0 : index
    %831 = vector.load %arg19[%c8_269, %c0_270] : memref<16x128xf32, #tpu.memory_space<vmem>>, vector<2x128xf32>
    %cst_271 = arith.constant dense<0.000000e+00> : vector<2x128xf32>
    %832 = tpu.matmul %829, %741, %cst_271 {dimension_numbers = #tpu.dot_dimension_numbers<[1], [0], [0], [1], [0, 0, 1, 1], [], []>} : vector<2x32xf32>, vector<32x128xf32>, vector<2x128xf32> -> vector<2x128xf32>
    %833 = arith.addf %831, %832 : vector<2x128xf32>
    %834 = vector.extract_strided_slice %833 {offsets = [0, 0], sizes = [2, 32], strides = [1, 1]} : vector<2x128xf32> to vector<2x32xf32>
    %835 = arith.negf %834 : vector<2x32xf32>
    %836 = math.exp %835 : vector<2x32xf32>
    %cst_272 = arith.constant 1.000000e+00 : f32
    %837 = vector.broadcast %cst_272 : f32 to vector<2x32xf32>
    %838 = arith.addf %837, %836 : vector<2x32xf32>
    %839 = arith.divf %837, %838 : vector<2x32xf32>
    %840 = vector.extract_strided_slice %833 {offsets = [0, 32], sizes = [2, 32], strides = [1, 1]} : vector<2x128xf32> to vector<2x32xf32>
    %841 = arith.negf %840 : vector<2x32xf32>
    %842 = math.exp %841 : vector<2x32xf32>
    %cst_273 = arith.constant 1.000000e+00 : f32
    %843 = vector.broadcast %cst_273 : f32 to vector<2x32xf32>
    %844 = arith.addf %843, %842 : vector<2x32xf32>
    %845 = arith.divf %843, %844 : vector<2x32xf32>
    %846 = vector.extract_strided_slice %833 {offsets = [0, 64], sizes = [2, 32], strides = [1, 1]} : vector<2x128xf32> to vector<2x32xf32>
    %847 = math.tanh %846 : vector<2x32xf32>
    %848 = vector.extract_strided_slice %833 {offsets = [0, 96], sizes = [2, 32], strides = [1, 1]} : vector<2x128xf32> to vector<2x32xf32>
    %849 = arith.negf %848 : vector<2x32xf32>
    %850 = math.exp %849 : vector<2x32xf32>
    %cst_274 = arith.constant 1.000000e+00 : f32
    %851 = vector.broadcast %cst_274 : f32 to vector<2x32xf32>
    %852 = arith.addf %851, %850 : vector<2x32xf32>
    %853 = arith.divf %851, %852 : vector<2x32xf32>
    %854 = arith.mulf %845, %827 : vector<2x32xf32>
    %855 = arith.mulf %839, %847 : vector<2x32xf32>
    %856 = arith.addf %854, %855 : vector<2x32xf32>
    %857 = math.tanh %856 : vector<2x32xf32>
    %858 = arith.mulf %853, %857 : vector<2x32xf32>
    %c8_275 = arith.constant 8 : index
    %c0_276 = arith.constant 0 : index
    %859 = vector.load %arg21[%c8_275, %c0_276] : memref<16x32xf32, #tpu.memory_space<vmem>>, vector<2x32xf32>
    tpu.vector_store %arg21[%c8_275, %c0_276], %858 {strides = array<i32>} : memref<16x32xf32, #tpu.memory_space<vmem>>, vector<2x32xf32>,
    %c6_277 = arith.constant 6 : index
    %c0_278 = arith.constant 0 : index
    %860 = vector.load %arg19[%c6_277, %c0_278] : memref<16x128xf32, #tpu.memory_space<vmem>>, vector<2x128xf32>
    %cst_279 = arith.constant dense<0.000000e+00> : vector<2x128xf32>
    %861 = tpu.matmul %858, %741, %cst_279 {dimension_numbers = #tpu.dot_dimension_numbers<[1], [0], [0], [1], [0, 0, 1, 1], [], []>} : vector<2x32xf32>, vector<32x128xf32>, vector<2x128xf32> -> vector<2x128xf32>
    %862 = arith.addf %860, %861 : vector<2x128xf32>
    %863 = vector.extract_strided_slice %862 {offsets = [0, 0], sizes = [2, 32], strides = [1, 1]} : vector<2x128xf32> to vector<2x32xf32>
    %864 = arith.negf %863 : vector<2x32xf32>
    %865 = math.exp %864 : vector<2x32xf32>
    %cst_280 = arith.constant 1.000000e+00 : f32
    %866 = vector.broadcast %cst_280 : f32 to vector<2x32xf32>
    %867 = arith.addf %866, %865 : vector<2x32xf32>
    %868 = arith.divf %866, %867 : vector<2x32xf32>
    %869 = vector.extract_strided_slice %862 {offsets = [0, 32], sizes = [2, 32], strides = [1, 1]} : vector<2x128xf32> to vector<2x32xf32>
    %870 = arith.negf %869 : vector<2x32xf32>
    %871 = math.exp %870 : vector<2x32xf32>
    %cst_281 = arith.constant 1.000000e+00 : f32
    %872 = vector.broadcast %cst_281 : f32 to vector<2x32xf32>
    %873 = arith.addf %872, %871 : vector<2x32xf32>
    %874 = arith.divf %872, %873 : vector<2x32xf32>
    %875 = vector.extract_strided_slice %862 {offsets = [0, 64], sizes = [2, 32], strides = [1, 1]} : vector<2x128xf32> to vector<2x32xf32>
    %876 = math.tanh %875 : vector<2x32xf32>
    %877 = vector.extract_strided_slice %862 {offsets = [0, 96], sizes = [2, 32], strides = [1, 1]} : vector<2x128xf32> to vector<2x32xf32>
    %878 = arith.negf %877 : vector<2x32xf32>
    %879 = math.exp %878 : vector<2x32xf32>
    %cst_282 = arith.constant 1.000000e+00 : f32
    %880 = vector.broadcast %cst_282 : f32 to vector<2x32xf32>
    %881 = arith.addf %880, %879 : vector<2x32xf32>
    %882 = arith.divf %880, %881 : vector<2x32xf32>
    %883 = arith.mulf %874, %856 : vector<2x32xf32>
    %884 = arith.mulf %868, %876 : vector<2x32xf32>
    %885 = arith.addf %883, %884 : vector<2x32xf32>
    %886 = math.tanh %885 : vector<2x32xf32>
    %887 = arith.mulf %882, %886 : vector<2x32xf32>
    %c6_283 = arith.constant 6 : index
    %c0_284 = arith.constant 0 : index
    %888 = vector.load %arg21[%c6_283, %c0_284] : memref<16x32xf32, #tpu.memory_space<vmem>>, vector<2x32xf32>
    tpu.vector_store %arg21[%c6_283, %c0_284], %887 {strides = array<i32>} : memref<16x32xf32, #tpu.memory_space<vmem>>, vector<2x32xf32>,
    %c4_285 = arith.constant 4 : index
    %c0_286 = arith.constant 0 : index
    %889 = vector.load %arg19[%c4_285, %c0_286] : memref<16x128xf32, #tpu.memory_space<vmem>>, vector<2x128xf32>
    %cst_287 = arith.constant dense<0.000000e+00> : vector<2x128xf32>
    %890 = tpu.matmul %887, %741, %cst_287 {dimension_numbers = #tpu.dot_dimension_numbers<[1], [0], [0], [1], [0, 0, 1, 1], [], []>} : vector<2x32xf32>, vector<32x128xf32>, vector<2x128xf32> -> vector<2x128xf32>
    %891 = arith.addf %889, %890 : vector<2x128xf32>
    %892 = vector.extract_strided_slice %891 {offsets = [0, 0], sizes = [2, 32], strides = [1, 1]} : vector<2x128xf32> to vector<2x32xf32>
    %893 = arith.negf %892 : vector<2x32xf32>
    %894 = math.exp %893 : vector<2x32xf32>
    %cst_288 = arith.constant 1.000000e+00 : f32
    %895 = vector.broadcast %cst_288 : f32 to vector<2x32xf32>
    %896 = arith.addf %895, %894 : vector<2x32xf32>
    %897 = arith.divf %895, %896 : vector<2x32xf32>
    %898 = vector.extract_strided_slice %891 {offsets = [0, 32], sizes = [2, 32], strides = [1, 1]} : vector<2x128xf32> to vector<2x32xf32>
    %899 = arith.negf %898 : vector<2x32xf32>
    %900 = math.exp %899 : vector<2x32xf32>
    %cst_289 = arith.constant 1.000000e+00 : f32
    %901 = vector.broadcast %cst_289 : f32 to vector<2x32xf32>
    %902 = arith.addf %901, %900 : vector<2x32xf32>
    %903 = arith.divf %901, %902 : vector<2x32xf32>
    %904 = vector.extract_strided_slice %891 {offsets = [0, 64], sizes = [2, 32], strides = [1, 1]} : vector<2x128xf32> to vector<2x32xf32>
    %905 = math.tanh %904 : vector<2x32xf32>
    %906 = vector.extract_strided_slice %891 {offsets = [0, 96], sizes = [2, 32], strides = [1, 1]} : vector<2x128xf32> to vector<2x32xf32>
    %907 = arith.negf %906 : vector<2x32xf32>
    %908 = math.exp %907 : vector<2x32xf32>
    %cst_290 = arith.constant 1.000000e+00 : f32
    %909 = vector.broadcast %cst_290 : f32 to vector<2x32xf32>
    %910 = arith.addf %909, %908 : vector<2x32xf32>
    %911 = arith.divf %909, %910 : vector<2x32xf32>
    %912 = arith.mulf %903, %885 : vector<2x32xf32>
    %913 = arith.mulf %897, %905 : vector<2x32xf32>
    %914 = arith.addf %912, %913 : vector<2x32xf32>
    %915 = math.tanh %914 : vector<2x32xf32>
    %916 = arith.mulf %911, %915 : vector<2x32xf32>
    %c4_291 = arith.constant 4 : index
    %c0_292 = arith.constant 0 : index
    %917 = vector.load %arg21[%c4_291, %c0_292] : memref<16x32xf32, #tpu.memory_space<vmem>>, vector<2x32xf32>
    tpu.vector_store %arg21[%c4_291, %c0_292], %916 {strides = array<i32>} : memref<16x32xf32, #tpu.memory_space<vmem>>, vector<2x32xf32>,
    %c2_293 = arith.constant 2 : index
    %c0_294 = arith.constant 0 : index
    %918 = vector.load %arg19[%c2_293, %c0_294] : memref<16x128xf32, #tpu.memory_space<vmem>>, vector<2x128xf32>
    %cst_295 = arith.constant dense<0.000000e+00> : vector<2x128xf32>
    %919 = tpu.matmul %916, %741, %cst_295 {dimension_numbers = #tpu.dot_dimension_numbers<[1], [0], [0], [1], [0, 0, 1, 1], [], []>} : vector<2x32xf32>, vector<32x128xf32>, vector<2x128xf32> -> vector<2x128xf32>
    %920 = arith.addf %918, %919 : vector<2x128xf32>
    %921 = vector.extract_strided_slice %920 {offsets = [0, 0], sizes = [2, 32], strides = [1, 1]} : vector<2x128xf32> to vector<2x32xf32>
    %922 = arith.negf %921 : vector<2x32xf32>
    %923 = math.exp %922 : vector<2x32xf32>
    %cst_296 = arith.constant 1.000000e+00 : f32
    %924 = vector.broadcast %cst_296 : f32 to vector<2x32xf32>
    %925 = arith.addf %924, %923 : vector<2x32xf32>
    %926 = arith.divf %924, %925 : vector<2x32xf32>
    %927 = vector.extract_strided_slice %920 {offsets = [0, 32], sizes = [2, 32], strides = [1, 1]} : vector<2x128xf32> to vector<2x32xf32>
    %928 = arith.negf %927 : vector<2x32xf32>
    %929 = math.exp %928 : vector<2x32xf32>
    %cst_297 = arith.constant 1.000000e+00 : f32
    %930 = vector.broadcast %cst_297 : f32 to vector<2x32xf32>
    %931 = arith.addf %930, %929 : vector<2x32xf32>
    %932 = arith.divf %930, %931 : vector<2x32xf32>
    %933 = vector.extract_strided_slice %920 {offsets = [0, 64], sizes = [2, 32], strides = [1, 1]} : vector<2x128xf32> to vector<2x32xf32>
    %934 = math.tanh %933 : vector<2x32xf32>
    %935 = vector.extract_strided_slice %920 {offsets = [0, 96], sizes = [2, 32], strides = [1, 1]} : vector<2x128xf32> to vector<2x32xf32>
    %936 = arith.negf %935 : vector<2x32xf32>
    %937 = math.exp %936 : vector<2x32xf32>
    %cst_298 = arith.constant 1.000000e+00 : f32
    %938 = vector.broadcast %cst_298 : f32 to vector<2x32xf32>
    %939 = arith.addf %938, %937 : vector<2x32xf32>
    %940 = arith.divf %938, %939 : vector<2x32xf32>
    %941 = arith.mulf %932, %914 : vector<2x32xf32>
    %942 = arith.mulf %926, %934 : vector<2x32xf32>
    %943 = arith.addf %941, %942 : vector<2x32xf32>
    %944 = math.tanh %943 : vector<2x32xf32>
    %945 = arith.mulf %940, %944 : vector<2x32xf32>
    %c2_299 = arith.constant 2 : index
    %c0_300 = arith.constant 0 : index
    %946 = vector.load %arg21[%c2_299, %c0_300] : memref<16x32xf32, #tpu.memory_space<vmem>>, vector<2x32xf32>
    tpu.vector_store %arg21[%c2_299, %c0_300], %945 {strides = array<i32>} : memref<16x32xf32, #tpu.memory_space<vmem>>, vector<2x32xf32>,
    %c0_301 = arith.constant 0 : index
    %c0_302 = arith.constant 0 : index
    %947 = vector.load %arg19[%c0_301, %c0_302] : memref<16x128xf32, #tpu.memory_space<vmem>>, vector<2x128xf32>
    %cst_303 = arith.constant dense<0.000000e+00> : vector<2x128xf32>
    %948 = tpu.matmul %945, %741, %cst_303 {dimension_numbers = #tpu.dot_dimension_numbers<[1], [0], [0], [1], [0, 0, 1, 1], [], []>} : vector<2x32xf32>, vector<32x128xf32>, vector<2x128xf32> -> vector<2x128xf32>
    %949 = arith.addf %947, %948 : vector<2x128xf32>
    %950 = vector.extract_strided_slice %949 {offsets = [0, 0], sizes = [2, 32], strides = [1, 1]} : vector<2x128xf32> to vector<2x32xf32>
    %951 = arith.negf %950 : vector<2x32xf32>
    %952 = math.exp %951 : vector<2x32xf32>
    %cst_304 = arith.constant 1.000000e+00 : f32
    %953 = vector.broadcast %cst_304 : f32 to vector<2x32xf32>
    %954 = arith.addf %953, %952 : vector<2x32xf32>
    %955 = arith.divf %953, %954 : vector<2x32xf32>
    %956 = vector.extract_strided_slice %949 {offsets = [0, 32], sizes = [2, 32], strides = [1, 1]} : vector<2x128xf32> to vector<2x32xf32>
    %957 = arith.negf %956 : vector<2x32xf32>
    %958 = math.exp %957 : vector<2x32xf32>
    %cst_305 = arith.constant 1.000000e+00 : f32
    %959 = vector.broadcast %cst_305 : f32 to vector<2x32xf32>
    %960 = arith.addf %959, %958 : vector<2x32xf32>
    %961 = arith.divf %959, %960 : vector<2x32xf32>
    %962 = vector.extract_strided_slice %949 {offsets = [0, 64], sizes = [2, 32], strides = [1, 1]} : vector<2x128xf32> to vector<2x32xf32>
    %963 = math.tanh %962 : vector<2x32xf32>
    %964 = vector.extract_strided_slice %949 {offsets = [0, 96], sizes = [2, 32], strides = [1, 1]} : vector<2x128xf32> to vector<2x32xf32>
    %965 = arith.negf %964 : vector<2x32xf32>
    %966 = math.exp %965 : vector<2x32xf32>
    %cst_306 = arith.constant 1.000000e+00 : f32
    %967 = vector.broadcast %cst_306 : f32 to vector<2x32xf32>
    %968 = arith.addf %967, %966 : vector<2x32xf32>
    %969 = arith.divf %967, %968 : vector<2x32xf32>
    %970 = arith.mulf %961, %943 : vector<2x32xf32>
    %971 = arith.mulf %955, %963 : vector<2x32xf32>
    %972 = arith.addf %970, %971 : vector<2x32xf32>
    %973 = math.tanh %972 : vector<2x32xf32>
    %974 = arith.mulf %969, %973 : vector<2x32xf32>
    %c0_307 = arith.constant 0 : index
    %c0_308 = arith.constant 0 : index
    %975 = vector.load %arg21[%c0_307, %c0_308] : memref<16x32xf32, #tpu.memory_space<vmem>>, vector<2x32xf32>
    tpu.vector_store %arg21[%c0_307, %c0_308], %974 {strides = array<i32>} : memref<16x32xf32, #tpu.memory_space<vmem>>, vector<2x32xf32>,
    %c0_309 = arith.constant 0 : index
    %c0_310 = arith.constant 0 : index
    %976 = vector.load %arg20[%c0_309, %c0_310] : memref<16x32xf32, #tpu.memory_space<vmem>>, vector<16x32xf32>
    %c0_311 = arith.constant 0 : index
    %c0_312 = arith.constant 0 : index
    %977 = vector.load %arg15[%c0_311, %c0_312] : memref<32x8xf32, #tpu.memory_space<vmem>>, vector<32x8xf32>
    %cst_313 = arith.constant dense<0.000000e+00> : vector<16x8xf32>
    %978 = tpu.matmul %976, %977, %cst_313 {dimension_numbers = #tpu.dot_dimension_numbers<[1], [0], [0], [1], [0, 0, 1, 1], [], []>} : vector<16x32xf32>, vector<32x8xf32>, vector<16x8xf32> -> vector<16x8xf32>
    %c0_314 = arith.constant 0 : index
    %c0_315 = arith.constant 0 : index
    %979 = vector.load %arg21[%c0_314, %c0_315] : memref<16x32xf32, #tpu.memory_space<vmem>>, vector<16x32xf32>
    %c0_316 = arith.constant 0 : index
    %c0_317 = arith.constant 0 : index
    %980 = vector.load %arg16[%c0_316, %c0_317] : memref<32x8xf32, #tpu.memory_space<vmem>>, vector<32x8xf32>
    %cst_318 = arith.constant dense<0.000000e+00> : vector<16x8xf32>
    %981 = tpu.matmul %979, %980, %cst_318 {dimension_numbers = #tpu.dot_dimension_numbers<[1], [0], [0], [1], [0, 0, 1, 1], [], []>} : vector<16x32xf32>, vector<32x8xf32>, vector<16x8xf32> -> vector<16x8xf32>
    %982 = arith.addf %978, %981 : vector<16x8xf32>
    %c0_319 = arith.constant 0 : index
    %c0_320 = arith.constant 0 : index
    %983 = vector.load %arg17[%c0_319, %c0_320] : memref<1x8xf32, #tpu.memory_space<vmem>>, vector<1x8xf32>
    %984 = vector.broadcast %983 : vector<1x8xf32> to vector<16x8xf32>
    %985 = arith.addf %982, %984 : vector<16x8xf32>
    %c0_321 = arith.constant 0 : index
    %c0_322 = arith.constant 0 : index
    %986 = vector.load %arg18[%c0_321, %c0_322] : memref<16x8xf32, #tpu.memory_space<vmem>>, vector<16x8xf32>
    tpu.vector_store %arg18[%c0_321, %c0_322], %985 {strides = array<i32>} : memref<16x8xf32, #tpu.memory_space<vmem>>, vector<16x8xf32>,
    return
  }
}

</mosaic_0001>

<llo_original>
// kernel: lstm_net_forward.1
$region0: #{lstm_net_forward.1}
  #allocation0 [shape = 'u32[]', space=smem, size = 0x4, offset = 0x4, fixed_abs, tag = 'smem constant byte address 0x4 - core index']
  #allocation1 [shape = 'u32[72,128]{1,0:T(1,128)}', space=vmem, size = 0x9000, scoped, tag = 'internal scratch']
  #allocation2 [shape = 'f32[16,128]{1,0:T(8,128)}', space=vmem, size = 0x2000, scoped, tag = 'scratch operand']
  #allocation3 [shape = 'f32[16,32]{1,0:T(8,128)}', space=vmem, size = 0x2000, scoped, tag = 'scratch operand']
  #allocation4 [shape = 'f32[16,32]{1,0:T(8,128)}', space=vmem, size = 0x2000, scoped, tag = 'scratch operand']
  #allocation5 [shape = 'f32[16,32]{1,0:T(8,128)}', space=vmem, size = 0x2000, scoped, tag = 'scratch operand']
  #allocation6 [shape = 'f32[16,32]{1,0:T(8,128)}', space=vmem, size = 0x2000, scoped, tag = 'scratch operand']
  %s0 = inlined_call_operand.vmem [shape: f32[16,16], index: 0, kind: input, shape index: {}]
  %s1 = inlined_call_operand.vmem [shape: f32[16,128], index: 1, kind: input, shape index: {}]
  %s2 = inlined_call_operand.vmem [shape: f32[32,128], index: 2, kind: input, shape index: {}]
  %s3 = inlined_call_operand.vmem [shape: f32[1,128], index: 3, kind: input, shape index: {}]
  %s4 = inlined_call_operand.vmem [shape: f32[16,128], index: 4, kind: input, shape index: {}]
  %s5 = inlined_call_operand.vmem [shape: f32[32,128], index: 5, kind: input, shape index: {}]
  %s6 = inlined_call_operand.vmem [shape: f32[1,128], index: 6, kind: input, shape index: {}]
  %s7 = inlined_call_operand.vmem [shape: f32[32,128], index: 7, kind: input, shape index: {}]
  %s8 = inlined_call_operand.vmem [shape: f32[32,128], index: 8, kind: input, shape index: {}]
  %s9 = inlined_call_operand.vmem [shape: f32[32,128], index: 9, kind: input, shape index: {}]
  %s10 = inlined_call_operand.vmem [shape: f32[1,128], index: 10, kind: input, shape index: {}]
  %s11 = inlined_call_operand.vmem [shape: f32[32,128], index: 11, kind: input, shape index: {}]
  %s12 = inlined_call_operand.vmem [shape: f32[32,128], index: 12, kind: input, shape index: {}]
  %s13 = inlined_call_operand.vmem [shape: f32[32,128], index: 13, kind: input, shape index: {}]
  %s14 = inlined_call_operand.vmem [shape: f32[1,128], index: 14, kind: input, shape index: {}]
  %s15 = inlined_call_operand.vmem [shape: f32[32,8], index: 15, kind: input, shape index: {}]
  %s16 = inlined_call_operand.vmem [shape: f32[32,8], index: 16, kind: input, shape index: {}]
  %s17 = inlined_call_operand.vmem [shape: f32[1,8], index: 17, kind: input, shape index: {}]
  %s18 = inlined_call_operand.vmem [shape: f32[16,8], index: 18, kind: output, shape index: {}]
  %s19 = sld [smem:[#allocation0]]
  $region82: #{lstm_net_forward.1} parent=0
    _
  %s21 = ssub.s32 1, %s19
  %s22 = scalar_select 0, %s21, %s19
  // Predicated region
  $region2: #{lstm_net_forward.1} parent=0 // pred_check
    _
  $region3: #{lstm_net_forward.1} parent=0 // pred_check_branch
    %24 = sbr.rel (0) target = $region5
  $region4: #{lstm_net_forward.1} parent=0 // pred_region
    _
  $region5: #{lstm_net_forward.1} parent=0 // pred_fallthru
    _
  // Predicated region
  $region6: #{lstm_net_forward.1} parent=0 // pred_check
    _
  $region7: #{lstm_net_forward.1} parent=0 // pred_check_branch
    %26 = sbr.rel (0) target = $region9
  $region8: #{lstm_net_forward.1} parent=0 // pred_region
    _
  $region9: #{lstm_net_forward.1} parent=0 // pred_fallthru
    _
  // Predicated region
  $region10: #{lstm_net_forward.1} parent=0 // pred_check
    _
  $region11: #{lstm_net_forward.1} parent=0 // pred_check_branch
    %28 = sbr.rel (0) target = $region13
  $region12: #{lstm_net_forward.1} parent=0 // pred_region
    _
  $region13: #{lstm_net_forward.1} parent=0 // pred_fallthru
    _
  // Predicated region
  $region14: #{lstm_net_forward.1} parent=0 // pred_check
    _
  $region15: #{lstm_net_forward.1} parent=0 // pred_check_branch
    %30 = sbr.rel (0) target = $region17
  $region16: #{lstm_net_forward.1} parent=0 // pred_region
    _
  $region17: #{lstm_net_forward.1} parent=0 // pred_fallthru
    _
  // Predicated region
  $region18: #{lstm_net_forward.1} parent=0 // pred_check
    _
  $region19: #{lstm_net_forward.1} parent=0 // pred_check_branch
    %32 = sbr.rel (0) target = $region21
  $region20: #{lstm_net_forward.1} parent=0 // pred_region
    _
  $region21: #{lstm_net_forward.1} parent=0 // pred_fallthru
    _
  // Predicated region
  $region22: #{lstm_net_forward.1} parent=0 // pred_check
    _
  $region23: #{lstm_net_forward.1} parent=0 // pred_check_branch
    %34 = sbr.rel (0) target = $region25
  $region24: #{lstm_net_forward.1} parent=0 // pred_region
    _
  $region25: #{lstm_net_forward.1} parent=0 // pred_fallthru
    _
  // Predicated region
  $region26: #{lstm_net_forward.1} parent=0 // pred_check
    _
  $region27: #{lstm_net_forward.1} parent=0 // pred_check_branch
    %36 = sbr.rel (0) target = $region29
  $region28: #{lstm_net_forward.1} parent=0 // pred_region
    _
  $region29: #{lstm_net_forward.1} parent=0 // pred_fallthru
    _
  // Predicated region
  $region30: #{lstm_net_forward.1} parent=0 // pred_check
    _
  $region31: #{lstm_net_forward.1} parent=0 // pred_check_branch
    %38 = sbr.rel (0) target = $region33
  $region32: #{lstm_net_forward.1} parent=0 // pred_region
    _
  $region33: #{lstm_net_forward.1} parent=0 // pred_fallthru
    _
  // Predicated region
  $region34: #{lstm_net_forward.1} parent=0 // pred_check
    _
  $region35: #{lstm_net_forward.1} parent=0 // pred_check_branch
    %40 = sbr.rel (0) target = $region37
  $region36: #{lstm_net_forward.1} parent=0 // pred_region
    _
  $region37: #{lstm_net_forward.1} parent=0 // pred_fallthru
    _
  // Predicated region
  $region38: #{lstm_net_forward.1} parent=0 // pred_check
    _
  $region39: #{lstm_net_forward.1} parent=0 // pred_check_branch
    %42 = sbr.rel (0) target = $region41
  $region40: #{lstm_net_forward.1} parent=0 // pred_region
    _
  $region41: #{lstm_net_forward.1} parent=0 // pred_fallthru
    _
  // Predicated region
  $region42: #{lstm_net_forward.1} parent=0 // pred_check
    _
  $region43: #{lstm_net_forward.1} parent=0 // pred_check_branch
    %44 = sbr.rel (0) target = $region45
  $region44: #{lstm_net_forward.1} parent=0 // pred_region
    _
  $region45: #{lstm_net_forward.1} parent=0 // pred_fallthru
    _
  // Predicated region
  $region46: #{lstm_net_forward.1} parent=0 // pred_check
    _
  $region47: #{lstm_net_forward.1} parent=0 // pred_check_branch
    %46 = sbr.rel (0) target = $region49
  $region48: #{lstm_net_forward.1} parent=0 // pred_region
    _
  $region49: #{lstm_net_forward.1} parent=0 // pred_fallthru
    _
  // Predicated region
  $region50: #{lstm_net_forward.1} parent=0 // pred_check
    _
  $region51: #{lstm_net_forward.1} parent=0 // pred_check_branch
    %48 = sbr.rel (0) target = $region53
  $region52: #{lstm_net_forward.1} parent=0 // pred_region
    _
  $region53: #{lstm_net_forward.1} parent=0 // pred_fallthru
    _
  // Predicated region
  $region54: #{lstm_net_forward.1} parent=0 // pred_check
    _
  $region55: #{lstm_net_forward.1} parent=0 // pred_check_branch
    %50 = sbr.rel (0) target = $region57
  $region56: #{lstm_net_forward.1} parent=0 // pred_region
    _
  $region57: #{lstm_net_forward.1} parent=0 // pred_fallthru
    _
  // Predicated region
  $region58: #{lstm_net_forward.1} parent=0 // pred_check
    _
  $region59: #{lstm_net_forward.1} parent=0 // pred_check_branch
    %52 = sbr.rel (0) target = $region61
  $region60: #{lstm_net_forward.1} parent=0 // pred_region
    _
  $region61: #{lstm_net_forward.1} parent=0 // pred_fallthru
    _
  // Predicated region
  $region62: #{lstm_net_forward.1} parent=0 // pred_check
    _
  $region63: #{lstm_net_forward.1} parent=0 // pred_check_branch
    %54 = sbr.rel (0) target = $region65
  $region64: #{lstm_net_forward.1} parent=0 // pred_region
    _
  $region65: #{lstm_net_forward.1} parent=0 // pred_fallthru
    _
  // Predicated region
  $region66: #{lstm_net_forward.1} parent=0 // pred_check
    _
  $region67: #{lstm_net_forward.1} parent=0 // pred_check_branch
    %56 = sbr.rel (0) target = $region69
  $region68: #{lstm_net_forward.1} parent=0 // pred_region
    _
  $region69: #{lstm_net_forward.1} parent=0 // pred_fallthru
    _
  // Predicated region
  $region70: #{lstm_net_forward.1} parent=0 // pred_check
    _
  $region71: #{lstm_net_forward.1} parent=0 // pred_check_branch
    %58 = sbr.rel (0) target = $region73
  $region72: #{lstm_net_forward.1} parent=0 // pred_region
    _
  $region73: #{lstm_net_forward.1} parent=0 // pred_fallthru
    _
  %v59 = vld [vmem:[%s0] sm:$0xff]
  %v60 = vld [vmem:[%s0 + $0x8] sm:$0xff]
  %v61 = vld [vmem:[%s1] sm:$0xff]
  %v62 = vld [vmem:[%s1 + $0x8] sm:$0xff]
  %v63 = vld [vmem:[%s3] sm:$0x1]
  %v65 = vperm.slane %v63, 0
  %vm67 = vcmask 130048
  %v69 = vsel %vm67, %v59, 0
  %v72 = vsel %vm67, %v60, 0
  %74 = vmatpush.msra.mxu0 0.0
  %75 = vmatpush.msra.mxu0 0.0
  %76 = vmatpush.msra.mxu0 0.0
  %77 = vmatpush.msra.mxu0 0.0
  %78 = vmatpush.msra.mxu0 0.0
  %79 = vmatpush.msra.mxu0 0.0
  %80 = vmatpush.msra.mxu0 0.0
  %81 = vmatpush.msra.mxu0 0.0
  %82 = vmatpush.msra.mxu0 0.0
  %83 = vmatpush.msra.mxu0 0.0
  %84 = vmatpush.msra.mxu0 0.0
  %85 = vmatpush.msra.mxu0 0.0
  %86 = vmatpush.msra.mxu0 0.0
  %87 = vmatpush.msra.mxu0 0.0
  %88 = vmatpush.msra.mxu0 %v62
  %89 = vmatpush.msra.mxu0 %v61
  %90 = vmatmul.f32.gmra.mxu0 %v69
  %v91 = vpop.f32.mrf.mxu0
  %v92 = vadd.f32 %v65, %v91
  %93 = vmatmul.f32.gmra.mxu0 %v72
  %v94 = vpop.f32.mrf.mxu0
  %v95 = vadd.f32 %v65, %v94
  %96 = vdwg.mxu0
  %97 = vst [vmem:[#allocation2] sm:$0xff] %v92
  %98 = vst [vmem:[#allocation2 + $0x8] sm:$0xff] %v95
  %v99 = vld [vmem:[%s2] sm:$0xff]
  %v100 = vld [vmem:[%s2 + $0x8] sm:$0xff]
  %v101 = vld [vmem:[%s2 + $0x10] sm:$0xff]
  %v102 = vld [vmem:[%s2 + $0x18] sm:$0xff]
  %v103 = vld [vmem:[#allocation2] sm:$0x3]
  %vm104 = vcmask 261120
  %v106 = vsel %vm104, 0.0, 0
  %108 = vmatpush.msra.mxu0 0.0
  %109 = vmatpush.msra.mxu0 0.0
  %110 = vmatpush.msra.mxu0 0.0
  %111 = vmatpush.msra.mxu0 0.0
  %112 = vmatpush.msra.mxu0 0.0
  %113 = vmatpush.msra.mxu0 0.0
  %114 = vmatpush.msra.mxu0 0.0
  %115 = vmatpush.msra.mxu0 0.0
  %116 = vmatpush.msra.mxu0 0.0
  %117 = vmatpush.msra.mxu0 0.0
  %118 = vmatpush.msra.mxu0 0.0
  %119 = vmatpush.msra.mxu0 0.0
  %120 = vmatpush.msra.mxu0 %v102
  %121 = vmatpush.msra.mxu0 %v101
  %122 = vmatpush.msra.mxu0 %v100
  %123 = vmatpush.msra.mxu0 %v99
  %124 = vmatmul.f32.gmra.mxu0 %v106
  %v125 = vpop.f32.mrf.mxu0
  %v126 = vadd.f32 0.0, %v125
  %127 = vdwg.mxu0
  %v128 = vadd.f32 %v103, %v126
  %v129 = vxor.u32 %v128, 2147483648
  %v130 = vmul.f32 %v129, 1.442695
  %v131 = vpow.pop %v130
  %v132 = vadd.f32 %v131, 1.0
  %v133 = vrcp.pop %v132
  %v134 = vmul.f32 %v132, %v133
  %v135 = vsub.f32 1.0, %v134
  %v136 = vmul.f32 %v133, %v135
  %v137 = vadd.f32 %v133, %v136
  %vm138 = vweird.f32 %v132
  %vm139 = vweird.f32 %v133
  %vm140 = vmor %vm138, %vm139
  %v141 = vsel %vm140, %v133, %v137
  %v142 = vand.u32 2147483647, %v132
  %vm143 = vcmp.eq.f32.partialorder %v142, 8.507059e+37
  %v144 = vand.u32 %v132, 2147483648
  %v145 = vor.u32 1.1754944e-38, %v144
  %v146 = vsel %vm143, %v145, %v141
  %v147 = vmul.f32 1.0, %v146
  %v148 = vtanh.pop %v128
  %v149 = vmul.f32 %v147, 0.0
  %151 = vrot.lane.b32.xlu0 %v148, 64
  %v152 = vpop.permute.xlu0 %151
  %v154 = vmul.f32 %v147, %v152
  %156 = vrot.lane.b32.xlu0 %v154, 32
  %v157 = vpop.permute.xlu0 %156
  %v159 = vadd.f32 %v149, %v157
  %v160 = vtanh.pop %v159
  %162 = vrot.lane.b32.xlu0 %v160, 64
  %v163 = vpop.permute.xlu0 %162
  %v165 = vmul.f32 %v147, %v163
  %167 = vrot.lane.b32.xlu0 %v165, 32
  %v168 = vpop.permute.xlu0 %167
  %vm170 = vcmask 254976
  %171 = vst.msk [vmem:[#allocation5] sm:$0x3] %vm170, %v168
  %v172 = vld [vmem:[#allocation2 + $0x2] sm:$0x3]
  %v173 = vsel %vm104, %v168, 0
  %175 = vmatpush.msra.mxu0 0.0
  %176 = vmatpush.msra.mxu0 0.0
  %177 = vmatpush.msra.mxu0 0.0
  %178 = vmatpush.msra.mxu0 0.0
  %179 = vmatpush.msra.mxu0 0.0
  %180 = vmatpush.msra.mxu0 0.0
  %181 = vmatpush.msra.mxu0 0.0
  %182 = vmatpush.msra.mxu0 0.0
  %183 = vmatpush.msra.mxu0 0.0
  %184 = vmatpush.msra.mxu0 0.0
  %185 = vmatpush.msra.mxu0 0.0
  %186 = vmatpush.msra.mxu0 0.0
  %187 = vmatpush.msra.mxu0 %v102
  %188 = vmatpush.msra.mxu0 %v101
  %189 = vmatpush.msra.mxu0 %v100
  %190 = vmatpush.msra.mxu0 %v99
  %191 = vmatmul.f32.gmra.mxu0 %v173
  %v192 = vpop.f32.mrf.mxu0
  %v193 = vadd.f32 0.0, %v192
  %194 = vdwg.mxu0
  %v195 = vadd.f32 %v172, %v193
  %v196 = vxor.u32 %v195, 2147483648
  %v197 = vmul.f32 %v196, 1.442695
  %v198 = vpow.pop %v197
  %v199 = vadd.f32 %v198, 1.0
  %v200 = vrcp.pop %v199
  %v201 = vmul.f32 %v199, %v200
  %v202 = vsub.f32 1.0, %v201
  %v203 = vmul.f32 %v200, %v202
  %v204 = vadd.f32 %v200, %v203
  %vm205 = vweird.f32 %v199
  %vm206 = vweird.f32 %v200
  %vm207 = vmor %vm205, %vm206
  %v208 = vsel %vm207, %v200, %v204
  %v209 = vand.u32 2147483647, %v199
  %vm210 = vcmp.eq.f32.partialorder %v209, 8.507059e+37
  %v211 = vand.u32 %v199, 2147483648
  %v212 = vor.u32 1.1754944e-38, %v211
  %v213 = vsel %vm210, %v212, %v208
  %v214 = vmul.f32 1.0, %v213
  %v215 = vtanh.pop %v195
  %v216 = vmul.f32 %v214, %v159
  %218 = vrot.lane.b32.xlu0 %v215, 64
  %v219 = vpop.permute.xlu0 %218
  %v221 = vmul.f32 %v214, %v219
  %223 = vrot.lane.b32.xlu0 %v221, 32
  %v224 = vpop.permute.xlu0 %223
  %v226 = vadd.f32 %v216, %v224
  %v227 = vtanh.pop %v226
  %229 = vrot.lane.b32.xlu0 %v227, 64
  %v230 = vpop.permute.xlu0 %229
  %v232 = vmul.f32 %v214, %v230
  %234 = vrot.lane.b32.xlu0 %v232, 32
  %v235 = vpop.permute.xlu0 %234
  %237 = vst.msk [vmem:[#allocation5 + $0x2] sm:$0x3] %vm170, %v235
  %v238 = vld [vmem:[#allocation2 + $0x4] sm:$0x3]
  %v239 = vsel %vm104, %v235, 0
  %241 = vmatpush.msra.mxu0 0.0
  %242 = vmatpush.msra.mxu0 0.0
  %243 = vmatpush.msra.mxu0 0.0
  %244 = vmatpush.msra.mxu0 0.0
  %245 = vmatpush.msra.mxu0 0.0
  %246 = vmatpush.msra.mxu0 0.0
  %247 = vmatpush.msra.mxu0 0.0
  %248 = vmatpush.msra.mxu0 0.0
  %249 = vmatpush.msra.mxu0 0.0
  %250 = vmatpush.msra.mxu0 0.0
  %251 = vmatpush.msra.mxu0 0.0
  %252 = vmatpush.msra.mxu0 0.0
  %253 = vmatpush.msra.mxu0 %v102
  %254 = vmatpush.msra.mxu0 %v101
  %255 = vmatpush.msra.mxu0 %v100
  %256 = vmatpush.msra.mxu0 %v99
  %257 = vmatmul.f32.gmra.mxu0 %v239
  %v258 = vpop.f32.mrf.mxu0
  %v259 = vadd.f32 0.0, %v258
  %260 = vdwg.mxu0
  %v261 = vadd.f32 %v238, %v259
  %v262 = vxor.u32 %v261, 2147483648
  %v263 = vmul.f32 %v262, 1.442695
  %v264 = vpow.pop %v263
  %v265 = vadd.f32 %v264, 1.0
  %v266 = vrcp.pop %v265
  %v267 = vmul.f32 %v265, %v266
  %v268 = vsub.f32 1.0, %v267
  %v269 = vmul.f32 %v266, %v268
  %v270 = vadd.f32 %v266, %v269
  %vm271 = vweird.f32 %v265
  %vm272 = vweird.f32 %v266
  %vm273 = vmor %vm271, %vm272
  %v274 = vsel %vm273, %v266, %v270
  %v275 = vand.u32 2147483647, %v265
  %vm276 = vcmp.eq.f32.partialorder %v275, 8.507059e+37
  %v277 = vand.u32 %v265, 2147483648
  %v278 = vor.u32 1.1754944e-38, %v277
  %v279 = vsel %vm276, %v278, %v274
  %v280 = vmul.f32 1.0, %v279
  %v281 = vtanh.pop %v261
  %v282 = vmul.f32 %v280, %v226
  %284 = vrot.lane.b32.xlu0 %v281, 64
  %v285 = vpop.permute.xlu0 %284
  %v287 = vmul.f32 %v280, %v285
  %289 = vrot.lane.b32.xlu0 %v287, 32
  %v290 = vpop.permute.xlu0 %289
  %v292 = vadd.f32 %v282, %v290
  %v293 = vtanh.pop %v292
  %295 = vrot.lane.b32.xlu0 %v293, 64
  %v296 = vpop.permute.xlu0 %295
  %v298 = vmul.f32 %v280, %v296
  %300 = vrot.lane.b32.xlu0 %v298, 32
  %v301 = vpop.permute.xlu0 %300
  %303 = vst.msk [vmem:[#allocation5 + $0x4] sm:$0x3] %vm170, %v301
  %v304 = vld [vmem:[#allocation2 + $0x6] sm:$0x3]
  %v305 = vsel %vm104, %v301, 0
  %307 = vmatpush.msra.mxu0 0.0
  %308 = vmatpush.msra.mxu0 0.0
  %309 = vmatpush.msra.mxu0 0.0
  %310 = vmatpush.msra.mxu0 0.0
  %311 = vmatpush.msra.mxu0 0.0
  %312 = vmatpush.msra.mxu0 0.0
  %313 = vmatpush.msra.mxu0 0.0
  %314 = vmatpush.msra.mxu0 0.0
  %315 = vmatpush.msra.mxu0 0.0
  %316 = vmatpush.msra.mxu0 0.0
  %317 = vmatpush.msra.mxu0 0.0
  %318 = vmatpush.msra.mxu0 0.0
  %319 = vmatpush.msra.mxu0 %v102
  %320 = vmatpush.msra.mxu0 %v101
  %321 = vmatpush.msra.mxu0 %v100
  %322 = vmatpush.msra.mxu0 %v99
  %323 = vmatmul.f32.gmra.mxu0 %v305
  %v324 = vpop.f32.mrf.mxu0
  %v325 = vadd.f32 0.0, %v324
  %326 = vdwg.mxu0
  %v327 = vadd.f32 %v304, %v325
  %v328 = vxor.u32 %v327, 2147483648
  %v329 = vmul.f32 %v328, 1.442695
  %v330 = vpow.pop %v329
  %v331 = vadd.f32 %v330, 1.0
  %v332 = vrcp.pop %v331
  %v333 = vmul.f32 %v331, %v332
  %v334 = vsub.f32 1.0, %v333
  %v335 = vmul.f32 %v332, %v334
  %v336 = vadd.f32 %v332, %v335
  %vm337 = vweird.f32 %v331
  %vm338 = vweird.f32 %v332
  %vm339 = vmor %vm337, %vm338
  %v340 = vsel %vm339, %v332, %v336
  %v341 = vand.u32 2147483647, %v331
  %vm342 = vcmp.eq.f32.partialorder %v341, 8.507059e+37
  %v343 = vand.u32 %v331, 2147483648
  %v344 = vor.u32 1.1754944e-38, %v343
  %v345 = vsel %vm342, %v344, %v340
  %v346 = vmul.f32 1.0, %v345
  %v347 = vtanh.pop %v327
  %v348 = vmul.f32 %v346, %v292
  %350 = vrot.lane.b32.xlu0 %v347, 64
  %v351 = vpop.permute.xlu0 %350
  %v353 = vmul.f32 %v346, %v351
  %355 = vrot.lane.b32.xlu0 %v353, 32
  %v356 = vpop.permute.xlu0 %355
  %v358 = vadd.f32 %v348, %v356
  %v359 = vtanh.pop %v358
  %361 = vrot.lane.b32.xlu0 %v359, 64
  %v362 = vpop.permute.xlu0 %361
  %v364 = vmul.f32 %v346, %v362
  %366 = vrot.lane.b32.xlu0 %v364, 32
  %v367 = vpop.permute.xlu0 %366
  %369 = vst.msk [vmem:[#allocation5 + $0x6] sm:$0x3] %vm170, %v367
  %v370 = vld [vmem:[#allocation2 + $0x8] sm:$0x3]
  %v371 = vsel %vm104, %v367, 0
  %373 = vmatpush.msra.mxu0 0.0
  %374 = vmatpush.msra.mxu0 0.0
  %375 = vmatpush.msra.mxu0 0.0
  %376 = vmatpush.msra.mxu0 0.0
  %377 = vmatpush.msra.mxu0 0.0
  %378 = vmatpush.msra.mxu0 0.0
  %379 = vmatpush.msra.mxu0 0.0
  %380 = vmatpush.msra.mxu0 0.0
  %381 = vmatpush.msra.mxu0 0.0
  %382 = vmatpush.msra.mxu0 0.0
  %383 = vmatpush.msra.mxu0 0.0
  %384 = vmatpush.msra.mxu0 0.0
  %385 = vmatpush.msra.mxu0 %v102
  %386 = vmatpush.msra.mxu0 %v101
  %387 = vmatpush.msra.mxu0 %v100
  %388 = vmatpush.msra.mxu0 %v99
  %389 = vmatmul.f32.gmra.mxu0 %v371
  %v390 = vpop.f32.mrf.mxu0
  %v391 = vadd.f32 0.0, %v390
  %392 = vdwg.mxu0
  %v393 = vadd.f32 %v370, %v391
  %v394 = vxor.u32 %v393, 2147483648
  %v395 = vmul.f32 %v394, 1.442695
  %v396 = vpow.pop %v395
  %v397 = vadd.f32 %v396, 1.0
  %v398 = vrcp.pop %v397
  %v399 = vmul.f32 %v397, %v398
  %v400 = vsub.f32 1.0, %v399
  %v401 = vmul.f32 %v398, %v400
  %v402 = vadd.f32 %v398, %v401
  %vm403 = vweird.f32 %v397
  %vm404 = vweird.f32 %v398
  %vm405 = vmor %vm403, %vm404
  %v406 = vsel %vm405, %v398, %v402
  %v407 = vand.u32 2147483647, %v397
  %vm408 = vcmp.eq.f32.partialorder %v407, 8.507059e+37
  %v409 = vand.u32 %v397, 2147483648
  %v410 = vor.u32 1.1754944e-38, %v409
  %v411 = vsel %vm408, %v410, %v406
  %v412 = vmul.f32 1.0, %v411
  %v413 = vtanh.pop %v393
  %v414 = vmul.f32 %v412, %v358
  %416 = vrot.lane.b32.xlu0 %v413, 64
  %v417 = vpop.permute.xlu0 %416
  %v419 = vmul.f32 %v412, %v417
  %421 = vrot.lane.b32.xlu0 %v419, 32
  %v422 = vpop.permute.xlu0 %421
  %v424 = vadd.f32 %v414, %v422
  %v425 = vtanh.pop %v424
  %427 = vrot.lane.b32.xlu0 %v425, 64
  %v428 = vpop.permute.xlu0 %427
  %v430 = vmul.f32 %v412, %v428
  %432 = vrot.lane.b32.xlu0 %v430, 32
  %v433 = vpop.permute.xlu0 %432
  %435 = vst.msk [vmem:[#allocation5 + $0x8] sm:$0x3] %vm170, %v433
  %v436 = vld [vmem:[#allocation2 + $0xa] sm:$0x3]
  %v437 = vsel %vm104, %v433, 0
  %439 = vmatpush.msra.mxu0 0.0
  %440 = vmatpush.msra.mxu0 0.0
  %441 = vmatpush.msra.mxu0 0.0
  %442 = vmatpush.msra.mxu0 0.0
  %443 = vmatpush.msra.mxu0 0.0
  %444 = vmatpush.msra.mxu0 0.0
  %445 = vmatpush.msra.mxu0 0.0
  %446 = vmatpush.msra.mxu0 0.0
  %447 = vmatpush.msra.mxu0 0.0
  %448 = vmatpush.msra.mxu0 0.0
  %449 = vmatpush.msra.mxu0 0.0
  %450 = vmatpush.msra.mxu0 0.0
  %451 = vmatpush.msra.mxu0 %v102
  %452 = vmatpush.msra.mxu0 %v101
  %453 = vmatpush.msra.mxu0 %v100
  %454 = vmatpush.msra.mxu0 %v99
  %455 = vmatmul.f32.gmra.mxu0 %v437
  %v456 = vpop.f32.mrf.mxu0
  %v457 = vadd.f32 0.0, %v456
  %458 = vdwg.mxu0
  %v459 = vadd.f32 %v436, %v457
  %v460 = vxor.u32 %v459, 2147483648
  %v461 = vmul.f32 %v460, 1.442695
  %v462 = vpow.pop %v461
  %v463 = vadd.f32 %v462, 1.0
  %v464 = vrcp.pop %v463
  %v465 = vmul.f32 %v463, %v464
  %v466 = vsub.f32 1.0, %v465
  %v467 = vmul.f32 %v464, %v466
  %v468 = vadd.f32 %v464, %v467
  %vm469 = vweird.f32 %v463
  %vm470 = vweird.f32 %v464
  %vm471 = vmor %vm469, %vm470
  %v472 = vsel %vm471, %v464, %v468
  %v473 = vand.u32 2147483647, %v463
  %vm474 = vcmp.eq.f32.partialorder %v473, 8.507059e+37
  %v475 = vand.u32 %v463, 2147483648
  %v476 = vor.u32 1.1754944e-38, %v475
  %v477 = vsel %vm474, %v476, %v472
  %v478 = vmul.f32 1.0, %v477
  %v479 = vtanh.pop %v459
  %v480 = vmul.f32 %v478, %v424
  %482 = vrot.lane.b32.xlu0 %v479, 64
  %v483 = vpop.permute.xlu0 %482
  %v485 = vmul.f32 %v478, %v483
  %487 = vrot.lane.b32.xlu0 %v485, 32
  %v488 = vpop.permute.xlu0 %487
  %v490 = vadd.f32 %v480, %v488
  %v491 = vtanh.pop %v490
  %493 = vrot.lane.b32.xlu0 %v491, 64
  %v494 = vpop.permute.xlu0 %493
  %v496 = vmul.f32 %v478, %v494
  %498 = vrot.lane.b32.xlu0 %v496, 32
  %v499 = vpop.permute.xlu0 %498
  %501 = vst.msk [vmem:[#allocation5 + $0xa] sm:$0x3] %vm170, %v499
  %v502 = vld [vmem:[#allocation2 + $0xc] sm:$0x3]
  %v503 = vsel %vm104, %v499, 0
  %505 = vmatpush.msra.mxu0 0.0
  %506 = vmatpush.msra.mxu0 0.0
  %507 = vmatpush.msra.mxu0 0.0
  %508 = vmatpush.msra.mxu0 0.0
  %509 = vmatpush.msra.mxu0 0.0
  %510 = vmatpush.msra.mxu0 0.0
  %511 = vmatpush.msra.mxu0 0.0
  %512 = vmatpush.msra.mxu0 0.0
  %513 = vmatpush.msra.mxu0 0.0
  %514 = vmatpush.msra.mxu0 0.0
  %515 = vmatpush.msra.mxu0 0.0
  %516 = vmatpush.msra.mxu0 0.0
  %517 = vmatpush.msra.mxu0 %v102
  %518 = vmatpush.msra.mxu0 %v101
  %519 = vmatpush.msra.mxu0 %v100
  %520 = vmatpush.msra.mxu0 %v99
  %521 = vmatmul.f32.gmra.mxu0 %v503
  %v522 = vpop.f32.mrf.mxu0
  %v523 = vadd.f32 0.0, %v522
  %524 = vdwg.mxu0
  %v525 = vadd.f32 %v502, %v523
  %v526 = vxor.u32 %v525, 2147483648
  %v527 = vmul.f32 %v526, 1.442695
  %v528 = vpow.pop %v527
  %v529 = vadd.f32 %v528, 1.0
  %v530 = vrcp.pop %v529
  %v531 = vmul.f32 %v529, %v530
  %v532 = vsub.f32 1.0, %v531
  %v533 = vmul.f32 %v530, %v532
  %v534 = vadd.f32 %v530, %v533
  %vm535 = vweird.f32 %v529
  %vm536 = vweird.f32 %v530
  %vm537 = vmor %vm535, %vm536
  %v538 = vsel %vm537, %v530, %v534
  %v539 = vand.u32 2147483647, %v529
  %vm540 = vcmp.eq.f32.partialorder %v539, 8.507059e+37
  %v541 = vand.u32 %v529, 2147483648
  %v542 = vor.u32 1.1754944e-38, %v541
  %v543 = vsel %vm540, %v542, %v538
  %v544 = vmul.f32 1.0, %v543
  %v545 = vtanh.pop %v525
  %v546 = vmul.f32 %v544, %v490
  %548 = vrot.lane.b32.xlu0 %v545, 64
  %v549 = vpop.permute.xlu0 %548
  %v551 = vmul.f32 %v544, %v549
  %553 = vrot.lane.b32.xlu0 %v551, 32
  %v554 = vpop.permute.xlu0 %553
  %v556 = vadd.f32 %v546, %v554
  %v557 = vtanh.pop %v556
  %559 = vrot.lane.b32.xlu0 %v557, 64
  %v560 = vpop.permute.xlu0 %559
  %v562 = vmul.f32 %v544, %v560
  %564 = vrot.lane.b32.xlu0 %v562, 32
  %v565 = vpop.permute.xlu0 %564
  %567 = vst.msk [vmem:[#allocation5 + $0xc] sm:$0x3] %vm170, %v565
  %v568 = vld [vmem:[#allocation2 + $0xe] sm:$0x3]
  %v569 = vsel %vm104, %v565, 0
  %571 = vmatpush.msra.mxu0 0.0
  %572 = vmatpush.msra.mxu0 0.0
  %573 = vmatpush.msra.mxu0 0.0
  %574 = vmatpush.msra.mxu0 0.0
  %575 = vmatpush.msra.mxu0 0.0
  %576 = vmatpush.msra.mxu0 0.0
  %577 = vmatpush.msra.mxu0 0.0
  %578 = vmatpush.msra.mxu0 0.0
  %579 = vmatpush.msra.mxu0 0.0
  %580 = vmatpush.msra.mxu0 0.0
  %581 = vmatpush.msra.mxu0 0.0
  %582 = vmatpush.msra.mxu0 0.0
  %583 = vmatpush.msra.mxu0 %v102
  %584 = vmatpush.msra.mxu0 %v101
  %585 = vmatpush.msra.mxu0 %v100
  %586 = vmatpush.msra.mxu0 %v99
  %587 = vmatmul.f32.gmra.mxu0 %v569
  %v588 = vpop.f32.mrf.mxu0
  %v589 = vadd.f32 0.0, %v588
  %590 = vdwg.mxu0
  %v591 = vadd.f32 %v568, %v589
  %v592 = vxor.u32 %v591, 2147483648
  %v593 = vmul.f32 %v592, 1.442695
  %v594 = vpow.pop %v593
  %v595 = vadd.f32 %v594, 1.0
  %v596 = vrcp.pop %v595
  %v597 = vmul.f32 %v595, %v596
  %v598 = vsub.f32 1.0, %v597
  %v599 = vmul.f32 %v596, %v598
  %v600 = vadd.f32 %v596, %v599
  %vm601 = vweird.f32 %v595
  %vm602 = vweird.f32 %v596
  %vm603 = vmor %vm601, %vm602
  %v604 = vsel %vm603, %v596, %v600
  %v605 = vand.u32 2147483647, %v595
  %vm606 = vcmp.eq.f32.partialorder %v605, 8.507059e+37
  %v607 = vand.u32 %v595, 2147483648
  %v608 = vor.u32 1.1754944e-38, %v607
  %v609 = vsel %vm606, %v608, %v604
  %v610 = vmul.f32 1.0, %v609
  %v611 = vtanh.pop %v591
  %v612 = vmul.f32 %v610, %v556
  %614 = vrot.lane.b32.xlu0 %v611, 64
  %v615 = vpop.permute.xlu0 %614
  %v617 = vmul.f32 %v610, %v615
  %619 = vrot.lane.b32.xlu0 %v617, 32
  %v620 = vpop.permute.xlu0 %619
  %v622 = vadd.f32 %v612, %v620
  %v623 = vtanh.pop %v622
  %625 = vrot.lane.b32.xlu0 %v623, 64
  %v626 = vpop.permute.xlu0 %625
  %v628 = vmul.f32 %v610, %v626
  %630 = vrot.lane.b32.xlu0 %v628, 32
  %v631 = vpop.permute.xlu0 %630
  %633 = vst.msk [vmem:[#allocation5 + $0xe] sm:$0x3] %vm170, %v631
  %v634 = vld [vmem:[%s0] sm:$0xff]
  %v635 = vld [vmem:[%s0 + $0x8] sm:$0xff]
  %v636 = vld [vmem:[%s4] sm:$0xff]
  %v637 = vld [vmem:[%s4 + $0x8] sm:$0xff]
  %v638 = vld [vmem:[%s6] sm:$0x1]
  %v640 = vperm.slane %v638, 0
  %v643 = vsel %vm67, %v634, 0
  %v646 = vsel %vm67, %v635, 0
  %648 = vmatpush.msra.mxu0 0.0
  %649 = vmatpush.msra.mxu0 0.0
  %650 = vmatpush.msra.mxu0 0.0
  %651 = vmatpush.msra.mxu0 0.0
  %652 = vmatpush.msra.mxu0 0.0
  %653 = vmatpush.msra.mxu0 0.0
  %654 = vmatpush.msra.mxu0 0.0
  %655 = vmatpush.msra.mxu0 0.0
  %656 = vmatpush.msra.mxu0 0.0
  %657 = vmatpush.msra.mxu0 0.0
  %658 = vmatpush.msra.mxu0 0.0
  %659 = vmatpush.msra.mxu0 0.0
  %660 = vmatpush.msra.mxu0 0.0
  %661 = vmatpush.msra.mxu0 0.0
  %662 = vmatpush.msra.mxu0 %v637
  %663 = vmatpush.msra.mxu0 %v636
  %664 = vmatmul.f32.gmra.mxu0 %v643
  %v665 = vpop.f32.mrf.mxu0
  %v666 = vadd.f32 %v640, %v665
  %667 = vmatmul.f32.gmra.mxu0 %v646
  %v668 = vpop.f32.mrf.mxu0
  %v669 = vadd.f32 %v640, %v668
  %670 = vdwg.mxu0
  %671 = vst [vmem:[#allocation2] sm:$0xff] %v666
  %672 = vst [vmem:[#allocation2 + $0x8] sm:$0xff] %v669
  %v673 = vld [vmem:[%s5] sm:$0xff]
  %v674 = vld [vmem:[%s5 + $0x8] sm:$0xff]
  %v675 = vld [vmem:[%s5 + $0x10] sm:$0xff]
  %v676 = vld [vmem:[%s5 + $0x18] sm:$0xff]
  %v677 = vld [vmem:[#allocation2 + $0xe] sm:$0x3]
  %678 = vmatpush.msra.mxu0 0.0
  %679 = vmatpush.msra.mxu0 0.0
  %680 = vmatpush.msra.mxu0 0.0
  %681 = vmatpush.msra.mxu0 0.0
  %682 = vmatpush.msra.mxu0 0.0
  %683 = vmatpush.msra.mxu0 0.0
  %684 = vmatpush.msra.mxu0 0.0
  %685 = vmatpush.msra.mxu0 0.0
  %686 = vmatpush.msra.mxu0 0.0
  %687 = vmatpush.msra.mxu0 0.0
  %688 = vmatpush.msra.mxu0 0.0
  %689 = vmatpush.msra.mxu0 0.0
  %690 = vmatpush.msra.mxu0 %v676
  %691 = vmatpush.msra.mxu0 %v675
  %692 = vmatpush.msra.mxu0 %v674
  %693 = vmatpush.msra.mxu0 %v673
  %694 = vmatmul.f32.gmra.mxu0 %v106
  %v695 = vpop.f32.mrf.mxu0
  %v696 = vadd.f32 0.0, %v695
  %697 = vdwg.mxu0
  %v698 = vadd.f32 %v677, %v696
  %v699 = vxor.u32 %v698, 2147483648
  %v700 = vmul.f32 %v699, 1.442695
  %v701 = vpow.pop %v700
  %v702 = vadd.f32 %v701, 1.0
  %v703 = vrcp.pop %v702
  %v704 = vmul.f32 %v702, %v703
  %v705 = vsub.f32 1.0, %v704
  %v706 = vmul.f32 %v703, %v705
  %v707 = vadd.f32 %v703, %v706
  %vm708 = vweird.f32 %v702
  %vm709 = vweird.f32 %v703
  %vm710 = vmor %vm708, %vm709
  %v711 = vsel %vm710, %v703, %v707
  %v712 = vand.u32 2147483647, %v702
  %vm713 = vcmp.eq.f32.partialorder %v712, 8.507059e+37
  %v714 = vand.u32 %v702, 2147483648
  %v715 = vor.u32 1.1754944e-38, %v714
  %v716 = vsel %vm713, %v715, %v711
  %v717 = vmul.f32 1.0, %v716
  %v718 = vtanh.pop %v698
  %v719 = vmul.f32 %v717, 0.0
  %721 = vrot.lane.b32.xlu0 %v718, 64
  %v722 = vpop.permute.xlu0 %721
  %v724 = vmul.f32 %v717, %v722
  %726 = vrot.lane.b32.xlu0 %v724, 32
  %v727 = vpop.permute.xlu0 %726
  %v729 = vadd.f32 %v719, %v727
  %v730 = vtanh.pop %v729
  %732 = vrot.lane.b32.xlu0 %v730, 64
  %v733 = vpop.permute.xlu0 %732
  %v735 = vmul.f32 %v717, %v733
  %737 = vrot.lane.b32.xlu0 %v735, 32
  %v738 = vpop.permute.xlu0 %737
  %740 = vst.msk [vmem:[#allocation6 + $0xe] sm:$0x3] %vm170, %v738
  %v741 = vld [vmem:[#allocation2 + $0xc] sm:$0x3]
  %v742 = vsel %vm104, %v738, 0
  %744 = vmatpush.msra.mxu0 0.0
  %745 = vmatpush.msra.mxu0 0.0
  %746 = vmatpush.msra.mxu0 0.0
  %747 = vmatpush.msra.mxu0 0.0
  %748 = vmatpush.msra.mxu0 0.0
  %749 = vmatpush.msra.mxu0 0.0
  %750 = vmatpush.msra.mxu0 0.0
  %751 = vmatpush.msra.mxu0 0.0
  %752 = vmatpush.msra.mxu0 0.0
  %753 = vmatpush.msra.mxu0 0.0
  %754 = vmatpush.msra.mxu0 0.0
  %755 = vmatpush.msra.mxu0 0.0
  %756 = vmatpush.msra.mxu0 %v676
  %757 = vmatpush.msra.mxu0 %v675
  %758 = vmatpush.msra.mxu0 %v674
  %759 = vmatpush.msra.mxu0 %v673
  %760 = vmatmul.f32.gmra.mxu0 %v742
  %v761 = vpop.f32.mrf.mxu0
  %v762 = vadd.f32 0.0, %v761
  %763 = vdwg.mxu0
  %v764 = vadd.f32 %v741, %v762
  %v765 = vxor.u32 %v764, 2147483648
  %v766 = vmul.f32 %v765, 1.442695
  %v767 = vpow.pop %v766
  %v768 = vadd.f32 %v767, 1.0
  %v769 = vrcp.pop %v768
  %v770 = vmul.f32 %v768, %v769
  %v771 = vsub.f32 1.0, %v770
  %v772 = vmul.f32 %v769, %v771
  %v773 = vadd.f32 %v769, %v772
  %vm774 = vweird.f32 %v768
  %vm775 = vweird.f32 %v769
  %vm776 = vmor %vm774, %vm775
  %v777 = vsel %vm776, %v769, %v773
  %v778 = vand.u32 2147483647, %v768
  %vm779 = vcmp.eq.f32.partialorder %v778, 8.507059e+37
  %v780 = vand.u32 %v768, 2147483648
  %v781 = vor.u32 1.1754944e-38, %v780
  %v782 = vsel %vm779, %v781, %v777
  %v783 = vmul.f32 1.0, %v782
  %v784 = vtanh.pop %v764
  %v785 = vmul.f32 %v783, %v729
  %787 = vrot.lane.b32.xlu0 %v784, 64
  %v788 = vpop.permute.xlu0 %787
  %v790 = vmul.f32 %v783, %v788
  %792 = vrot.lane.b32.xlu0 %v790, 32
  %v793 = vpop.permute.xlu0 %792
  %v795 = vadd.f32 %v785, %v793
  %v796 = vtanh.pop %v795
  %798 = vrot.lane.b32.xlu0 %v796, 64
  %v799 = vpop.permute.xlu0 %798
  %v801 = vmul.f32 %v783, %v799
  %803 = vrot.lane.b32.xlu0 %v801, 32
  %v804 = vpop.permute.xlu0 %803
  %806 = vst.msk [vmem:[#allocation6 + $0xc] sm:$0x3] %vm170, %v804
  %v807 = vld [vmem:[#allocation2 + $0xa] sm:$0x3]
  %v808 = vsel %vm104, %v804, 0
  %810 = vmatpush.msra.mxu0 0.0
  %811 = vmatpush.msra.mxu0 0.0
  %812 = vmatpush.msra.mxu0 0.0
  %813 = vmatpush.msra.mxu0 0.0
  %814 = vmatpush.msra.mxu0 0.0
  %815 = vmatpush.msra.mxu0 0.0
  %816 = vmatpush.msra.mxu0 0.0
  %817 = vmatpush.msra.mxu0 0.0
  %818 = vmatpush.msra.mxu0 0.0
  %819 = vmatpush.msra.mxu0 0.0
  %820 = vmatpush.msra.mxu0 0.0
  %821 = vmatpush.msra.mxu0 0.0
  %822 = vmatpush.msra.mxu0 %v676
  %823 = vmatpush.msra.mxu0 %v675
  %824 = vmatpush.msra.mxu0 %v674
  %825 = vmatpush.msra.mxu0 %v673
  %826 = vmatmul.f32.gmra.mxu0 %v808
  %v827 = vpop.f32.mrf.mxu0
  %v828 = vadd.f32 0.0, %v827
  %829 = vdwg.mxu0
  %v830 = vadd.f32 %v807, %v828
  %v831 = vxor.u32 %v830, 2147483648
  %v832 = vmul.f32 %v831, 1.442695
  %v833 = vpow.pop %v832
  %v834 = vadd.f32 %v833, 1.0
  %v835 = vrcp.pop %v834
  %v836 = vmul.f32 %v834, %v835
  %v837 = vsub.f32 1.0, %v836
  %v838 = vmul.f32 %v835, %v837
  %v839 = vadd.f32 %v835, %v838
  %vm840 = vweird.f32 %v834
  %vm841 = vweird.f32 %v835
  %vm842 = vmor %vm840, %vm841
  %v843 = vsel %vm842, %v835, %v839
  %v844 = vand.u32 2147483647, %v834
  %vm845 = vcmp.eq.f32.partialorder %v844, 8.507059e+37
  %v846 = vand.u32 %v834, 2147483648
  %v847 = vor.u32 1.1754944e-38, %v846
  %v848 = vsel %vm845, %v847, %v843
  %v849 = vmul.f32 1.0, %v848
  %v850 = vtanh.pop %v830
  %v851 = vmul.f32 %v849, %v795
  %853 = vrot.lane.b32.xlu0 %v850, 64
  %v854 = vpop.permute.xlu0 %853
  %v856 = vmul.f32 %v849, %v854
  %858 = vrot.lane.b32.xlu0 %v856, 32
  %v859 = vpop.permute.xlu0 %858
  %v861 = vadd.f32 %v851, %v859
  %v862 = vtanh.pop %v861
  %864 = vrot.lane.b32.xlu0 %v862, 64
  %v865 = vpop.permute.xlu0 %864
  %v867 = vmul.f32 %v849, %v865
  %869 = vrot.lane.b32.xlu0 %v867, 32
  %v870 = vpop.permute.xlu0 %869
  %872 = vst.msk [vmem:[#allocation6 + $0xa] sm:$0x3] %vm170, %v870
  %v873 = vld [vmem:[#allocation2 + $0x8] sm:$0x3]
  %v874 = vsel %vm104, %v870, 0
  %876 = vmatpush.msra.mxu0 0.0
  %877 = vmatpush.msra.mxu0 0.0
  %878 = vmatpush.msra.mxu0 0.0
  %879 = vmatpush.msra.mxu0 0.0
  %880 = vmatpush.msra.mxu0 0.0
  %881 = vmatpush.msra.mxu0 0.0
  %882 = vmatpush.msra.mxu0 0.0
  %883 = vmatpush.msra.mxu0 0.0
  %884 = vmatpush.msra.mxu0 0.0
  %885 = vmatpush.msra.mxu0 0.0
  %886 = vmatpush.msra.mxu0 0.0
  %887 = vmatpush.msra.mxu0 0.0
  %888 = vmatpush.msra.mxu0 %v676
  %889 = vmatpush.msra.mxu0 %v675
  %890 = vmatpush.msra.mxu0 %v674
  %891 = vmatpush.msra.mxu0 %v673
  %892 = vmatmul.f32.gmra.mxu0 %v874
  %v893 = vpop.f32.mrf.mxu0
  %v894 = vadd.f32 0.0, %v893
  %895 = vdwg.mxu0
  %v896 = vadd.f32 %v873, %v894
  %v897 = vxor.u32 %v896, 2147483648
  %v898 = vmul.f32 %v897, 1.442695
  %v899 = vpow.pop %v898
  %v900 = vadd.f32 %v899, 1.0
  %v901 = vrcp.pop %v900
  %v902 = vmul.f32 %v900, %v901
  %v903 = vsub.f32 1.0, %v902
  %v904 = vmul.f32 %v901, %v903
  %v905 = vadd.f32 %v901, %v904
  %vm906 = vweird.f32 %v900
  %vm907 = vweird.f32 %v901
  %vm908 = vmor %vm906, %vm907
  %v909 = vsel %vm908, %v901, %v905
  %v910 = vand.u32 2147483647, %v900
  %vm911 = vcmp.eq.f32.partialorder %v910, 8.507059e+37
  %v912 = vand.u32 %v900, 2147483648
  %v913 = vor.u32 1.1754944e-38, %v912
  %v914 = vsel %vm911, %v913, %v909
  %v915 = vmul.f32 1.0, %v914
  %v916 = vtanh.pop %v896
  %v917 = vmul.f32 %v915, %v861
  %919 = vrot.lane.b32.xlu0 %v916, 64
  %v920 = vpop.permute.xlu0 %919
  %v922 = vmul.f32 %v915, %v920
  %924 = vrot.lane.b32.xlu0 %v922, 32
  %v925 = vpop.permute.xlu0 %924
  %v927 = vadd.f32 %v917, %v925
  %v928 = vtanh.pop %v927
  %930 = vrot.lane.b32.xlu0 %v928, 64
  %v931 = vpop.permute.xlu0 %930
  %v933 = vmul.f32 %v915, %v931
  %935 = vrot.lane.b32.xlu0 %v933, 32
  %v936 = vpop.permute.xlu0 %935
  %938 = vst.msk [vmem:[#allocation6 + $0x8] sm:$0x3] %vm170, %v936
  %v939 = vld [vmem:[#allocation2 + $0x6] sm:$0x3]
  %v940 = vsel %vm104, %v936, 0
  %942 = vmatpush.msra.mxu0 0.0
  %943 = vmatpush.msra.mxu0 0.0
  %944 = vmatpush.msra.mxu0 0.0
  %945 = vmatpush.msra.mxu0 0.0
  %946 = vmatpush.msra.mxu0 0.0
  %947 = vmatpush.msra.mxu0 0.0
  %948 = vmatpush.msra.mxu0 0.0
  %949 = vmatpush.msra.mxu0 0.0
  %950 = vmatpush.msra.mxu0 0.0
  %951 = vmatpush.msra.mxu0 0.0
  %952 = vmatpush.msra.mxu0 0.0
  %953 = vmatpush.msra.mxu0 0.0
  %954 = vmatpush.msra.mxu0 %v676
  %955 = vmatpush.msra.mxu0 %v675
  %956 = vmatpush.msra.mxu0 %v674
  %957 = vmatpush.msra.mxu0 %v673
  %958 = vmatmul.f32.gmra.mxu0 %v940
  %v959 = vpop.f32.mrf.mxu0
  %v960 = vadd.f32 0.0, %v959
  %961 = vdwg.mxu0
  %v962 = vadd.f32 %v939, %v960
  %v963 = vxor.u32 %v962, 2147483648
  %v964 = vmul.f32 %v963, 1.442695
  %v965 = vpow.pop %v964
  %v966 = vadd.f32 %v965, 1.0
  %v967 = vrcp.pop %v966
  %v968 = vmul.f32 %v966, %v967
  %v969 = vsub.f32 1.0, %v968
  %v970 = vmul.f32 %v967, %v969
  %v971 = vadd.f32 %v967, %v970
  %vm972 = vweird.f32 %v966
  %vm973 = vweird.f32 %v967
  %vm974 = vmor %vm972, %vm973
  %v975 = vsel %vm974, %v967, %v971
  %v976 = vand.u32 2147483647, %v966
  %vm977 = vcmp.eq.f32.partialorder %v976, 8.507059e+37
  %v978 = vand.u32 %v966, 2147483648
  %v979 = vor.u32 1.1754944e-38, %v978
  %v980 = vsel %vm977, %v979, %v975
  %v981 = vmul.f32 1.0, %v980
  %v982 = vtanh.pop %v962
  %v983 = vmul.f32 %v981, %v927
  %985 = vrot.lane.b32.xlu0 %v982, 64
  %v986 = vpop.permute.xlu0 %985
  %v988 = vmul.f32 %v981, %v986
  %990 = vrot.lane.b32.xlu0 %v988, 32
  %v991 = vpop.permute.xlu0 %990
  %v993 = vadd.f32 %v983, %v991
  %v994 = vtanh.pop %v993
  %996 = vrot.lane.b32.xlu0 %v994, 64
  %v997 = vpop.permute.xlu0 %996
  %v999 = vmul.f32 %v981, %v997
  %1001 = vrot.lane.b32.xlu0 %v999, 32
  %v1002 = vpop.permute.xlu0 %1001
  %1004 = vst.msk [vmem:[#allocation6 + $0x6] sm:$0x3] %vm170, %v1002
  %v1005 = vld [vmem:[#allocation2 + $0x4] sm:$0x3]
  %v1006 = vsel %vm104, %v1002, 0
  %1008 = vmatpush.msra.mxu0 0.0
  %1009 = vmatpush.msra.mxu0 0.0
  %1010 = vmatpush.msra.mxu0 0.0
  %1011 = vmatpush.msra.mxu0 0.0
  %1012 = vmatpush.msra.mxu0 0.0
  %1013 = vmatpush.msra.mxu0 0.0
  %1014 = vmatpush.msra.mxu0 0.0
  %1015 = vmatpush.msra.mxu0 0.0
  %1016 = vmatpush.msra.mxu0 0.0
  %1017 = vmatpush.msra.mxu0 0.0
  %1018 = vmatpush.msra.mxu0 0.0
  %1019 = vmatpush.msra.mxu0 0.0
  %1020 = vmatpush.msra.mxu0 %v676
  %1021 = vmatpush.msra.mxu0 %v675
  %1022 = vmatpush.msra.mxu0 %v674
  %1023 = vmatpush.msra.mxu0 %v673
  %1024 = vmatmul.f32.gmra.mxu0 %v1006
  %v1025 = vpop.f32.mrf.mxu0
  %v1026 = vadd.f32 0.0, %v1025
  %1027 = vdwg.mxu0
  %v1028 = vadd.f32 %v1005, %v1026
  %v1029 = vxor.u32 %v1028, 2147483648
  %v1030 = vmul.f32 %v1029, 1.442695
  %v1031 = vpow.pop %v1030
  %v1032 = vadd.f32 %v1031, 1.0
  %v1033 = vrcp.pop %v1032
  %v1034 = vmul.f32 %v1032, %v1033
  %v1035 = vsub.f32 1.0, %v1034
  %v1036 = vmul.f32 %v1033, %v1035
  %v1037 = vadd.f32 %v1033, %v1036
  %vm1038 = vweird.f32 %v1032
  %vm1039 = vweird.f32 %v1033
  %vm1040 = vmor %vm1038, %vm1039
  %v1041 = vsel %vm1040, %v1033, %v1037
  %v1042 = vand.u32 2147483647, %v1032
  %vm1043 = vcmp.eq.f32.partialorder %v1042, 8.507059e+37
  %v1044 = vand.u32 %v1032, 2147483648
  %v1045 = vor.u32 1.1754944e-38, %v1044
  %v1046 = vsel %vm1043, %v1045, %v1041
  %v1047 = vmul.f32 1.0, %v1046
  %v1048 = vtanh.pop %v1028
  %v1049 = vmul.f32 %v1047, %v993
  %1051 = vrot.lane.b32.xlu0 %v1048, 64
  %v1052 = vpop.permute.xlu0 %1051
  %v1054 = vmul.f32 %v1047, %v1052
  %1056 = vrot.lane.b32.xlu0 %v1054, 32
  %v1057 = vpop.permute.xlu0 %1056
  %v1059 = vadd.f32 %v1049, %v1057
  %v1060 = vtanh.pop %v1059
  %1062 = vrot.lane.b32.xlu0 %v1060, 64
  %v1063 = vpop.permute.xlu0 %1062
  %v1065 = vmul.f32 %v1047, %v1063
  %1067 = vrot.lane.b32.xlu0 %v1065, 32
  %v1068 = vpop.permute.xlu0 %1067
  %1070 = vst.msk [vmem:[#allocation6 + $0x4] sm:$0x3] %vm170, %v1068
  %v1071 = vld [vmem:[#allocation2 + $0x2] sm:$0x3]
  %v1072 = vsel %vm104, %v1068, 0
  %1074 = vmatpush.msra.mxu0 0.0
  %1075 = vmatpush.msra.mxu0 0.0
  %1076 = vmatpush.msra.mxu0 0.0
  %1077 = vmatpush.msra.mxu0 0.0
  %1078 = vmatpush.msra.mxu0 0.0
  %1079 = vmatpush.msra.mxu0 0.0
  %1080 = vmatpush.msra.mxu0 0.0
  %1081 = vmatpush.msra.mxu0 0.0
  %1082 = vmatpush.msra.mxu0 0.0
  %1083 = vmatpush.msra.mxu0 0.0
  %1084 = vmatpush.msra.mxu0 0.0
  %1085 = vmatpush.msra.mxu0 0.0
  %1086 = vmatpush.msra.mxu0 %v676
  %1087 = vmatpush.msra.mxu0 %v675
  %1088 = vmatpush.msra.mxu0 %v674
  %1089 = vmatpush.msra.mxu0 %v673
  %1090 = vmatmul.f32.gmra.mxu0 %v1072
  %v1091 = vpop.f32.mrf.mxu0
  %v1092 = vadd.f32 0.0, %v1091
  %1093 = vdwg.mxu0
  %v1094 = vadd.f32 %v1071, %v1092
  %v1095 = vxor.u32 %v1094, 2147483648
  %v1096 = vmul.f32 %v1095, 1.442695
  %v1097 = vpow.pop %v1096
  %v1098 = vadd.f32 %v1097, 1.0
  %v1099 = vrcp.pop %v1098
  %v1100 = vmul.f32 %v1098, %v1099
  %v1101 = vsub.f32 1.0, %v1100
  %v1102 = vmul.f32 %v1099, %v1101
  %v1103 = vadd.f32 %v1099, %v1102
  %vm1104 = vweird.f32 %v1098
  %vm1105 = vweird.f32 %v1099
  %vm1106 = vmor %vm1104, %vm1105
  %v1107 = vsel %vm1106, %v1099, %v1103
  %v1108 = vand.u32 2147483647, %v1098
  %vm1109 = vcmp.eq.f32.partialorder %v1108, 8.507059e+37
  %v1110 = vand.u32 %v1098, 2147483648
  %v1111 = vor.u32 1.1754944e-38, %v1110
  %v1112 = vsel %vm1109, %v1111, %v1107
  %v1113 = vmul.f32 1.0, %v1112
  %v1114 = vtanh.pop %v1094
  %v1115 = vmul.f32 %v1113, %v1059
  %1117 = vrot.lane.b32.xlu0 %v1114, 64
  %v1118 = vpop.permute.xlu0 %1117
  %v1120 = vmul.f32 %v1113, %v1118
  %1122 = vrot.lane.b32.xlu0 %v1120, 32
  %v1123 = vpop.permute.xlu0 %1122
  %v1125 = vadd.f32 %v1115, %v1123
  %v1126 = vtanh.pop %v1125
  %1128 = vrot.lane.b32.xlu0 %v1126, 64
  %v1129 = vpop.permute.xlu0 %1128
  %v1131 = vmul.f32 %v1113, %v1129
  %1133 = vrot.lane.b32.xlu0 %v1131, 32
  %v1134 = vpop.permute.xlu0 %1133
  %1136 = vst.msk [vmem:[#allocation6 + $0x2] sm:$0x3] %vm170, %v1134
  %v1137 = vld [vmem:[#allocation2] sm:$0x3]
  %v1138 = vsel %vm104, %v1134, 0
  %1140 = vmatpush.msra.mxu0 0.0
  %1141 = vmatpush.msra.mxu0 0.0
  %1142 = vmatpush.msra.mxu0 0.0
  %1143 = vmatpush.msra.mxu0 0.0
  %1144 = vmatpush.msra.mxu0 0.0
  %1145 = vmatpush.msra.mxu0 0.0
  %1146 = vmatpush.msra.mxu0 0.0
  %1147 = vmatpush.msra.mxu0 0.0
  %1148 = vmatpush.msra.mxu0 0.0
  %1149 = vmatpush.msra.mxu0 0.0
  %1150 = vmatpush.msra.mxu0 0.0
  %1151 = vmatpush.msra.mxu0 0.0
  %1152 = vmatpush.msra.mxu0 %v676
  %1153 = vmatpush.msra.mxu0 %v675
  %1154 = vmatpush.msra.mxu0 %v674
  %1155 = vmatpush.msra.mxu0 %v673
  %1156 = vmatmul.f32.gmra.mxu0 %v1138
  %v1157 = vpop.f32.mrf.mxu0
  %v1158 = vadd.f32 0.0, %v1157
  %1159 = vdwg.mxu0
  %v1160 = vadd.f32 %v1137, %v1158
  %v1161 = vxor.u32 %v1160, 2147483648
  %v1162 = vmul.f32 %v1161, 1.442695
  %v1163 = vpow.pop %v1162
  %v1164 = vadd.f32 %v1163, 1.0
  %v1165 = vrcp.pop %v1164
  %v1166 = vmul.f32 %v1164, %v1165
  %v1167 = vsub.f32 1.0, %v1166
  %v1168 = vmul.f32 %v1165, %v1167
  %v1169 = vadd.f32 %v1165, %v1168
  %vm1170 = vweird.f32 %v1164
  %vm1171 = vweird.f32 %v1165
  %vm1172 = vmor %vm1170, %vm1171
  %v1173 = vsel %vm1172, %v1165, %v1169
  %v1174 = vand.u32 2147483647, %v1164
  %vm1175 = vcmp.eq.f32.partialorder %v1174, 8.507059e+37
  %v1176 = vand.u32 %v1164, 2147483648
  %v1177 = vor.u32 1.1754944e-38, %v1176
  %v1178 = vsel %vm1175, %v1177, %v1173
  %v1179 = vmul.f32 1.0, %v1178
  %v1180 = vtanh.pop %v1160
  %v1181 = vmul.f32 %v1179, %v1125
  %1183 = vrot.lane.b32.xlu0 %v1180, 64
  %v1184 = vpop.permute.xlu0 %1183
  %v1186 = vmul.f32 %v1179, %v1184
  %1188 = vrot.lane.b32.xlu0 %v1186, 32
  %v1189 = vpop.permute.xlu0 %1188
  %v1191 = vadd.f32 %v1181, %v1189
  %v1192 = vtanh.pop %v1191
  %1194 = vrot.lane.b32.xlu0 %v1192, 64
  %v1195 = vpop.permute.xlu0 %1194
  %v1197 = vmul.f32 %v1179, %v1195
  %1199 = vrot.lane.b32.xlu0 %v1197, 32
  %v1200 = vpop.permute.xlu0 %1199
  %1202 = vst.msk [vmem:[#allocation6] sm:$0x3] %vm170, %v1200
  %v1203 = vld [vmem:[#allocation5] sm:$0xff]
  %v1204 = vld [vmem:[#allocation5 + $0x8] sm:$0xff]
  %v1205 = vld [vmem:[#allocation6] sm:$0xff]
  %v1206 = vld [vmem:[#allocation6 + $0x8] sm:$0xff]
  %v1207 = vld [vmem:[%s7] sm:$0xff]
  %v1208 = vld [vmem:[%s7 + $0x8] sm:$0xff]
  %v1209 = vld [vmem:[%s7 + $0x10] sm:$0xff]
  %v1210 = vld [vmem:[%s7 + $0x18] sm:$0xff]
  %v1211 = vld [vmem:[%s8] sm:$0xff]
  %v1212 = vld [vmem:[%s8 + $0x8] sm:$0xff]
  %v1213 = vld [vmem:[%s8 + $0x10] sm:$0xff]
  %v1214 = vld [vmem:[%s8 + $0x18] sm:$0xff]
  %v1216 = vsel %vm104, %v1205, 0
  %v1219 = vsel %vm104, %v1206, 0
  %1221 = vmatpush.msra.mxu0 0.0
  %1222 = vmatpush.msra.mxu0 0.0
  %1223 = vmatpush.msra.mxu0 0.0
  %1224 = vmatpush.msra.mxu0 0.0
  %1225 = vmatpush.msra.mxu0 0.0
  %1226 = vmatpush.msra.mxu0 0.0
  %1227 = vmatpush.msra.mxu0 0.0
  %1228 = vmatpush.msra.mxu0 0.0
  %1229 = vmatpush.msra.mxu0 0.0
  %1230 = vmatpush.msra.mxu0 0.0
  %1231 = vmatpush.msra.mxu0 0.0
  %1232 = vmatpush.msra.mxu0 0.0
  %1233 = vmatpush.msra.mxu0 %v1214
  %1234 = vmatpush.msra.mxu0 %v1213
  %1235 = vmatpush.msra.mxu0 %v1212
  %1236 = vmatpush.msra.mxu0 %v1211
  %1237 = vmatmul.f32.gmra.mxu0 %v1216
  %v1238 = vpop.f32.mrf.mxu0
  %v1239 = vadd.f32 0.0, %v1238
  %1240 = vmatmul.f32.gmra.mxu0 %v1219
  %v1241 = vpop.f32.mrf.mxu0
  %v1242 = vadd.f32 0.0, %v1241
  %1243 = vdwg.mxu0
  %v1245 = vsel %vm104, %v1203, 0
  %v1248 = vsel %vm104, %v1204, 0
  %1250 = vmatpush.msra.mxu0 0.0
  %1251 = vmatpush.msra.mxu0 0.0
  %1252 = vmatpush.msra.mxu0 0.0
  %1253 = vmatpush.msra.mxu0 0.0
  %1254 = vmatpush.msra.mxu0 0.0
  %1255 = vmatpush.msra.mxu0 0.0
  %1256 = vmatpush.msra.mxu0 0.0
  %1257 = vmatpush.msra.mxu0 0.0
  %1258 = vmatpush.msra.mxu0 0.0
  %1259 = vmatpush.msra.mxu0 0.0
  %1260 = vmatpush.msra.mxu0 0.0
  %1261 = vmatpush.msra.mxu0 0.0
  %1262 = vmatpush.msra.mxu0 %v1210
  %1263 = vmatpush.msra.mxu0 %v1209
  %1264 = vmatpush.msra.mxu0 %v1208
  %1265 = vmatpush.msra.mxu0 %v1207
  %1266 = vmatmul.f32.gmra.mxu0 %v1245
  %v1267 = vpop.f32.mrf.mxu0
  %v1268 = vadd.f32 %v1239, %v1267
  %1269 = vmatmul.f32.gmra.mxu0 %v1248
  %v1270 = vpop.f32.mrf.mxu0
  %v1271 = vadd.f32 %v1242, %v1270
  %1272 = vdwg.mxu0
  %v1273 = vld [vmem:[%s10] sm:$0x1]
  %v1275 = vperm.slane %v1273, 0
  %v1277 = vadd.f32 %v1268, %v1275
  %v1278 = vadd.f32 %v1271, %v1275
  %1279 = vst [vmem:[#allocation2] sm:$0xff] %v1277
  %1280 = vst [vmem:[#allocation2 + $0x8] sm:$0xff] %v1278
  %v1281 = vld [vmem:[%s9] sm:$0xff]
  %v1282 = vld [vmem:[%s9 + $0x8] sm:$0xff]
  %v1283 = vld [vmem:[%s9 + $0x10] sm:$0xff]
  %v1284 = vld [vmem:[%s9 + $0x18] sm:$0xff]
  %v1285 = vld [vmem:[#allocation2] sm:$0x3]
  %1286 = vmatpush.msra.mxu0 0.0
  %1287 = vmatpush.msra.mxu0 0.0
  %1288 = vmatpush.msra.mxu0 0.0
  %1289 = vmatpush.msra.mxu0 0.0
  %1290 = vmatpush.msra.mxu0 0.0
  %1291 = vmatpush.msra.mxu0 0.0
  %1292 = vmatpush.msra.mxu0 0.0
  %1293 = vmatpush.msra.mxu0 0.0
  %1294 = vmatpush.msra.mxu0 0.0
  %1295 = vmatpush.msra.mxu0 0.0
  %1296 = vmatpush.msra.mxu0 0.0
  %1297 = vmatpush.msra.mxu0 0.0
  %1298 = vmatpush.msra.mxu0 %v1284
  %1299 = vmatpush.msra.mxu0 %v1283
  %1300 = vmatpush.msra.mxu0 %v1282
  %1301 = vmatpush.msra.mxu0 %v1281
  %1302 = vmatmul.f32.gmra.mxu0 %v106
  %v1303 = vpop.f32.mrf.mxu0
  %v1304 = vadd.f32 0.0, %v1303
  %1305 = vdwg.mxu0
  %v1306 = vadd.f32 %v1285, %v1304
  %v1307 = vxor.u32 %v1306, 2147483648
  %v1308 = vmul.f32 %v1307, 1.442695
  %v1309 = vpow.pop %v1308
  %v1310 = vadd.f32 %v1309, 1.0
  %v1311 = vrcp.pop %v1310
  %v1312 = vmul.f32 %v1310, %v1311
  %v1313 = vsub.f32 1.0, %v1312
  %v1314 = vmul.f32 %v1311, %v1313
  %v1315 = vadd.f32 %v1311, %v1314
  %vm1316 = vweird.f32 %v1310
  %vm1317 = vweird.f32 %v1311
  %vm1318 = vmor %vm1316, %vm1317
  %v1319 = vsel %vm1318, %v1311, %v1315
  %v1320 = vand.u32 2147483647, %v1310
  %vm1321 = vcmp.eq.f32.partialorder %v1320, 8.507059e+37
  %v1322 = vand.u32 %v1310, 2147483648
  %v1323 = vor.u32 1.1754944e-38, %v1322
  %v1324 = vsel %vm1321, %v1323, %v1319
  %v1325 = vmul.f32 1.0, %v1324
  %v1326 = vtanh.pop %v1306
  %v1327 = vmul.f32 %v1325, 0.0
  %1329 = vrot.lane.b32.xlu0 %v1326, 64
  %v1330 = vpop.permute.xlu0 %1329
  %v1332 = vmul.f32 %v1325, %v1330
  %1334 = vrot.lane.b32.xlu0 %v1332, 32
  %v1335 = vpop.permute.xlu0 %1334
  %v1337 = vadd.f32 %v1327, %v1335
  %v1338 = vtanh.pop %v1337
  %1340 = vrot.lane.b32.xlu0 %v1338, 64
  %v1341 = vpop.permute.xlu0 %1340
  %v1343 = vmul.f32 %v1325, %v1341
  %1345 = vrot.lane.b32.xlu0 %v1343, 32
  %v1346 = vpop.permute.xlu0 %1345
  %1348 = vst.msk [vmem:[#allocation3] sm:$0x3] %vm170, %v1346
  %v1349 = vld [vmem:[#allocation2 + $0x2] sm:$0x3]
  %v1350 = vsel %vm104, %v1346, 0
  %1352 = vmatpush.msra.mxu0 0.0
  %1353 = vmatpush.msra.mxu0 0.0
  %1354 = vmatpush.msra.mxu0 0.0
  %1355 = vmatpush.msra.mxu0 0.0
  %1356 = vmatpush.msra.mxu0 0.0
  %1357 = vmatpush.msra.mxu0 0.0
  %1358 = vmatpush.msra.mxu0 0.0
  %1359 = vmatpush.msra.mxu0 0.0
  %1360 = vmatpush.msra.mxu0 0.0
  %1361 = vmatpush.msra.mxu0 0.0
  %1362 = vmatpush.msra.mxu0 0.0
  %1363 = vmatpush.msra.mxu0 0.0
  %1364 = vmatpush.msra.mxu0 %v1284
  %1365 = vmatpush.msra.mxu0 %v1283
  %1366 = vmatpush.msra.mxu0 %v1282
  %1367 = vmatpush.msra.mxu0 %v1281
  %1368 = vmatmul.f32.gmra.mxu0 %v1350
  %v1369 = vpop.f32.mrf.mxu0
  %v1370 = vadd.f32 0.0, %v1369
  %1371 = vdwg.mxu0
  %v1372 = vadd.f32 %v1349, %v1370
  %v1373 = vxor.u32 %v1372, 2147483648
  %v1374 = vmul.f32 %v1373, 1.442695
  %v1375 = vpow.pop %v1374
  %v1376 = vadd.f32 %v1375, 1.0
  %v1377 = vrcp.pop %v1376
  %v1378 = vmul.f32 %v1376, %v1377
  %v1379 = vsub.f32 1.0, %v1378
  %v1380 = vmul.f32 %v1377, %v1379
  %v1381 = vadd.f32 %v1377, %v1380
  %vm1382 = vweird.f32 %v1376
  %vm1383 = vweird.f32 %v1377
  %vm1384 = vmor %vm1382, %vm1383
  %v1385 = vsel %vm1384, %v1377, %v1381
  %v1386 = vand.u32 2147483647, %v1376
  %vm1387 = vcmp.eq.f32.partialorder %v1386, 8.507059e+37
  %v1388 = vand.u32 %v1376, 2147483648
  %v1389 = vor.u32 1.1754944e-38, %v1388
  %v1390 = vsel %vm1387, %v1389, %v1385
  %v1391 = vmul.f32 1.0, %v1390
  %v1392 = vtanh.pop %v1372
  %v1393 = vmul.f32 %v1391, %v1337
  %1395 = vrot.lane.b32.xlu0 %v1392, 64
  %v1396 = vpop.permute.xlu0 %1395
  %v1398 = vmul.f32 %v1391, %v1396
  %1400 = vrot.lane.b32.xlu0 %v1398, 32
  %v1401 = vpop.permute.xlu0 %1400
  %v1403 = vadd.f32 %v1393, %v1401
  %v1404 = vtanh.pop %v1403
  %1406 = vrot.lane.b32.xlu0 %v1404, 64
  %v1407 = vpop.permute.xlu0 %1406
  %v1409 = vmul.f32 %v1391, %v1407
  %1411 = vrot.lane.b32.xlu0 %v1409, 32
  %v1412 = vpop.permute.xlu0 %1411
  %1414 = vst.msk [vmem:[#allocation3 + $0x2] sm:$0x3] %vm170, %v1412
  %v1415 = vld [vmem:[#allocation2 + $0x4] sm:$0x3]
  %v1416 = vsel %vm104, %v1412, 0
  %1418 = vmatpush.msra.mxu0 0.0
  %1419 = vmatpush.msra.mxu0 0.0
  %1420 = vmatpush.msra.mxu0 0.0
  %1421 = vmatpush.msra.mxu0 0.0
  %1422 = vmatpush.msra.mxu0 0.0
  %1423 = vmatpush.msra.mxu0 0.0
  %1424 = vmatpush.msra.mxu0 0.0
  %1425 = vmatpush.msra.mxu0 0.0
  %1426 = vmatpush.msra.mxu0 0.0
  %1427 = vmatpush.msra.mxu0 0.0
  %1428 = vmatpush.msra.mxu0 0.0
  %1429 = vmatpush.msra.mxu0 0.0
  %1430 = vmatpush.msra.mxu0 %v1284
  %1431 = vmatpush.msra.mxu0 %v1283
  %1432 = vmatpush.msra.mxu0 %v1282
  %1433 = vmatpush.msra.mxu0 %v1281
  %1434 = vmatmul.f32.gmra.mxu0 %v1416
  %v1435 = vpop.f32.mrf.mxu0
  %v1436 = vadd.f32 0.0, %v1435
  %1437 = vdwg.mxu0
  %v1438 = vadd.f32 %v1415, %v1436
  %v1439 = vxor.u32 %v1438, 2147483648
  %v1440 = vmul.f32 %v1439, 1.442695
  %v1441 = vpow.pop %v1440
  %v1442 = vadd.f32 %v1441, 1.0
  %v1443 = vrcp.pop %v1442
  %v1444 = vmul.f32 %v1442, %v1443
  %v1445 = vsub.f32 1.0, %v1444
  %v1446 = vmul.f32 %v1443, %v1445
  %v1447 = vadd.f32 %v1443, %v1446
  %vm1448 = vweird.f32 %v1442
  %vm1449 = vweird.f32 %v1443
  %vm1450 = vmor %vm1448, %vm1449
  %v1451 = vsel %vm1450, %v1443, %v1447
  %v1452 = vand.u32 2147483647, %v1442
  %vm1453 = vcmp.eq.f32.partialorder %v1452, 8.507059e+37
  %v1454 = vand.u32 %v1442, 2147483648
  %v1455 = vor.u32 1.1754944e-38, %v1454
  %v1456 = vsel %vm1453, %v1455, %v1451
  %v1457 = vmul.f32 1.0, %v1456
  %v1458 = vtanh.pop %v1438
  %v1459 = vmul.f32 %v1457, %v1403
  %1461 = vrot.lane.b32.xlu0 %v1458, 64
  %v1462 = vpop.permute.xlu0 %1461
  %v1464 = vmul.f32 %v1457, %v1462
  %1466 = vrot.lane.b32.xlu0 %v1464, 32
  %v1467 = vpop.permute.xlu0 %1466
  %v1469 = vadd.f32 %v1459, %v1467
  %v1470 = vtanh.pop %v1469
  %1472 = vrot.lane.b32.xlu0 %v1470, 64
  %v1473 = vpop.permute.xlu0 %1472
  %v1475 = vmul.f32 %v1457, %v1473
  %1477 = vrot.lane.b32.xlu0 %v1475, 32
  %v1478 = vpop.permute.xlu0 %1477
  %1480 = vst.msk [vmem:[#allocation3 + $0x4] sm:$0x3] %vm170, %v1478
  %v1481 = vld [vmem:[#allocation2 + $0x6] sm:$0x3]
  %v1482 = vsel %vm104, %v1478, 0
  %1484 = vmatpush.msra.mxu0 0.0
  %1485 = vmatpush.msra.mxu0 0.0
  %1486 = vmatpush.msra.mxu0 0.0
  %1487 = vmatpush.msra.mxu0 0.0
  %1488 = vmatpush.msra.mxu0 0.0
  %1489 = vmatpush.msra.mxu0 0.0
  %1490 = vmatpush.msra.mxu0 0.0
  %1491 = vmatpush.msra.mxu0 0.0
  %1492 = vmatpush.msra.mxu0 0.0
  %1493 = vmatpush.msra.mxu0 0.0
  %1494 = vmatpush.msra.mxu0 0.0
  %1495 = vmatpush.msra.mxu0 0.0
  %1496 = vmatpush.msra.mxu0 %v1284
  %1497 = vmatpush.msra.mxu0 %v1283
  %1498 = vmatpush.msra.mxu0 %v1282
  %1499 = vmatpush.msra.mxu0 %v1281
  %1500 = vmatmul.f32.gmra.mxu0 %v1482
  %v1501 = vpop.f32.mrf.mxu0
  %v1502 = vadd.f32 0.0, %v1501
  %1503 = vdwg.mxu0
  %v1504 = vadd.f32 %v1481, %v1502
  %v1505 = vxor.u32 %v1504, 2147483648
  %v1506 = vmul.f32 %v1505, 1.442695
  %v1507 = vpow.pop %v1506
  %v1508 = vadd.f32 %v1507, 1.0
  %v1509 = vrcp.pop %v1508
  %v1510 = vmul.f32 %v1508, %v1509
  %v1511 = vsub.f32 1.0, %v1510
  %v1512 = vmul.f32 %v1509, %v1511
  %v1513 = vadd.f32 %v1509, %v1512
  %vm1514 = vweird.f32 %v1508
  %vm1515 = vweird.f32 %v1509
  %vm1516 = vmor %vm1514, %vm1515
  %v1517 = vsel %vm1516, %v1509, %v1513
  %v1518 = vand.u32 2147483647, %v1508
  %vm1519 = vcmp.eq.f32.partialorder %v1518, 8.507059e+37
  %v1520 = vand.u32 %v1508, 2147483648
  %v1521 = vor.u32 1.1754944e-38, %v1520
  %v1522 = vsel %vm1519, %v1521, %v1517
  %v1523 = vmul.f32 1.0, %v1522
  %v1524 = vtanh.pop %v1504
  %v1525 = vmul.f32 %v1523, %v1469
  %1527 = vrot.lane.b32.xlu0 %v1524, 64
  %v1528 = vpop.permute.xlu0 %1527
  %v1530 = vmul.f32 %v1523, %v1528
  %1532 = vrot.lane.b32.xlu0 %v1530, 32
  %v1533 = vpop.permute.xlu0 %1532
  %v1535 = vadd.f32 %v1525, %v1533
  %v1536 = vtanh.pop %v1535
  %1538 = vrot.lane.b32.xlu0 %v1536, 64
  %v1539 = vpop.permute.xlu0 %1538
  %v1541 = vmul.f32 %v1523, %v1539
  %1543 = vrot.lane.b32.xlu0 %v1541, 32
  %v1544 = vpop.permute.xlu0 %1543
  %1546 = vst.msk [vmem:[#allocation3 + $0x6] sm:$0x3] %vm170, %v1544
  %v1547 = vld [vmem:[#allocation2 + $0x8] sm:$0x3]
  %v1548 = vsel %vm104, %v1544, 0
  %1550 = vmatpush.msra.mxu0 0.0
  %1551 = vmatpush.msra.mxu0 0.0
  %1552 = vmatpush.msra.mxu0 0.0
  %1553 = vmatpush.msra.mxu0 0.0
  %1554 = vmatpush.msra.mxu0 0.0
  %1555 = vmatpush.msra.mxu0 0.0
  %1556 = vmatpush.msra.mxu0 0.0
  %1557 = vmatpush.msra.mxu0 0.0
  %1558 = vmatpush.msra.mxu0 0.0
  %1559 = vmatpush.msra.mxu0 0.0
  %1560 = vmatpush.msra.mxu0 0.0
  %1561 = vmatpush.msra.mxu0 0.0
  %1562 = vmatpush.msra.mxu0 %v1284
  %1563 = vmatpush.msra.mxu0 %v1283
  %1564 = vmatpush.msra.mxu0 %v1282
  %1565 = vmatpush.msra.mxu0 %v1281
  %1566 = vmatmul.f32.gmra.mxu0 %v1548
  %v1567 = vpop.f32.mrf.mxu0
  %v1568 = vadd.f32 0.0, %v1567
  %1569 = vdwg.mxu0
  %v1570 = vadd.f32 %v1547, %v1568
  %v1571 = vxor.u32 %v1570, 2147483648
  %v1572 = vmul.f32 %v1571, 1.442695
  %v1573 = vpow.pop %v1572
  %v1574 = vadd.f32 %v1573, 1.0
  %v1575 = vrcp.pop %v1574
  %v1576 = vmul.f32 %v1574, %v1575
  %v1577 = vsub.f32 1.0, %v1576
  %v1578 = vmul.f32 %v1575, %v1577
  %v1579 = vadd.f32 %v1575, %v1578
  %vm1580 = vweird.f32 %v1574
  %vm1581 = vweird.f32 %v1575
  %vm1582 = vmor %vm1580, %vm1581
  %v1583 = vsel %vm1582, %v1575, %v1579
  %v1584 = vand.u32 2147483647, %v1574
  %vm1585 = vcmp.eq.f32.partialorder %v1584, 8.507059e+37
  %v1586 = vand.u32 %v1574, 2147483648
  %v1587 = vor.u32 1.1754944e-38, %v1586
  %v1588 = vsel %vm1585, %v1587, %v1583
  %v1589 = vmul.f32 1.0, %v1588
  %v1590 = vtanh.pop %v1570
  %v1591 = vmul.f32 %v1589, %v1535
  %1593 = vrot.lane.b32.xlu0 %v1590, 64
  %v1594 = vpop.permute.xlu0 %1593
  %v1596 = vmul.f32 %v1589, %v1594
  %1598 = vrot.lane.b32.xlu0 %v1596, 32
  %v1599 = vpop.permute.xlu0 %1598
  %v1601 = vadd.f32 %v1591, %v1599
  %v1602 = vtanh.pop %v1601
  %1604 = vrot.lane.b32.xlu0 %v1602, 64
  %v1605 = vpop.permute.xlu0 %1604
  %v1607 = vmul.f32 %v1589, %v1605
  %1609 = vrot.lane.b32.xlu0 %v1607, 32
  %v1610 = vpop.permute.xlu0 %1609
  %1612 = vst.msk [vmem:[#allocation3 + $0x8] sm:$0x3] %vm170, %v1610
  %v1613 = vld [vmem:[#allocation2 + $0xa] sm:$0x3]
  %v1614 = vsel %vm104, %v1610, 0
  %1616 = vmatpush.msra.mxu0 0.0
  %1617 = vmatpush.msra.mxu0 0.0
  %1618 = vmatpush.msra.mxu0 0.0
  %1619 = vmatpush.msra.mxu0 0.0
  %1620 = vmatpush.msra.mxu0 0.0
  %1621 = vmatpush.msra.mxu0 0.0
  %1622 = vmatpush.msra.mxu0 0.0
  %1623 = vmatpush.msra.mxu0 0.0
  %1624 = vmatpush.msra.mxu0 0.0
  %1625 = vmatpush.msra.mxu0 0.0
  %1626 = vmatpush.msra.mxu0 0.0
  %1627 = vmatpush.msra.mxu0 0.0
  %1628 = vmatpush.msra.mxu0 %v1284
  %1629 = vmatpush.msra.mxu0 %v1283
  %1630 = vmatpush.msra.mxu0 %v1282
  %1631 = vmatpush.msra.mxu0 %v1281
  %1632 = vmatmul.f32.gmra.mxu0 %v1614
  %v1633 = vpop.f32.mrf.mxu0
  %v1634 = vadd.f32 0.0, %v1633
  %1635 = vdwg.mxu0
  %v1636 = vadd.f32 %v1613, %v1634
  %v1637 = vxor.u32 %v1636, 2147483648
  %v1638 = vmul.f32 %v1637, 1.442695
  %v1639 = vpow.pop %v1638
  %v1640 = vadd.f32 %v1639, 1.0
  %v1641 = vrcp.pop %v1640
  %v1642 = vmul.f32 %v1640, %v1641
  %v1643 = vsub.f32 1.0, %v1642
  %v1644 = vmul.f32 %v1641, %v1643
  %v1645 = vadd.f32 %v1641, %v1644
  %vm1646 = vweird.f32 %v1640
  %vm1647 = vweird.f32 %v1641
  %vm1648 = vmor %vm1646, %vm1647
  %v1649 = vsel %vm1648, %v1641, %v1645
  %v1650 = vand.u32 2147483647, %v1640
  %vm1651 = vcmp.eq.f32.partialorder %v1650, 8.507059e+37
  %v1652 = vand.u32 %v1640, 2147483648
  %v1653 = vor.u32 1.1754944e-38, %v1652
  %v1654 = vsel %vm1651, %v1653, %v1649
  %v1655 = vmul.f32 1.0, %v1654
  %v1656 = vtanh.pop %v1636
  %v1657 = vmul.f32 %v1655, %v1601
  %1659 = vrot.lane.b32.xlu0 %v1656, 64
  %v1660 = vpop.permute.xlu0 %1659
  %v1662 = vmul.f32 %v1655, %v1660
  %1664 = vrot.lane.b32.xlu0 %v1662, 32
  %v1665 = vpop.permute.xlu0 %1664
  %v1667 = vadd.f32 %v1657, %v1665
  %v1668 = vtanh.pop %v1667
  %1670 = vrot.lane.b32.xlu0 %v1668, 64
  %v1671 = vpop.permute.xlu0 %1670
  %v1673 = vmul.f32 %v1655, %v1671
  %1675 = vrot.lane.b32.xlu0 %v1673, 32
  %v1676 = vpop.permute.xlu0 %1675
  %1678 = vst.msk [vmem:[#allocation3 + $0xa] sm:$0x3] %vm170, %v1676
  %v1679 = vld [vmem:[#allocation2 + $0xc] sm:$0x3]
  %v1680 = vsel %vm104, %v1676, 0
  %1682 = vmatpush.msra.mxu0 0.0
  %1683 = vmatpush.msra.mxu0 0.0
  %1684 = vmatpush.msra.mxu0 0.0
  %1685 = vmatpush.msra.mxu0 0.0
  %1686 = vmatpush.msra.mxu0 0.0
  %1687 = vmatpush.msra.mxu0 0.0
  %1688 = vmatpush.msra.mxu0 0.0
  %1689 = vmatpush.msra.mxu0 0.0
  %1690 = vmatpush.msra.mxu0 0.0
  %1691 = vmatpush.msra.mxu0 0.0
  %1692 = vmatpush.msra.mxu0 0.0
  %1693 = vmatpush.msra.mxu0 0.0
  %1694 = vmatpush.msra.mxu0 %v1284
  %1695 = vmatpush.msra.mxu0 %v1283
  %1696 = vmatpush.msra.mxu0 %v1282
  %1697 = vmatpush.msra.mxu0 %v1281
  %1698 = vmatmul.f32.gmra.mxu0 %v1680
  %v1699 = vpop.f32.mrf.mxu0
  %v1700 = vadd.f32 0.0, %v1699
  %1701 = vdwg.mxu0
  %v1702 = vadd.f32 %v1679, %v1700
  %v1703 = vxor.u32 %v1702, 2147483648
  %v1704 = vmul.f32 %v1703, 1.442695
  %v1705 = vpow.pop %v1704
  %v1706 = vadd.f32 %v1705, 1.0
  %v1707 = vrcp.pop %v1706
  %v1708 = vmul.f32 %v1706, %v1707
  %v1709 = vsub.f32 1.0, %v1708
  %v1710 = vmul.f32 %v1707, %v1709
  %v1711 = vadd.f32 %v1707, %v1710
  %vm1712 = vweird.f32 %v1706
  %vm1713 = vweird.f32 %v1707
  %vm1714 = vmor %vm1712, %vm1713
  %v1715 = vsel %vm1714, %v1707, %v1711
  %v1716 = vand.u32 2147483647, %v1706
  %vm1717 = vcmp.eq.f32.partialorder %v1716, 8.507059e+37
  %v1718 = vand.u32 %v1706, 2147483648
  %v1719 = vor.u32 1.1754944e-38, %v1718
  %v1720 = vsel %vm1717, %v1719, %v1715
  %v1721 = vmul.f32 1.0, %v1720
  %v1722 = vtanh.pop %v1702
  %v1723 = vmul.f32 %v1721, %v1667
  %1725 = vrot.lane.b32.xlu0 %v1722, 64
  %v1726 = vpop.permute.xlu0 %1725
  %v1728 = vmul.f32 %v1721, %v1726
  %1730 = vrot.lane.b32.xlu0 %v1728, 32
  %v1731 = vpop.permute.xlu0 %1730
  %v1733 = vadd.f32 %v1723, %v1731
  %v1734 = vtanh.pop %v1733
  %1736 = vrot.lane.b32.xlu0 %v1734, 64
  %v1737 = vpop.permute.xlu0 %1736
  %v1739 = vmul.f32 %v1721, %v1737
  %1741 = vrot.lane.b32.xlu0 %v1739, 32
  %v1742 = vpop.permute.xlu0 %1741
  %1744 = vst.msk [vmem:[#allocation3 + $0xc] sm:$0x3] %vm170, %v1742
  %v1745 = vld [vmem:[#allocation2 + $0xe] sm:$0x3]
  %v1746 = vsel %vm104, %v1742, 0
  %1748 = vmatpush.msra.mxu0 0.0
  %1749 = vmatpush.msra.mxu0 0.0
  %1750 = vmatpush.msra.mxu0 0.0
  %1751 = vmatpush.msra.mxu0 0.0
  %1752 = vmatpush.msra.mxu0 0.0
  %1753 = vmatpush.msra.mxu0 0.0
  %1754 = vmatpush.msra.mxu0 0.0
  %1755 = vmatpush.msra.mxu0 0.0
  %1756 = vmatpush.msra.mxu0 0.0
  %1757 = vmatpush.msra.mxu0 0.0
  %1758 = vmatpush.msra.mxu0 0.0
  %1759 = vmatpush.msra.mxu0 0.0
  %1760 = vmatpush.msra.mxu0 %v1284
  %1761 = vmatpush.msra.mxu0 %v1283
  %1762 = vmatpush.msra.mxu0 %v1282
  %1763 = vmatpush.msra.mxu0 %v1281
  %1764 = vmatmul.f32.gmra.mxu0 %v1746
  %v1765 = vpop.f32.mrf.mxu0
  %v1766 = vadd.f32 0.0, %v1765
  %1767 = vdwg.mxu0
  %v1768 = vadd.f32 %v1745, %v1766
  %v1769 = vxor.u32 %v1768, 2147483648
  %v1770 = vmul.f32 %v1769, 1.442695
  %v1771 = vpow.pop %v1770
  %v1772 = vadd.f32 %v1771, 1.0
  %v1773 = vrcp.pop %v1772
  %v1774 = vmul.f32 %v1772, %v1773
  %v1775 = vsub.f32 1.0, %v1774
  %v1776 = vmul.f32 %v1773, %v1775
  %v1777 = vadd.f32 %v1773, %v1776
  %vm1778 = vweird.f32 %v1772
  %vm1779 = vweird.f32 %v1773
  %vm1780 = vmor %vm1778, %vm1779
  %v1781 = vsel %vm1780, %v1773, %v1777
  %v1782 = vand.u32 2147483647, %v1772
  %vm1783 = vcmp.eq.f32.partialorder %v1782, 8.507059e+37
  %v1784 = vand.u32 %v1772, 2147483648
  %v1785 = vor.u32 1.1754944e-38, %v1784
  %v1786 = vsel %vm1783, %v1785, %v1781
  %v1787 = vmul.f32 1.0, %v1786
  %v1788 = vtanh.pop %v1768
  %v1789 = vmul.f32 %v1787, %v1733
  %1791 = vrot.lane.b32.xlu0 %v1788, 64
  %v1792 = vpop.permute.xlu0 %1791
  %v1794 = vmul.f32 %v1787, %v1792
  %1796 = vrot.lane.b32.xlu0 %v1794, 32
  %v1797 = vpop.permute.xlu0 %1796
  %v1799 = vadd.f32 %v1789, %v1797
  %v1800 = vtanh.pop %v1799
  %1802 = vrot.lane.b32.xlu0 %v1800, 64
  %v1803 = vpop.permute.xlu0 %1802
  %v1805 = vmul.f32 %v1787, %v1803
  %1807 = vrot.lane.b32.xlu0 %v1805, 32
  %v1808 = vpop.permute.xlu0 %1807
  %1810 = vst.msk [vmem:[#allocation3 + $0xe] sm:$0x3] %vm170, %v1808
  %v1811 = vld [vmem:[#allocation5] sm:$0xff]
  %v1812 = vld [vmem:[#allocation5 + $0x8] sm:$0xff]
  %v1813 = vld [vmem:[#allocation6] sm:$0xff]
  %v1814 = vld [vmem:[#allocation6 + $0x8] sm:$0xff]
  %v1815 = vld [vmem:[%s11] sm:$0xff]
  %v1816 = vld [vmem:[%s11 + $0x8] sm:$0xff]
  %v1817 = vld [vmem:[%s11 + $0x10] sm:$0xff]
  %v1818 = vld [vmem:[%s11 + $0x18] sm:$0xff]
  %v1819 = vld [vmem:[%s12] sm:$0xff]
  %v1820 = vld [vmem:[%s12 + $0x8] sm:$0xff]
  %v1821 = vld [vmem:[%s12 + $0x10] sm:$0xff]
  %v1822 = vld [vmem:[%s12 + $0x18] sm:$0xff]
  %v1824 = vsel %vm104, %v1813, 0
  %v1827 = vsel %vm104, %v1814, 0
  %1829 = vmatpush.msra.mxu0 0.0
  %1830 = vmatpush.msra.mxu0 0.0
  %1831 = vmatpush.msra.mxu0 0.0
  %1832 = vmatpush.msra.mxu0 0.0
  %1833 = vmatpush.msra.mxu0 0.0
  %1834 = vmatpush.msra.mxu0 0.0
  %1835 = vmatpush.msra.mxu0 0.0
  %1836 = vmatpush.msra.mxu0 0.0
  %1837 = vmatpush.msra.mxu0 0.0
  %1838 = vmatpush.msra.mxu0 0.0
  %1839 = vmatpush.msra.mxu0 0.0
  %1840 = vmatpush.msra.mxu0 0.0
  %1841 = vmatpush.msra.mxu0 %v1822
  %1842 = vmatpush.msra.mxu0 %v1821
  %1843 = vmatpush.msra.mxu0 %v1820
  %1844 = vmatpush.msra.mxu0 %v1819
  %1845 = vmatmul.f32.gmra.mxu0 %v1824
  %v1846 = vpop.f32.mrf.mxu0
  %v1847 = vadd.f32 0.0, %v1846
  %1848 = vmatmul.f32.gmra.mxu0 %v1827
  %v1849 = vpop.f32.mrf.mxu0
  %v1850 = vadd.f32 0.0, %v1849
  %1851 = vdwg.mxu0
  %v1853 = vsel %vm104, %v1811, 0
  %v1856 = vsel %vm104, %v1812, 0
  %1858 = vmatpush.msra.mxu0 0.0
  %1859 = vmatpush.msra.mxu0 0.0
  %1860 = vmatpush.msra.mxu0 0.0
  %1861 = vmatpush.msra.mxu0 0.0
  %1862 = vmatpush.msra.mxu0 0.0
  %1863 = vmatpush.msra.mxu0 0.0
  %1864 = vmatpush.msra.mxu0 0.0
  %1865 = vmatpush.msra.mxu0 0.0
  %1866 = vmatpush.msra.mxu0 0.0
  %1867 = vmatpush.msra.mxu0 0.0
  %1868 = vmatpush.msra.mxu0 0.0
  %1869 = vmatpush.msra.mxu0 0.0
  %1870 = vmatpush.msra.mxu0 %v1818
  %1871 = vmatpush.msra.mxu0 %v1817
  %1872 = vmatpush.msra.mxu0 %v1816
  %1873 = vmatpush.msra.mxu0 %v1815
  %1874 = vmatmul.f32.gmra.mxu0 %v1853
  %v1875 = vpop.f32.mrf.mxu0
  %v1876 = vadd.f32 %v1847, %v1875
  %1877 = vmatmul.f32.gmra.mxu0 %v1856
  %v1878 = vpop.f32.mrf.mxu0
  %v1879 = vadd.f32 %v1850, %v1878
  %1880 = vdwg.mxu0
  %v1881 = vld [vmem:[%s14] sm:$0x1]
  %v1883 = vperm.slane %v1881, 0
  %v1885 = vadd.f32 %v1876, %v1883
  %v1886 = vadd.f32 %v1879, %v1883
  %1887 = vst [vmem:[#allocation2] sm:$0xff] %v1885
  %1888 = vst [vmem:[#allocation2 + $0x8] sm:$0xff] %v1886
  %v1889 = vld [vmem:[%s13] sm:$0xff]
  %v1890 = vld [vmem:[%s13 + $0x8] sm:$0xff]
  %v1891 = vld [vmem:[%s13 + $0x10] sm:$0xff]
  %v1892 = vld [vmem:[%s13 + $0x18] sm:$0xff]
  %v1893 = vld [vmem:[#allocation2 + $0xe] sm:$0x3]
  %1894 = vmatpush.msra.mxu0 0.0
  %1895 = vmatpush.msra.mxu0 0.0
  %1896 = vmatpush.msra.mxu0 0.0
  %1897 = vmatpush.msra.mxu0 0.0
  %1898 = vmatpush.msra.mxu0 0.0
  %1899 = vmatpush.msra.mxu0 0.0
  %1900 = vmatpush.msra.mxu0 0.0
  %1901 = vmatpush.msra.mxu0 0.0
  %1902 = vmatpush.msra.mxu0 0.0
  %1903 = vmatpush.msra.mxu0 0.0
  %1904 = vmatpush.msra.mxu0 0.0
  %1905 = vmatpush.msra.mxu0 0.0
  %1906 = vmatpush.msra.mxu0 %v1892
  %1907 = vmatpush.msra.mxu0 %v1891
  %1908 = vmatpush.msra.mxu0 %v1890
  %1909 = vmatpush.msra.mxu0 %v1889
  %1910 = vmatmul.f32.gmra.mxu0 %v106
  %v1911 = vpop.f32.mrf.mxu0
  %v1912 = vadd.f32 0.0, %v1911
  %1913 = vdwg.mxu0
  %v1914 = vadd.f32 %v1893, %v1912
  %v1915 = vxor.u32 %v1914, 2147483648
  %v1916 = vmul.f32 %v1915, 1.442695
  %v1917 = vpow.pop %v1916
  %v1918 = vadd.f32 %v1917, 1.0
  %v1919 = vrcp.pop %v1918
  %v1920 = vmul.f32 %v1918, %v1919
  %v1921 = vsub.f32 1.0, %v1920
  %v1922 = vmul.f32 %v1919, %v1921
  %v1923 = vadd.f32 %v1919, %v1922
  %vm1924 = vweird.f32 %v1918
  %vm1925 = vweird.f32 %v1919
  %vm1926 = vmor %vm1924, %vm1925
  %v1927 = vsel %vm1926, %v1919, %v1923
  %v1928 = vand.u32 2147483647, %v1918
  %vm1929 = vcmp.eq.f32.partialorder %v1928, 8.507059e+37
  %v1930 = vand.u32 %v1918, 2147483648
  %v1931 = vor.u32 1.1754944e-38, %v1930
  %v1932 = vsel %vm1929, %v1931, %v1927
  %v1933 = vmul.f32 1.0, %v1932
  %v1934 = vtanh.pop %v1914
  %v1935 = vmul.f32 %v1933, 0.0
  %1937 = vrot.lane.b32.xlu0 %v1934, 64
  %v1938 = vpop.permute.xlu0 %1937
  %v1940 = vmul.f32 %v1933, %v1938
  %1942 = vrot.lane.b32.xlu0 %v1940, 32
  %v1943 = vpop.permute.xlu0 %1942
  %v1945 = vadd.f32 %v1935, %v1943
  %v1946 = vtanh.pop %v1945
  %1948 = vrot.lane.b32.xlu0 %v1946, 64
  %v1949 = vpop.permute.xlu0 %1948
  %v1951 = vmul.f32 %v1933, %v1949
  %1953 = vrot.lane.b32.xlu0 %v1951, 32
  %v1954 = vpop.permute.xlu0 %1953
  %1956 = vst.msk [vmem:[#allocation4 + $0xe] sm:$0x3] %vm170, %v1954
  %v1957 = vld [vmem:[#allocation2 + $0xc] sm:$0x3]
  %v1958 = vsel %vm104, %v1954, 0
  %1960 = vmatpush.msra.mxu0 0.0
  %1961 = vmatpush.msra.mxu0 0.0
  %1962 = vmatpush.msra.mxu0 0.0
  %1963 = vmatpush.msra.mxu0 0.0
  %1964 = vmatpush.msra.mxu0 0.0
  %1965 = vmatpush.msra.mxu0 0.0
  %1966 = vmatpush.msra.mxu0 0.0
  %1967 = vmatpush.msra.mxu0 0.0
  %1968 = vmatpush.msra.mxu0 0.0
  %1969 = vmatpush.msra.mxu0 0.0
  %1970 = vmatpush.msra.mxu0 0.0
  %1971 = vmatpush.msra.mxu0 0.0
  %1972 = vmatpush.msra.mxu0 %v1892
  %1973 = vmatpush.msra.mxu0 %v1891
  %1974 = vmatpush.msra.mxu0 %v1890
  %1975 = vmatpush.msra.mxu0 %v1889
  %1976 = vmatmul.f32.gmra.mxu0 %v1958
  %v1977 = vpop.f32.mrf.mxu0
  %v1978 = vadd.f32 0.0, %v1977
  %1979 = vdwg.mxu0
  %v1980 = vadd.f32 %v1957, %v1978
  %v1981 = vxor.u32 %v1980, 2147483648
  %v1982 = vmul.f32 %v1981, 1.442695
  %v1983 = vpow.pop %v1982
  %v1984 = vadd.f32 %v1983, 1.0
  %v1985 = vrcp.pop %v1984
  %v1986 = vmul.f32 %v1984, %v1985
  %v1987 = vsub.f32 1.0, %v1986
  %v1988 = vmul.f32 %v1985, %v1987
  %v1989 = vadd.f32 %v1985, %v1988
  %vm1990 = vweird.f32 %v1984
  %vm1991 = vweird.f32 %v1985
  %vm1992 = vmor %vm1990, %vm1991
  %v1993 = vsel %vm1992, %v1985, %v1989
  %v1994 = vand.u32 2147483647, %v1984
  %vm1995 = vcmp.eq.f32.partialorder %v1994, 8.507059e+37
  %v1996 = vand.u32 %v1984, 2147483648
  %v1997 = vor.u32 1.1754944e-38, %v1996
  %v1998 = vsel %vm1995, %v1997, %v1993
  %v1999 = vmul.f32 1.0, %v1998
  %v2000 = vtanh.pop %v1980
  %v2001 = vmul.f32 %v1999, %v1945
  %2003 = vrot.lane.b32.xlu0 %v2000, 64
  %v2004 = vpop.permute.xlu0 %2003
  %v2006 = vmul.f32 %v1999, %v2004
  %2008 = vrot.lane.b32.xlu0 %v2006, 32
  %v2009 = vpop.permute.xlu0 %2008
  %v2011 = vadd.f32 %v2001, %v2009
  %v2012 = vtanh.pop %v2011
  %2014 = vrot.lane.b32.xlu0 %v2012, 64
  %v2015 = vpop.permute.xlu0 %2014
  %v2017 = vmul.f32 %v1999, %v2015
  %2019 = vrot.lane.b32.xlu0 %v2017, 32
  %v2020 = vpop.permute.xlu0 %2019
  %2022 = vst.msk [vmem:[#allocation4 + $0xc] sm:$0x3] %vm170, %v2020
  %v2023 = vld [vmem:[#allocation2 + $0xa] sm:$0x3]
  %v2024 = vsel %vm104, %v2020, 0
  %2026 = vmatpush.msra.mxu0 0.0
  %2027 = vmatpush.msra.mxu0 0.0
  %2028 = vmatpush.msra.mxu0 0.0
  %2029 = vmatpush.msra.mxu0 0.0
  %2030 = vmatpush.msra.mxu0 0.0
  %2031 = vmatpush.msra.mxu0 0.0
  %2032 = vmatpush.msra.mxu0 0.0
  %2033 = vmatpush.msra.mxu0 0.0
  %2034 = vmatpush.msra.mxu0 0.0
  %2035 = vmatpush.msra.mxu0 0.0
  %2036 = vmatpush.msra.mxu0 0.0
  %2037 = vmatpush.msra.mxu0 0.0
  %2038 = vmatpush.msra.mxu0 %v1892
  %2039 = vmatpush.msra.mxu0 %v1891
  %2040 = vmatpush.msra.mxu0 %v1890
  %2041 = vmatpush.msra.mxu0 %v1889
  %2042 = vmatmul.f32.gmra.mxu0 %v2024
  %v2043 = vpop.f32.mrf.mxu0
  %v2044 = vadd.f32 0.0, %v2043
  %2045 = vdwg.mxu0
  %v2046 = vadd.f32 %v2023, %v2044
  %v2047 = vxor.u32 %v2046, 2147483648
  %v2048 = vmul.f32 %v2047, 1.442695
  %v2049 = vpow.pop %v2048
  %v2050 = vadd.f32 %v2049, 1.0
  %v2051 = vrcp.pop %v2050
  %v2052 = vmul.f32 %v2050, %v2051
  %v2053 = vsub.f32 1.0, %v2052
  %v2054 = vmul.f32 %v2051, %v2053
  %v2055 = vadd.f32 %v2051, %v2054
  %vm2056 = vweird.f32 %v2050
  %vm2057 = vweird.f32 %v2051
  %vm2058 = vmor %vm2056, %vm2057
  %v2059 = vsel %vm2058, %v2051, %v2055
  %v2060 = vand.u32 2147483647, %v2050
  %vm2061 = vcmp.eq.f32.partialorder %v2060, 8.507059e+37
  %v2062 = vand.u32 %v2050, 2147483648
  %v2063 = vor.u32 1.1754944e-38, %v2062
  %v2064 = vsel %vm2061, %v2063, %v2059
  %v2065 = vmul.f32 1.0, %v2064
  %v2066 = vtanh.pop %v2046
  %v2067 = vmul.f32 %v2065, %v2011
  %2069 = vrot.lane.b32.xlu0 %v2066, 64
  %v2070 = vpop.permute.xlu0 %2069
  %v2072 = vmul.f32 %v2065, %v2070
  %2074 = vrot.lane.b32.xlu0 %v2072, 32
  %v2075 = vpop.permute.xlu0 %2074
  %v2077 = vadd.f32 %v2067, %v2075
  %v2078 = vtanh.pop %v2077
  %2080 = vrot.lane.b32.xlu0 %v2078, 64
  %v2081 = vpop.permute.xlu0 %2080
  %v2083 = vmul.f32 %v2065, %v2081
  %2085 = vrot.lane.b32.xlu0 %v2083, 32
  %v2086 = vpop.permute.xlu0 %2085
  %2088 = vst.msk [vmem:[#allocation4 + $0xa] sm:$0x3] %vm170, %v2086
  %v2089 = vld [vmem:[#allocation2 + $0x8] sm:$0x3]
  %v2090 = vsel %vm104, %v2086, 0
  %2092 = vmatpush.msra.mxu0 0.0
  %2093 = vmatpush.msra.mxu0 0.0
  %2094 = vmatpush.msra.mxu0 0.0
  %2095 = vmatpush.msra.mxu0 0.0
  %2096 = vmatpush.msra.mxu0 0.0
  %2097 = vmatpush.msra.mxu0 0.0
  %2098 = vmatpush.msra.mxu0 0.0
  %2099 = vmatpush.msra.mxu0 0.0
  %2100 = vmatpush.msra.mxu0 0.0
  %2101 = vmatpush.msra.mxu0 0.0
  %2102 = vmatpush.msra.mxu0 0.0
  %2103 = vmatpush.msra.mxu0 0.0
  %2104 = vmatpush.msra.mxu0 %v1892
  %2105 = vmatpush.msra.mxu0 %v1891
  %2106 = vmatpush.msra.mxu0 %v1890
  %2107 = vmatpush.msra.mxu0 %v1889
  %2108 = vmatmul.f32.gmra.mxu0 %v2090
  %v2109 = vpop.f32.mrf.mxu0
  %v2110 = vadd.f32 0.0, %v2109
  %2111 = vdwg.mxu0
  %v2112 = vadd.f32 %v2089, %v2110
  %v2113 = vxor.u32 %v2112, 2147483648
  %v2114 = vmul.f32 %v2113, 1.442695
  %v2115 = vpow.pop %v2114
  %v2116 = vadd.f32 %v2115, 1.0
  %v2117 = vrcp.pop %v2116
  %v2118 = vmul.f32 %v2116, %v2117
  %v2119 = vsub.f32 1.0, %v2118
  %v2120 = vmul.f32 %v2117, %v2119
  %v2121 = vadd.f32 %v2117, %v2120
  %vm2122 = vweird.f32 %v2116
  %vm2123 = vweird.f32 %v2117
  %vm2124 = vmor %vm2122, %vm2123
  %v2125 = vsel %vm2124, %v2117, %v2121
  %v2126 = vand.u32 2147483647, %v2116
  %vm2127 = vcmp.eq.f32.partialorder %v2126, 8.507059e+37
  %v2128 = vand.u32 %v2116, 2147483648
  %v2129 = vor.u32 1.1754944e-38, %v2128
  %v2130 = vsel %vm2127, %v2129, %v2125
  %v2131 = vmul.f32 1.0, %v2130
  %v2132 = vtanh.pop %v2112
  %v2133 = vmul.f32 %v2131, %v2077
  %2135 = vrot.lane.b32.xlu0 %v2132, 64
  %v2136 = vpop.permute.xlu0 %2135
  %v2138 = vmul.f32 %v2131, %v2136
  %2140 = vrot.lane.b32.xlu0 %v2138, 32
  %v2141 = vpop.permute.xlu0 %2140
  %v2143 = vadd.f32 %v2133, %v2141
  %v2144 = vtanh.pop %v2143
  %2146 = vrot.lane.b32.xlu0 %v2144, 64
  %v2147 = vpop.permute.xlu0 %2146
  %v2149 = vmul.f32 %v2131, %v2147
  %2151 = vrot.lane.b32.xlu0 %v2149, 32
  %v2152 = vpop.permute.xlu0 %2151
  %2154 = vst.msk [vmem:[#allocation4 + $0x8] sm:$0x3] %vm170, %v2152
  %v2155 = vld [vmem:[#allocation2 + $0x6] sm:$0x3]
  %v2156 = vsel %vm104, %v2152, 0
  %2158 = vmatpush.msra.mxu0 0.0
  %2159 = vmatpush.msra.mxu0 0.0
  %2160 = vmatpush.msra.mxu0 0.0
  %2161 = vmatpush.msra.mxu0 0.0
  %2162 = vmatpush.msra.mxu0 0.0
  %2163 = vmatpush.msra.mxu0 0.0
  %2164 = vmatpush.msra.mxu0 0.0
  %2165 = vmatpush.msra.mxu0 0.0
  %2166 = vmatpush.msra.mxu0 0.0
  %2167 = vmatpush.msra.mxu0 0.0
  %2168 = vmatpush.msra.mxu0 0.0
  %2169 = vmatpush.msra.mxu0 0.0
  %2170 = vmatpush.msra.mxu0 %v1892
  %2171 = vmatpush.msra.mxu0 %v1891
  %2172 = vmatpush.msra.mxu0 %v1890
  %2173 = vmatpush.msra.mxu0 %v1889
  %2174 = vmatmul.f32.gmra.mxu0 %v2156
  %v2175 = vpop.f32.mrf.mxu0
  %v2176 = vadd.f32 0.0, %v2175
  %2177 = vdwg.mxu0
  %v2178 = vadd.f32 %v2155, %v2176
  %v2179 = vxor.u32 %v2178, 2147483648
  %v2180 = vmul.f32 %v2179, 1.442695
  %v2181 = vpow.pop %v2180
  %v2182 = vadd.f32 %v2181, 1.0
  %v2183 = vrcp.pop %v2182
  %v2184 = vmul.f32 %v2182, %v2183
  %v2185 = vsub.f32 1.0, %v2184
  %v2186 = vmul.f32 %v2183, %v2185
  %v2187 = vadd.f32 %v2183, %v2186
  %vm2188 = vweird.f32 %v2182
  %vm2189 = vweird.f32 %v2183
  %vm2190 = vmor %vm2188, %vm2189
  %v2191 = vsel %vm2190, %v2183, %v2187
  %v2192 = vand.u32 2147483647, %v2182
  %vm2193 = vcmp.eq.f32.partialorder %v2192, 8.507059e+37
  %v2194 = vand.u32 %v2182, 2147483648
  %v2195 = vor.u32 1.1754944e-38, %v2194
  %v2196 = vsel %vm2193, %v2195, %v2191
  %v2197 = vmul.f32 1.0, %v2196
  %v2198 = vtanh.pop %v2178
  %v2199 = vmul.f32 %v2197, %v2143
  %2201 = vrot.lane.b32.xlu0 %v2198, 64
  %v2202 = vpop.permute.xlu0 %2201
  %v2204 = vmul.f32 %v2197, %v2202
  %2206 = vrot.lane.b32.xlu0 %v2204, 32
  %v2207 = vpop.permute.xlu0 %2206
  %v2209 = vadd.f32 %v2199, %v2207
  %v2210 = vtanh.pop %v2209
  %2212 = vrot.lane.b32.xlu0 %v2210, 64
  %v2213 = vpop.permute.xlu0 %2212
  %v2215 = vmul.f32 %v2197, %v2213
  %2217 = vrot.lane.b32.xlu0 %v2215, 32
  %v2218 = vpop.permute.xlu0 %2217
  %2220 = vst.msk [vmem:[#allocation4 + $0x6] sm:$0x3] %vm170, %v2218
  %v2221 = vld [vmem:[#allocation2 + $0x4] sm:$0x3]
  %v2222 = vsel %vm104, %v2218, 0
  %2224 = vmatpush.msra.mxu0 0.0
  %2225 = vmatpush.msra.mxu0 0.0
  %2226 = vmatpush.msra.mxu0 0.0
  %2227 = vmatpush.msra.mxu0 0.0
  %2228 = vmatpush.msra.mxu0 0.0
  %2229 = vmatpush.msra.mxu0 0.0
  %2230 = vmatpush.msra.mxu0 0.0
  %2231 = vmatpush.msra.mxu0 0.0
  %2232 = vmatpush.msra.mxu0 0.0
  %2233 = vmatpush.msra.mxu0 0.0
  %2234 = vmatpush.msra.mxu0 0.0
  %2235 = vmatpush.msra.mxu0 0.0
  %2236 = vmatpush.msra.mxu0 %v1892
  %2237 = vmatpush.msra.mxu0 %v1891
  %2238 = vmatpush.msra.mxu0 %v1890
  %2239 = vmatpush.msra.mxu0 %v1889
  %2240 = vmatmul.f32.gmra.mxu0 %v2222
  %v2241 = vpop.f32.mrf.mxu0
  %v2242 = vadd.f32 0.0, %v2241
  %2243 = vdwg.mxu0
  %v2244 = vadd.f32 %v2221, %v2242
  %v2245 = vxor.u32 %v2244, 2147483648
  %v2246 = vmul.f32 %v2245, 1.442695
  %v2247 = vpow.pop %v2246
  %v2248 = vadd.f32 %v2247, 1.0
  %v2249 = vrcp.pop %v2248
  %v2250 = vmul.f32 %v2248, %v2249
  %v2251 = vsub.f32 1.0, %v2250
  %v2252 = vmul.f32 %v2249, %v2251
  %v2253 = vadd.f32 %v2249, %v2252
  %vm2254 = vweird.f32 %v2248
  %vm2255 = vweird.f32 %v2249
  %vm2256 = vmor %vm2254, %vm2255
  %v2257 = vsel %vm2256, %v2249, %v2253
  %v2258 = vand.u32 2147483647, %v2248
  %vm2259 = vcmp.eq.f32.partialorder %v2258, 8.507059e+37
  %v2260 = vand.u32 %v2248, 2147483648
  %v2261 = vor.u32 1.1754944e-38, %v2260
  %v2262 = vsel %vm2259, %v2261, %v2257
  %v2263 = vmul.f32 1.0, %v2262
  %v2264 = vtanh.pop %v2244
  %v2265 = vmul.f32 %v2263, %v2209
  %2267 = vrot.lane.b32.xlu0 %v2264, 64
  %v2268 = vpop.permute.xlu0 %2267
  %v2270 = vmul.f32 %v2263, %v2268
  %2272 = vrot.lane.b32.xlu0 %v2270, 32
  %v2273 = vpop.permute.xlu0 %2272
  %v2275 = vadd.f32 %v2265, %v2273
  %v2276 = vtanh.pop %v2275
  %2278 = vrot.lane.b32.xlu0 %v2276, 64
  %v2279 = vpop.permute.xlu0 %2278
  %v2281 = vmul.f32 %v2263, %v2279
  %2283 = vrot.lane.b32.xlu0 %v2281, 32
  %v2284 = vpop.permute.xlu0 %2283
  %2286 = vst.msk [vmem:[#allocation4 + $0x4] sm:$0x3] %vm170, %v2284
  %v2287 = vld [vmem:[#allocation2 + $0x2] sm:$0x3]
  %v2288 = vsel %vm104, %v2284, 0
  %2290 = vmatpush.msra.mxu0 0.0
  %2291 = vmatpush.msra.mxu0 0.0
  %2292 = vmatpush.msra.mxu0 0.0
  %2293 = vmatpush.msra.mxu0 0.0
  %2294 = vmatpush.msra.mxu0 0.0
  %2295 = vmatpush.msra.mxu0 0.0
  %2296 = vmatpush.msra.mxu0 0.0
  %2297 = vmatpush.msra.mxu0 0.0
  %2298 = vmatpush.msra.mxu0 0.0
  %2299 = vmatpush.msra.mxu0 0.0
  %2300 = vmatpush.msra.mxu0 0.0
  %2301 = vmatpush.msra.mxu0 0.0
  %2302 = vmatpush.msra.mxu0 %v1892
  %2303 = vmatpush.msra.mxu0 %v1891
  %2304 = vmatpush.msra.mxu0 %v1890
  %2305 = vmatpush.msra.mxu0 %v1889
  %2306 = vmatmul.f32.gmra.mxu0 %v2288
  %v2307 = vpop.f32.mrf.mxu0
  %v2308 = vadd.f32 0.0, %v2307
  %2309 = vdwg.mxu0
  %v2310 = vadd.f32 %v2287, %v2308
  %v2311 = vxor.u32 %v2310, 2147483648
  %v2312 = vmul.f32 %v2311, 1.442695
  %v2313 = vpow.pop %v2312
  %v2314 = vadd.f32 %v2313, 1.0
  %v2315 = vrcp.pop %v2314
  %v2316 = vmul.f32 %v2314, %v2315
  %v2317 = vsub.f32 1.0, %v2316
  %v2318 = vmul.f32 %v2315, %v2317
  %v2319 = vadd.f32 %v2315, %v2318
  %vm2320 = vweird.f32 %v2314
  %vm2321 = vweird.f32 %v2315
  %vm2322 = vmor %vm2320, %vm2321
  %v2323 = vsel %vm2322, %v2315, %v2319
  %v2324 = vand.u32 2147483647, %v2314
  %vm2325 = vcmp.eq.f32.partialorder %v2324, 8.507059e+37
  %v2326 = vand.u32 %v2314, 2147483648
  %v2327 = vor.u32 1.1754944e-38, %v2326
  %v2328 = vsel %vm2325, %v2327, %v2323
  %v2329 = vmul.f32 1.0, %v2328
  %v2330 = vtanh.pop %v2310
  %v2331 = vmul.f32 %v2329, %v2275
  %2333 = vrot.lane.b32.xlu0 %v2330, 64
  %v2334 = vpop.permute.xlu0 %2333
  %v2336 = vmul.f32 %v2329, %v2334
  %2338 = vrot.lane.b32.xlu0 %v2336, 32
  %v2339 = vpop.permute.xlu0 %2338
  %v2341 = vadd.f32 %v2331, %v2339
  %v2342 = vtanh.pop %v2341
  %2344 = vrot.lane.b32.xlu0 %v2342, 64
  %v2345 = vpop.permute.xlu0 %2344
  %v2347 = vmul.f32 %v2329, %v2345
  %2349 = vrot.lane.b32.xlu0 %v2347, 32
  %v2350 = vpop.permute.xlu0 %2349
  %2352 = vst.msk [vmem:[#allocation4 + $0x2] sm:$0x3] %vm170, %v2350
  %v2353 = vld [vmem:[#allocation2] sm:$0x3]
  %v2354 = vsel %vm104, %v2350, 0
  %2356 = vmatpush.msra.mxu0 0.0
  %2357 = vmatpush.msra.mxu0 0.0
  %2358 = vmatpush.msra.mxu0 0.0
  %2359 = vmatpush.msra.mxu0 0.0
  %2360 = vmatpush.msra.mxu0 0.0
  %2361 = vmatpush.msra.mxu0 0.0
  %2362 = vmatpush.msra.mxu0 0.0
  %2363 = vmatpush.msra.mxu0 0.0
  %2364 = vmatpush.msra.mxu0 0.0
  %2365 = vmatpush.msra.mxu0 0.0
  %2366 = vmatpush.msra.mxu0 0.0
  %2367 = vmatpush.msra.mxu0 0.0
  %2368 = vmatpush.msra.mxu0 %v1892
  %2369 = vmatpush.msra.mxu0 %v1891
  %2370 = vmatpush.msra.mxu0 %v1890
  %2371 = vmatpush.msra.mxu0 %v1889
  %2372 = vmatmul.f32.gmra.mxu0 %v2354
  %v2373 = vpop.f32.mrf.mxu0
  %v2374 = vadd.f32 0.0, %v2373
  %2375 = vdwg.mxu0
  %v2376 = vadd.f32 %v2353, %v2374
  %v2377 = vxor.u32 %v2376, 2147483648
  %v2378 = vmul.f32 %v2377, 1.442695
  %v2379 = vpow.pop %v2378
  %v2380 = vadd.f32 %v2379, 1.0
  %v2381 = vrcp.pop %v2380
  %v2382 = vmul.f32 %v2380, %v2381
  %v2383 = vsub.f32 1.0, %v2382
  %v2384 = vmul.f32 %v2381, %v2383
  %v2385 = vadd.f32 %v2381, %v2384
  %vm2386 = vweird.f32 %v2380
  %vm2387 = vweird.f32 %v2381
  %vm2388 = vmor %vm2386, %vm2387
  %v2389 = vsel %vm2388, %v2381, %v2385
  %v2390 = vand.u32 2147483647, %v2380
  %vm2391 = vcmp.eq.f32.partialorder %v2390, 8.507059e+37
  %v2392 = vand.u32 %v2380, 2147483648
  %v2393 = vor.u32 1.1754944e-38, %v2392
  %v2394 = vsel %vm2391, %v2393, %v2389
  %v2395 = vmul.f32 1.0, %v2394
  %v2396 = vtanh.pop %v2376
  %v2397 = vmul.f32 %v2395, %v2341
  %2399 = vrot.lane.b32.xlu0 %v2396, 64
  %v2400 = vpop.permute.xlu0 %2399
  %v2402 = vmul.f32 %v2395, %v2400
  %2404 = vrot.lane.b32.xlu0 %v2402, 32
  %v2405 = vpop.permute.xlu0 %2404
  %v2407 = vadd.f32 %v2397, %v2405
  %v2408 = vtanh.pop %v2407
  %2410 = vrot.lane.b32.xlu0 %v2408, 64
  %v2411 = vpop.permute.xlu0 %2410
  %v2413 = vmul.f32 %v2395, %v2411
  %2415 = vrot.lane.b32.xlu0 %v2413, 32
  %v2416 = vpop.permute.xlu0 %2415
  %2418 = vst.msk [vmem:[#allocation4] sm:$0x3] %vm170, %v2416
  %v2419 = vld [vmem:[#allocation3] sm:$0xff]
  %v2420 = vld [vmem:[#allocation3 + $0x8] sm:$0xff]
  %v2421 = vld [vmem:[%s15] sm:$0xff]
  %v2422 = vld [vmem:[%s15 + $0x8] sm:$0xff]
  %v2423 = vld [vmem:[%s15 + $0x10] sm:$0xff]
  %v2424 = vld [vmem:[%s15 + $0x18] sm:$0xff]
  %v2425 = vld [vmem:[#allocation4] sm:$0xff]
  %v2426 = vld [vmem:[#allocation4 + $0x8] sm:$0xff]
  %v2427 = vld [vmem:[%s16] sm:$0xff]
  %v2428 = vld [vmem:[%s16 + $0x8] sm:$0xff]
  %v2429 = vld [vmem:[%s16 + $0x10] sm:$0xff]
  %v2430 = vld [vmem:[%s16 + $0x18] sm:$0xff]
  %v2432 = vsel %vm104, %v2425, 0
  %v2435 = vsel %vm104, %v2426, 0
  %2437 = vmatpush.msra.mxu0 0.0
  %2438 = vmatpush.msra.mxu0 0.0
  %2439 = vmatpush.msra.mxu0 0.0
  %2440 = vmatpush.msra.mxu0 0.0
  %2441 = vmatpush.msra.mxu0 0.0
  %2442 = vmatpush.msra.mxu0 0.0
  %2443 = vmatpush.msra.mxu0 0.0
  %2444 = vmatpush.msra.mxu0 0.0
  %2445 = vmatpush.msra.mxu0 0.0
  %2446 = vmatpush.msra.mxu0 0.0
  %2447 = vmatpush.msra.mxu0 0.0
  %2448 = vmatpush.msra.mxu0 0.0
  %2449 = vmatpush.msra.mxu0 %v2430
  %2450 = vmatpush.msra.mxu0 %v2429
  %2451 = vmatpush.msra.mxu0 %v2428
  %2452 = vmatpush.msra.mxu0 %v2427
  %2453 = vmatmul.f32.gmra.mxu0 %v2432
  %v2454 = vpop.f32.mrf.mxu0
  %v2455 = vadd.f32 0.0, %v2454
  %2456 = vmatmul.f32.gmra.mxu0 %v2435
  %v2457 = vpop.f32.mrf.mxu0
  %v2458 = vadd.f32 0.0, %v2457
  %2459 = vdwg.mxu0
  %v2461 = vsel %vm104, %v2419, 0
  %v2464 = vsel %vm104, %v2420, 0
  %2466 = vmatpush.msra.mxu0 0.0
  %2467 = vmatpush.msra.mxu0 0.0
  %2468 = vmatpush.msra.mxu0 0.0
  %2469 = vmatpush.msra.mxu0 0.0
  %2470 = vmatpush.msra.mxu0 0.0
  %2471 = vmatpush.msra.mxu0 0.0
  %2472 = vmatpush.msra.mxu0 0.0
  %2473 = vmatpush.msra.mxu0 0.0
  %2474 = vmatpush.msra.mxu0 0.0
  %2475 = vmatpush.msra.mxu0 0.0
  %2476 = vmatpush.msra.mxu0 0.0
  %2477 = vmatpush.msra.mxu0 0.0
  %2478 = vmatpush.msra.mxu0 %v2424
  %2479 = vmatpush.msra.mxu0 %v2423
  %2480 = vmatpush.msra.mxu0 %v2422
  %2481 = vmatpush.msra.mxu0 %v2421
  %2482 = vmatmul.f32.gmra.mxu0 %v2461
  %v2483 = vpop.f32.mrf.mxu0
  %v2484 = vadd.f32 %v2455, %v2483
  %2485 = vmatmul.f32.gmra.mxu0 %v2464
  %v2486 = vpop.f32.mrf.mxu0
  %v2487 = vadd.f32 %v2458, %v2486
  %2488 = vdwg.mxu0
  %v2489 = vld [vmem:[%s17] sm:$0x1]
  %v2491 = vperm.slane %v2489, 0
  %v2493 = vadd.f32 %v2484, %v2491
  %v2494 = vadd.f32 %v2487, %v2491
  %vm2495 = vcmask 64512
  %2496 = vst.msk [vmem:[%s18] sm:$0xff] %vm2495, %v2493
  %2497 = vst.msk [vmem:[%s18 + $0x8] sm:$0xff] %vm2495, %v2494
  // Predicated region
  $region74: #{lstm_net_forward.1} parent=0 // pred_check
    _
  $region75: #{lstm_net_forward.1} parent=0 // pred_check_branch
    %2499 = sbr.rel (0) target = $region77
  $region76: #{lstm_net_forward.1} parent=0 // pred_region
    _
  $region77: #{lstm_net_forward.1} parent=0 // pred_fallthru
    _
  // Predicated region
  $region78: #{lstm_net_forward.1} parent=0 // pred_check
    _
  $region79: #{lstm_net_forward.1} parent=0 // pred_check_branch
    %2501 = sbr.rel (0) target = $region81
  $region80: #{lstm_net_forward.1} parent=0 // pred_region
    _
  $region81: #{lstm_net_forward.1} parent=0 // pred_fallthru
    _

</llo_original>
